<compile_context>
chip_gen: v7x
topology: tpu7x:2x2x1
jax: 0.10.0
libtpu: 0.0.40
codegen_flags: <defaults>
</compile_context>

<pallas_src>
import functools

import jax
import jax.numpy as jnp
from jax.experimental import pallas as pl
from jax.experimental.pallas import tpu as pltpu


def _pick_tile(dim, preferred):
    """Largest of (preferred, full dim) that evenly divides dim."""
    preferred = min(preferred, dim)
    return preferred if dim % preferred == 0 else dim


# ----------------------------------------------------------------------------
# Kernel 1: fused Linear (no bias) + BatchNorm1d (per-view batch stats)
#           [+ affine] [+ ReLU]
#   x: (M, K) bf16 with M = n_views * B (views concatenated along rows)
#   w: (K, N) bf16
#   Single-shot path (K small): grid = (N//tn,), one MXU dot + BN finalize.
#   Tiled path (K large):      grid = (N//tn, K//tk), f32 accumulator + finalize.
# ----------------------------------------------------------------------------
def _bn_finalize(y, o_ref, g_ref, b_ref, *, use_relu, eps, n_views, rows_per_view):
    # Per-view BN over static row halves (centered two-pass variance).
    for v in range(n_views):
        lo, hi = v * rows_per_view, (v + 1) * rows_per_view
        yv = y[lo:hi, :]
        mu = jnp.mean(yv, axis=0, keepdims=True)
        d = yv - mu
        var = jnp.mean(d * d, axis=0, keepdims=True)
        z = d * jax.lax.rsqrt(var + eps)
        if g_ref is not None:
            z = z * g_ref[...] + b_ref[...]
        if use_relu:
            z = jnp.maximum(z, 0.0)
        o_ref[lo:hi, :] = z.astype(o_ref.dtype)


def _linear_bn_single_kernel(*refs, use_affine, use_relu, eps, n_views, rows_per_view):
    if use_affine:
        x_ref, w_ref, g_ref, b_ref, o_ref = refs
    else:
        x_ref, w_ref, o_ref = refs
        g_ref = b_ref = None
    # bf16 x bf16 -> f32 on the MXU; K collapsed (no accumulator, no pl.when).
    y = jnp.dot(x_ref[...], w_ref[...], preferred_element_type=jnp.float32)
    _bn_finalize(y, o_ref, g_ref, b_ref, use_relu=use_relu, eps=eps,
                 n_views=n_views, rows_per_view=rows_per_view)


def _linear_bn_tiled_kernel(*refs, use_affine, use_relu, eps, n_views, rows_per_view):
    if use_affine:
        x_ref, w_ref, g_ref, b_ref, o_ref, acc_ref = refs
    else:
        x_ref, w_ref, o_ref, acc_ref = refs
        g_ref = b_ref = None
    k = pl.program_id(1)

    @pl.when(k == 0)
    def _():
        acc_ref[...] = jnp.zeros_like(acc_ref)

    acc_ref[...] += jnp.dot(x_ref[...], w_ref[...], preferred_element_type=jnp.float32)

    @pl.when(k == pl.num_programs(1) - 1)
    def _():
        _bn_finalize(acc_ref[...], o_ref, g_ref, b_ref, use_relu=use_relu, eps=eps,
                     n_views=n_views, rows_per_view=rows_per_view)


def fused_linear_bn(x, w, gamma=None, beta=None, *, use_relu, n_views, eps=1e-5,
                    out_dtype=jnp.bfloat16, tn=256,
                    vmem_budget=40 * 1024 * 1024):
    M, K = x.shape
    N = w.shape[1]
    assert M % n_views == 0
    rows_per_view = M // n_views
    assert rows_per_view % 8 == 0, "per-view rows must be sublane (8) aligned"
    tn = _pick_tile(N, tn)
    use_affine = gamma is not None
    out_bytes = jnp.dtype(out_dtype).itemsize

    def est(tk, tiled):
        e = (M * tk * 2) * 2          # x bf16, double buffered
        e += (tk * tn * 2) * 2        # w bf16, double buffered
        e += (M * tn * out_bytes) * 2  # out, double buffered
        if tiled:
            e += M * tn * 4           # f32 accumulator scratch
        if use_affine:
            e += 2 * (tn * 4) * 2
        return e

    single = (K <= 2048) and est(K, False) <= vmem_budget
    if single:
        tk = K
    else:
        tk = None
        for cand in (2048, 1024, 512, 256, 128):
            if K % cand == 0 and est(cand, True) <= vmem_budget:
                tk = cand
                break
        if tk is None:
            tk = _pick_tile(K, 128)

    # Keep the limit <= 48 MiB so the same setting stays safe on v7x (64 MiB VMEM).
    vmem_limit = int(min(48 * 1024 * 1024,
                         max(32 * 1024 * 1024, est(tk, not single) + 4 * 1024 * 1024)))

    if single:
        in_specs = [pl.BlockSpec((M, K), lambda j: (0, 0)),
                    pl.BlockSpec((K, tn), lambda j: (0, j))]
        args = [x, w]
        if use_affine:
            in_specs += [pl.BlockSpec((1, tn), lambda j: (0, j)),
                         pl.BlockSpec((1, tn), lambda j: (0, j))]
            args += [gamma, beta]
        kernel = functools.partial(_linear_bn_single_kernel, use_affine=use_affine,
                                   use_relu=use_relu, eps=eps, n_views=n_views,
                                   rows_per_view=rows_per_view)
        return pl.pallas_call(
            kernel,
            out_shape=jax.ShapeDtypeStruct((M, N), out_dtype),
            grid=(N // tn,),
            in_specs=in_specs,
            out_specs=pl.BlockSpec((M, tn), lambda j: (0, j)),
            compiler_params=pltpu.CompilerParams(
                dimension_semantics=("parallel",),
                vmem_limit_bytes=vmem_limit),
        )(*args)

    # K-tiled accumulator path (large K): reduction axis last, 'arbitrary'.
    in_specs = [pl.BlockSpec((M, tk), lambda j, k: (0, k)),
                pl.BlockSpec((tk, tn), lambda j, k: (k, j))]
    args = [x, w]
    if use_affine:
        in_specs += [pl.BlockSpec((1, tn), lambda j, k: (0, j)),
                     pl.BlockSpec((1, tn), lambda j, k: (0, j))]
        args += [gamma, beta]
    kernel = functools.partial(_linear_bn_tiled_kernel, use_affine=use_affine,
                               use_relu=use_relu, eps=eps, n_views=n_views,
                               rows_per_view=rows_per_view)
    return pl.pallas_call(
        kernel,
        out_shape=jax.ShapeDtypeStruct((M, N), out_dtype),
        grid=(N // tn, K // tk),
        in_specs=in_specs,
        out_specs=pl.BlockSpec((M, tn), lambda j, k: (0, j)),
        scratch_shapes=[pltpu.VMEM((M, tn), jnp.float32)],
        compiler_params=pltpu.CompilerParams(
            dimension_semantics=("parallel", "arbitrary"),
            vmem_limit_bytes=vmem_limit),
    )(*args)


# ----------------------------------------------------------------------------
# Kernel 2: fused contrastive loss for BOTH (q1,k2) and (q2,k1) pairs.
#   q, k : (P=2, B, C) bf16.  Per pair p: q[p] is paired with k[1-p] (index_map swap).
#   Normalize rows in f32, logits = (qn/T) @ kn^T (bf16 MXU, f32 acc),
#   labels = arange(N) (rank 0, world size 1), CE mean * 2T.
#   grid = (P, N//tq); per-pair partial losses accumulate in per-pair output blocks
#   so the p axis is 'parallel' (usable by both TensorCores on v7x).
# ----------------------------------------------------------------------------
def _moco_loss_kernel(q_ref, k_ref, o_ref, kn_sc, *, T, inv_n):
    i = pl.program_id(1)          # q row-tile index within the pair
    tq = q_ref.shape[0]
    n_rows = kn_sc.shape[0]

    @pl.when(i == 0)
    def _():
        o_ref[...] = jnp.zeros_like(o_ref)
        # Normalize k once per pair (F.normalize: x / max(||x||, 1e-12)); store bf16.
        kf = k_ref[...].astype(jnp.float32)
        kn = kf * jax.lax.rsqrt(
            jnp.maximum(jnp.sum(kf * kf, axis=1, keepdims=True), 1e-24))
        kn_sc[...] = kn.astype(jnp.bfloat16)

    qf = q_ref[...].astype(jnp.float32)
    qn = qf * jax.lax.rsqrt(
        jnp.maximum(jnp.sum(qf * qf, axis=1, keepdims=True), 1e-24))
    # Fold 1/T into q (tq x C elements) instead of scaling logits (tq x N).
    qs = (qn * (1.0 / T)).astype(jnp.bfloat16)

    # logits tile (tq, N) = qs @ kn^T: contract last dims (MXU-native transposed RHS).
    logits = jax.lax.dot_general(
        qs, kn_sc[...], (((1,), (1,)), ((), ())),
        preferred_element_type=jnp.float32)
    row_max = jnp.max(logits, axis=1, keepdims=True)
    lse = jnp.log(jnp.sum(jnp.exp(logits - row_max), axis=1, keepdims=True)) + row_max

    # labels = arange(N): positive column for global row i*tq + r is i*tq + r.
    # Extract the positive from the SAME logits tile (no second, higher-precision dot).
    start = i * tq
    rows = jax.lax.broadcasted_iota(jnp.int32, (tq, n_rows), 0) + start
    cols = jax.lax.broadcasted_iota(jnp.int32, (tq, n_rows), 1)
    pos = jnp.sum(jnp.where(rows == cols, logits, 0.0), axis=1, keepdims=True)

    # mean over rows * 2T, accumulated into this pair's output block.
    o_ref[...] += jnp.sum(lse - pos) * (2.0 * T * inv_n)


def fused_contrastive_loss(q, k, T, *, tq=256):
    """q, k: (P, N, C) bf16. Returns sum_p CE(q[p], k[1-p]) * 2T with labels=arange(N)."""
    P, N, C = q.shape
    tq = _pick_tile(N, tq)
    kernel = functools.partial(_moco_loss_kernel, T=float(T), inv_n=1.0 / N)
    out = pl.pallas_call(
        kernel,
        out_shape=jax.ShapeDtypeStruct((P, 1, 1), jnp.float32),
        grid=(P, N // tq),
        in_specs=[
            pl.BlockSpec((None, tq, C), lambda p, i: (p, i, 0)),
            # pair swap (q1<->k2, q2<->k1) done here — no k[::-1] HBM copy.
            pl.BlockSpec((None, N, C), lambda p, i: (1 - p, 0, 0)),
        ],
        out_specs=pl.BlockSpec((None, 1, 1), lambda p, i: (p, 0, 0)),
        scratch_shapes=[pltpu.VMEM((N, C), jnp.bfloat16)],
        compiler_params=pltpu.CompilerParams(
            dimension_semantics=("parallel", "arbitrary")),
    )(q, k)
    return jnp.sum(out)


# ----------------------------------------------------------------------------
# Kernel 3: momentum update  p_m <- m*p_m + (1-m)*p_b
#   One fused pallas_call over ALL parameters (in-place on the f32 momentum buffers
#   via input_output_aliases) that also emits bf16 shadows of the updated params.
# ----------------------------------------------------------------------------
def momentum_update(params_mom, params_base, m):
    m_arr = jnp.reshape(m, (1,)).astype(jnp.float32)
    leaves_m, treedef = jax.tree_util.tree_flatten(params_mom)
    leaves_b = jax.tree_util.tree_leaves(params_base)
    n = len(leaves_m)

    def kernel(m_ref, *refs):
        pb = refs[:n]
        pm = refs[n:2 * n]
        out_f32 = refs[2 * n:3 * n]
        out_bf16 = refs[3 * n:]
        mm = m_ref[0]
        for idx in range(n):
            new = mm * pm[idx][...] + (1.0 - mm) * pb[idx][...]
            out_f32[idx][...] = new
            out_bf16[idx][...] = new.astype(jnp.bfloat16)

    out_shape = (tuple(jax.ShapeDtypeStruct(x.shape, x.dtype) for x in leaves_m)
                 + tuple(jax.ShapeDtypeStruct(x.shape, jnp.bfloat16) for x in leaves_m))
    vmem = pl.BlockSpec(memory_space=pltpu.MemorySpace.VMEM)
    outs = pl.pallas_call(
        kernel,
        out_shape=out_shape,
        in_specs=[pl.BlockSpec(memory_space=pltpu.MemorySpace.SMEM)] + [vmem] * (2 * n),
        out_specs=(vmem,) * (2 * n),
        # reuse the momentum params' HBM buffers for the updated f32 params
        input_output_aliases={n + 1 + i: i for i in range(n)},
    )(m_arr, *leaves_b, *leaves_m)
    new_f32 = jax.tree_util.tree_unflatten(treedef, list(outs[:n]))
    new_bf16 = jax.tree_util.tree_unflatten(treedef, list(outs[n:]))
    return new_f32, new_bf16


# ----------------------------------------------------------------------------
# Model glue (parameter init, MLP composition, forward)
# ----------------------------------------------------------------------------
def init_mlp_params(key, d_in, d_hidden, d_out, scale=0.02):
    k1, k2 = jax.random.split(key)
    return {
        "w1": scale * jax.random.normal(k1, (d_in, d_hidden), jnp.float32),
        "g1": jnp.ones((1, d_hidden), jnp.float32),
        "b1": jnp.zeros((1, d_hidden), jnp.float32),
        "w2": scale * jax.random.normal(k2, (d_hidden, d_out), jnp.float32),
    }


def make_bf16_shadow(params):
    """Persistent bf16 copies of the MXU weight operands (no per-forward cast)."""
    return {k: params[k].astype(jnp.bfloat16) for k in ("w1", "w2")}


def mlp_forward(x, p, p_bf16, *, n_views, out_dtype):
    # Linear -> BN(affine) -> ReLU -> Linear -> BN(affine=False)  (== _build_mlp(2, ...))
    h = fused_linear_bn(x, p_bf16["w1"], p["g1"], p["b1"], use_relu=True,
                        n_views=n_views, out_dtype=jnp.bfloat16)
    z = fused_linear_bn(h, p_bf16["w2"], None, None, use_relu=False,
                        n_views=n_views, out_dtype=out_dtype)
    return z


def moco_moe_forward(x1, x2, m, params_base, base_bf16, params_mom,
                     params_pred, pred_bf16, T):
    B = x1.shape[0]
    # Two views concatenated along the batch axis (M = 2B): each weight tile is fetched
    # once for both views and the MXU sees 2B rows. BN stats stay per-view because the
    # kernel finalize normalizes the two static row halves independently.
    x = jnp.concatenate([x1.reshape(B, -1), x2.reshape(B, -1)],
                        axis=0).astype(jnp.bfloat16)

    # Queries: base encoder + predictor.
    feats = mlp_forward(x, params_base, base_bf16, n_views=2, out_dtype=jnp.bfloat16)
    q = mlp_forward(feats, params_pred, pred_bf16, n_views=2, out_dtype=jnp.bfloat16)

    # Momentum encoder update (fused, aliased in-place, emits bf16 shadows) + keys.
    params_mom_new, mom_bf16 = momentum_update(params_mom, params_base, m)
    k = jax.lax.stop_gradient(
        mlp_forward(x, params_mom_new, mom_bf16, n_views=2, out_dtype=jnp.bfloat16))

    dim = q.shape[-1]
    q3 = q.reshape(2, B, dim)   # free view: rows [0:B]=view1, [B:2B]=view2
    k3 = k.reshape(2, B, dim)
    # loss = CL(q1, k2) + CL(q2, k1); pair swap happens via the k index_map.
    loss_cl = fused_contrastive_loss(q3, k3, T)
    loss_gate = 0.0  # contrastive_gate_w < 0
    return loss_cl + loss_gate, params_mom_new


# ----------------------------------------------------------------------------
# Pure-JAX reference (f32) for a loose correctness check of the bf16 kernels.
# ----------------------------------------------------------------------------
def _reference_forward(x1, x2, m, pb, pm, pp, T):
    def mlp(x, p):
        y = x @ p["w1"]
        mu = y.mean(0, keepdims=True)
        var = ((y - mu) ** 2).mean(0, keepdims=True)
        y = (y - mu) / jnp.sqrt(var + 1e-5) * p["g1"] + p["b1"]
        y = jnp.maximum(y, 0.0)
        z = y @ p["w2"]
        mu = z.mean(0, keepdims=True)
        var = ((z - mu) ** 2).mean(0, keepdims=True)
        return (z - mu) / jnp.sqrt(var + 1e-5)

    def cl(q, k):
        qn = q / jnp.maximum(jnp.linalg.norm(q, axis=1, keepdims=True), 1e-12)
        kn = k / jnp.maximum(jnp.linalg.norm(k, axis=1, keepdims=True), 1e-12)
        logits = qn @ kn.T / T
        n = logits.shape[0]
        mx = logits.max(axis=1, keepdims=True)
        lse = jnp.log(jnp.sum(jnp.exp(logits - mx), axis=1, keepdims=True)) + mx
        ce = jnp.mean(lse[:, 0] - logits[jnp.arange(n), jnp.arange(n)])
        return ce * 2.0 * T

    B = x1.shape[0]
    x1f, x2f = x1.reshape(B, -1), x2.reshape(B, -1)
    q1 = mlp(mlp(x1f, pb), pp)
    q2 = mlp(mlp(x2f, pb), pp)
    pm2 = jax.tree_util.tree_map(lambda a, b: m * a + (1.0 - m) * b, pm, pb)
    k1 = mlp(x1f, pm2)
    k2 = mlp(x2f, pm2)
    return cl(q1, k2) + cl(q2, k1)


if __name__ == "__main__":
    # Small shapes consistent with the module's forward (two NCHW image views),
    # chosen lane/sublane aligned: batch multiple of 8, feature dims multiples of 128.
    B, C, H, W = 8, 4, 16, 16
    D_IN = C * H * W          # 1024
    MLP_DIM = 256             # mlp_dim (hidden)
    DIM = 128                 # dim (output features)
    T = 1.0
    m = 0.99

    key = jax.random.PRNGKey(0)
    kx1, kx2, kb, kp = jax.random.split(key, 4)

    x1 = jax.random.normal(kx1, (B, C, H, W), jnp.float32)
    x2 = jax.random.normal(kx2, (B, C, H, W), jnp.float32)

    params_base = init_mlp_params(kb, D_IN, MLP_DIM, DIM)        # base encoder (+ projector)
    params_mom = jax.tree_util.tree_map(jnp.copy, params_base)   # momentum copy of base
    params_pred = init_mlp_params(kp, DIM, MLP_DIM, DIM)         # predictor

    # Persistent bf16 shadows of base/predictor weights (no per-forward cast).
    base_bf16 = make_bf16_shadow(params_base)
    pred_bf16 = make_bf16_shadow(params_pred)

    fwd = jax.jit(moco_moe_forward, static_argnames=("T",))
    loss, _ = fwd(x1, x2, jnp.float32(m), params_base, base_bf16,
                  params_mom, params_pred, pred_bf16, T=T)
    loss = jax.block_until_ready(loss)

    loss_ref = _reference_forward(x1, x2, m, params_base, params_mom, params_pred, T)
    assert jnp.isfinite(loss)
    # generous tolerance: kernels run the GEMMs in bf16 (f32 accumulate)
    assert abs(float(loss) - float(loss_ref)) < 0.1 + 0.05 * abs(float(loss_ref)), (loss, loss_ref)
    print("KERNEL_OK")
</pallas_src>

<mosaic_0001>
module attributes {stable_mosaic.version = 11 : i64} {
  func.func @kernel(%arg0: memref<1xf32, #tpu.memory_space<smem>>, %arg1: memref<1x256xf32, #tpu.memory_space<vmem>>, %arg2: memref<1x256xf32, #tpu.memory_space<vmem>>, %arg3: memref<1024x256xf32, #tpu.memory_space<vmem>>, %arg4: memref<256x128xf32, #tpu.memory_space<vmem>>, %arg5: memref<1x256xf32, #tpu.memory_space<vmem>>, %arg6: memref<1x256xf32, #tpu.memory_space<vmem>>, %arg7: memref<1024x256xf32, #tpu.memory_space<vmem>>, %arg8: memref<256x128xf32, #tpu.memory_space<vmem>>, %arg9: memref<1x256xf32, #tpu.memory_space<vmem>>, %arg10: memref<1x256xf32, #tpu.memory_space<vmem>>, %arg11: memref<1024x256xf32, #tpu.memory_space<vmem>>, %arg12: memref<256x128xf32, #tpu.memory_space<vmem>>, %arg13: memref<1x256xbf16, #tpu.memory_space<vmem>>, %arg14: memref<1x256xbf16, #tpu.memory_space<vmem>>, %arg15: memref<1024x256xbf16, #tpu.memory_space<vmem>>, %arg16: memref<256x128xbf16, #tpu.memory_space<vmem>>) attributes {dimension_semantics = [], scalar_prefetch = 0 : i64, scratch_operands = 0 : i64, tpu.core_type = #tpu.core_type<tc>} {
    %c0 = arith.constant 0 : index
    %0 = memref.load %arg0[%c0] : memref<1xf32, #tpu.memory_space<smem>>
    %c0_0 = arith.constant 0 : index
    %c0_1 = arith.constant 0 : index
    %1 = vector.load %arg5[%c0_0, %c0_1] : memref<1x256xf32, #tpu.memory_space<vmem>>, vector<1x256xf32>
    %2 = vector.broadcast %0 : f32 to vector<1x256xf32>
    %3 = arith.mulf %2, %1 : vector<1x256xf32>
    %cst = arith.constant 1.000000e+00 : f32
    %4 = arith.subf %cst, %0 : f32
    %c0_2 = arith.constant 0 : index
    %c0_3 = arith.constant 0 : index
    %5 = vector.load %arg1[%c0_2, %c0_3] : memref<1x256xf32, #tpu.memory_space<vmem>>, vector<1x256xf32>
    %6 = vector.broadcast %4 : f32 to vector<1x256xf32>
    %7 = arith.mulf %6, %5 : vector<1x256xf32>
    %8 = arith.addf %3, %7 : vector<1x256xf32>
    %c0_4 = arith.constant 0 : index
    %c0_5 = arith.constant 0 : index
    %9 = vector.load %arg9[%c0_4, %c0_5] : memref<1x256xf32, #tpu.memory_space<vmem>>, vector<1x256xf32>
    tpu.vector_store %arg9[%c0_4, %c0_5], %8 {strides = array<i32>} : memref<1x256xf32, #tpu.memory_space<vmem>>, vector<1x256xf32>,
    %10 = arith.truncf %8 : vector<1x256xf32> to vector<1x256xbf16>
    %c0_6 = arith.constant 0 : index
    %c0_7 = arith.constant 0 : index
    %11 = vector.load %arg13[%c0_6, %c0_7] : memref<1x256xbf16, #tpu.memory_space<vmem>>, vector<1x256xbf16>
    tpu.vector_store %arg13[%c0_6, %c0_7], %10 {strides = array<i32>} : memref<1x256xbf16, #tpu.memory_space<vmem>>, vector<1x256xbf16>,
    %c0_8 = arith.constant 0 : index
    %c0_9 = arith.constant 0 : index
    %12 = vector.load %arg6[%c0_8, %c0_9] : memref<1x256xf32, #tpu.memory_space<vmem>>, vector<1x256xf32>
    %13 = vector.broadcast %0 : f32 to vector<1x256xf32>
    %14 = arith.mulf %13, %12 : vector<1x256xf32>
    %cst_10 = arith.constant 1.000000e+00 : f32
    %15 = arith.subf %cst_10, %0 : f32
    %c0_11 = arith.constant 0 : index
    %c0_12 = arith.constant 0 : index
    %16 = vector.load %arg2[%c0_11, %c0_12] : memref<1x256xf32, #tpu.memory_space<vmem>>, vector<1x256xf32>
    %17 = vector.broadcast %15 : f32 to vector<1x256xf32>
    %18 = arith.mulf %17, %16 : vector<1x256xf32>
    %19 = arith.addf %14, %18 : vector<1x256xf32>
    %c0_13 = arith.constant 0 : index
    %c0_14 = arith.constant 0 : index
    %20 = vector.load %arg10[%c0_13, %c0_14] : memref<1x256xf32, #tpu.memory_space<vmem>>, vector<1x256xf32>
    tpu.vector_store %arg10[%c0_13, %c0_14], %19 {strides = array<i32>} : memref<1x256xf32, #tpu.memory_space<vmem>>, vector<1x256xf32>,
    %21 = arith.truncf %19 : vector<1x256xf32> to vector<1x256xbf16>
    %c0_15 = arith.constant 0 : index
    %c0_16 = arith.constant 0 : index
    %22 = vector.load %arg14[%c0_15, %c0_16] : memref<1x256xbf16, #tpu.memory_space<vmem>>, vector<1x256xbf16>
    tpu.vector_store %arg14[%c0_15, %c0_16], %21 {strides = array<i32>} : memref<1x256xbf16, #tpu.memory_space<vmem>>, vector<1x256xbf16>,
    %c0_17 = arith.constant 0 : index
    %c0_18 = arith.constant 0 : index
    %23 = vector.load %arg7[%c0_17, %c0_18] : memref<1024x256xf32, #tpu.memory_space<vmem>>, vector<1024x256xf32>
    %24 = vector.broadcast %0 : f32 to vector<1024x256xf32>
    %25 = arith.mulf %24, %23 : vector<1024x256xf32>
    %cst_19 = arith.constant 1.000000e+00 : f32
    %26 = arith.subf %cst_19, %0 : f32
    %c0_20 = arith.constant 0 : index
    %c0_21 = arith.constant 0 : index
    %27 = vector.load %arg3[%c0_20, %c0_21] : memref<1024x256xf32, #tpu.memory_space<vmem>>, vector<1024x256xf32>
    %28 = vector.broadcast %26 : f32 to vector<1024x256xf32>
    %29 = arith.mulf %28, %27 : vector<1024x256xf32>
    %30 = arith.addf %25, %29 : vector<1024x256xf32>
    %c0_22 = arith.constant 0 : index
    %c0_23 = arith.constant 0 : index
    %31 = vector.load %arg11[%c0_22, %c0_23] : memref<1024x256xf32, #tpu.memory_space<vmem>>, vector<1024x256xf32>
    tpu.vector_store %arg11[%c0_22, %c0_23], %30 {strides = array<i32>} : memref<1024x256xf32, #tpu.memory_space<vmem>>, vector<1024x256xf32>,
    %32 = arith.truncf %30 : vector<1024x256xf32> to vector<1024x256xbf16>
    %c0_24 = arith.constant 0 : index
    %c0_25 = arith.constant 0 : index
    %33 = vector.load %arg15[%c0_24, %c0_25] : memref<1024x256xbf16, #tpu.memory_space<vmem>>, vector<1024x256xbf16>
    tpu.vector_store %arg15[%c0_24, %c0_25], %32 {strides = array<i32>} : memref<1024x256xbf16, #tpu.memory_space<vmem>>, vector<1024x256xbf16>,
    %c0_26 = arith.constant 0 : index
    %c0_27 = arith.constant 0 : index
    %34 = vector.load %arg8[%c0_26, %c0_27] : memref<256x128xf32, #tpu.memory_space<vmem>>, vector<256x128xf32>
    %35 = vector.broadcast %0 : f32 to vector<256x128xf32>
    %36 = arith.mulf %35, %34 : vector<256x128xf32>
    %cst_28 = arith.constant 1.000000e+00 : f32
    %37 = arith.subf %cst_28, %0 : f32
    %c0_29 = arith.constant 0 : index
    %c0_30 = arith.constant 0 : index
    %38 = vector.load %arg4[%c0_29, %c0_30] : memref<256x128xf32, #tpu.memory_space<vmem>>, vector<256x128xf32>
    %39 = vector.broadcast %37 : f32 to vector<256x128xf32>
    %40 = arith.mulf %39, %38 : vector<256x128xf32>
    %41 = arith.addf %36, %40 : vector<256x128xf32>
    %c0_31 = arith.constant 0 : index
    %c0_32 = arith.constant 0 : index
    %42 = vector.load %arg12[%c0_31, %c0_32] : memref<256x128xf32, #tpu.memory_space<vmem>>, vector<256x128xf32>
    tpu.vector_store %arg12[%c0_31, %c0_32], %41 {strides = array<i32>} : memref<256x128xf32, #tpu.memory_space<vmem>>, vector<256x128xf32>,
    %43 = arith.truncf %41 : vector<256x128xf32> to vector<256x128xbf16>
    %c0_33 = arith.constant 0 : index
    %c0_34 = arith.constant 0 : index
    %44 = vector.load %arg16[%c0_33, %c0_34] : memref<256x128xbf16, #tpu.memory_space<vmem>>, vector<256x128xbf16>
    tpu.vector_store %arg16[%c0_33, %c0_34], %43 {strides = array<i32>} : memref<256x128xbf16, #tpu.memory_space<vmem>>, vector<256x128xbf16>,
    return
  }
}

module attributes {stable_mosaic.version = 11 : i64} {
  func.func @_linear_bn_single_kernel(%arg0: i32, %arg1: memref<16x256xbf16, #tpu.memory_space<vmem>>, %arg2: memref<256x128xbf16, #tpu.memory_space<vmem>>, %arg3: memref<16x128xbf16, #tpu.memory_space<vmem>>) attributes {dimension_semantics = [#tpu.dimension_semantics<parallel>], iteration_bounds = array<i64: 1>, scalar_prefetch = 0 : i64, scratch_operands = 0 : i64, tpu.core_type = #tpu.core_type<tc>, window_params = [{pipeline_mode = #tpu.pipeline_mode<synchronous>, transform_indices = @transform_0, window_bounds = array<i64: 16, 256>}, {transform_indices = @transform_1, window_bounds = array<i64: 256, 128>}, {transform_indices = @transform_2, window_bounds = array<i64: 16, 128>}]} {
    %c0 = arith.constant 0 : index
    %c0_0 = arith.constant 0 : index
    %0 = vector.load %arg1[%c0, %c0_0] : memref<16x256xbf16, #tpu.memory_space<vmem>>, vector<16x256xbf16>
    %c0_1 = arith.constant 0 : index
    %c0_2 = arith.constant 0 : index
    %1 = vector.load %arg2[%c0_1, %c0_2] : memref<256x128xbf16, #tpu.memory_space<vmem>>, vector<256x128xbf16>
    %cst = arith.constant dense<0.000000e+00> : vector<16x128xf32>
    %2 = tpu.matmul %0, %1, %cst {dimension_numbers = #tpu.dot_dimension_numbers<[1], [0], [0], [1], [0, 0, 1, 1], [], []>} : vector<16x256xbf16>, vector<256x128xbf16>, vector<16x128xf32> -> vector<16x128xf32>
    %3 = vector.extract_strided_slice %2 {offsets = [0, 0], sizes = [8, 128], strides = [1, 1]} : vector<16x128xf32> to vector<8x128xf32>
    %cst_3 = arith.constant dense<0.000000e+00> : vector<128xf32>
    %4 = vector.multi_reduction <add>, %3, %cst_3 [0] : vector<8x128xf32> to vector<128xf32>
    %5 = vector.shape_cast %4 : vector<128xf32> to vector<1x128xf32>
    %cst_4 = arith.constant 8.000000e+00 : f32
    %6 = vector.broadcast %cst_4 : f32 to vector<1x128xf32>
    %7 = arith.divf %5, %6 : vector<1x128xf32>
    %8 = vector.broadcast %7 : vector<1x128xf32> to vector<8x128xf32>
    %9 = arith.subf %3, %8 : vector<8x128xf32>
    %10 = arith.mulf %9, %9 : vector<8x128xf32>
    %cst_5 = arith.constant dense<0.000000e+00> : vector<128xf32>
    %11 = vector.multi_reduction <add>, %10, %cst_5 [0] : vector<8x128xf32> to vector<128xf32>
    %12 = vector.shape_cast %11 : vector<128xf32> to vector<1x128xf32>
    %cst_6 = arith.constant 8.000000e+00 : f32
    %13 = vector.broadcast %cst_6 : f32 to vector<1x128xf32>
    %14 = arith.divf %12, %13 : vector<1x128xf32>
    %cst_7 = arith.constant 9.99999974E-6 : f32
    %15 = vector.broadcast %cst_7 : f32 to vector<1x128xf32>
    %16 = arith.addf %14, %15 : vector<1x128xf32>
    %17 = math.rsqrt %16 : vector<1x128xf32>
    %18 = vector.broadcast %17 : vector<1x128xf32> to vector<8x128xf32>
    %19 = arith.mulf %9, %18 : vector<8x128xf32>
    %20 = arith.truncf %19 : vector<8x128xf32> to vector<8x128xbf16>
    %c0_8 = arith.constant 0 : index
    %c0_9 = arith.constant 0 : index
    %21 = vector.load %arg3[%c0_8, %c0_9] : memref<16x128xbf16, #tpu.memory_space<vmem>>, vector<8x128xbf16>
    tpu.vector_store %arg3[%c0_8, %c0_9], %20 {strides = array<i32>} : memref<16x128xbf16, #tpu.memory_space<vmem>>, vector<8x128xbf16>,
    %22 = vector.extract_strided_slice %2 {offsets = [8, 0], sizes = [8, 128], strides = [1, 1]} : vector<16x128xf32> to vector<8x128xf32>
    %cst_10 = arith.constant dense<0.000000e+00> : vector<128xf32>
    %23 = vector.multi_reduction <add>, %22, %cst_10 [0] : vector<8x128xf32> to vector<128xf32>
    %24 = vector.shape_cast %23 : vector<128xf32> to vector<1x128xf32>
    %cst_11 = arith.constant 8.000000e+00 : f32
    %25 = vector.broadcast %cst_11 : f32 to vector<1x128xf32>
    %26 = arith.divf %24, %25 : vector<1x128xf32>
    %27 = vector.broadcast %26 : vector<1x128xf32> to vector<8x128xf32>
    %28 = arith.subf %22, %27 : vector<8x128xf32>
    %29 = arith.mulf %28, %28 : vector<8x128xf32>
    %cst_12 = arith.constant dense<0.000000e+00> : vector<128xf32>
    %30 = vector.multi_reduction <add>, %29, %cst_12 [0] : vector<8x128xf32> to vector<128xf32>
    %31 = vector.shape_cast %30 : vector<128xf32> to vector<1x128xf32>
    %cst_13 = arith.constant 8.000000e+00 : f32
    %32 = vector.broadcast %cst_13 : f32 to vector<1x128xf32>
    %33 = arith.divf %31, %32 : vector<1x128xf32>
    %cst_14 = arith.constant 9.99999974E-6 : f32
    %34 = vector.broadcast %cst_14 : f32 to vector<1x128xf32>
    %35 = arith.addf %33, %34 : vector<1x128xf32>
    %36 = math.rsqrt %35 : vector<1x128xf32>
    %37 = vector.broadcast %36 : vector<1x128xf32> to vector<8x128xf32>
    %38 = arith.mulf %28, %37 : vector<8x128xf32>
    %39 = arith.truncf %38 : vector<8x128xf32> to vector<8x128xbf16>
    %c8 = arith.constant 8 : index
    %c0_15 = arith.constant 0 : index
    %40 = vector.load %arg3[%c8, %c0_15] : memref<16x128xbf16, #tpu.memory_space<vmem>>, vector<8x128xbf16>
    tpu.vector_store %arg3[%c8, %c0_15], %39 {strides = array<i32>} : memref<16x128xbf16, #tpu.memory_space<vmem>>, vector<8x128xbf16>,
    return
  }
  func.func @transform_0(%arg0: i32) -> (i32, i32) {
    %c0_i32 = arith.constant 0 : i32
    %c0_i32_0 = arith.constant 0 : i32
    %c0_i32_1 = arith.constant 0 : i32
    return %c0_i32, %c0_i32_0 : i32, i32
  }
  func.func @transform_1(%arg0: i32) -> (i32, i32) {
    %c0_i32 = arith.constant 0 : i32
    %c0_i32_0 = arith.constant 0 : i32
    return %c0_i32, %arg0 : i32, i32
  }
  func.func @transform_2(%arg0: i32) -> (i32, i32) {
    %c0_i32 = arith.constant 0 : i32
    %c0_i32_0 = arith.constant 0 : i32
    return %c0_i32, %arg0 : i32, i32
  }
}

module attributes {stable_mosaic.version = 11 : i64} {
  func.func @_linear_bn_single_kernel(%arg0: i32, %arg1: memref<16x1024xbf16, #tpu.memory_space<vmem>>, %arg2: memref<1024x256xbf16, #tpu.memory_space<vmem>>, %arg3: memref<1x256xf32, #tpu.memory_space<vmem>>, %arg4: memref<1x256xf32, #tpu.memory_space<vmem>>, %arg5: memref<16x256xbf16, #tpu.memory_space<vmem>>) attributes {dimension_semantics = [#tpu.dimension_semantics<parallel>], iteration_bounds = array<i64: 1>, scalar_prefetch = 0 : i64, scratch_operands = 0 : i64, tpu.core_type = #tpu.core_type<tc>, window_params = [{pipeline_mode = #tpu.pipeline_mode<synchronous>, transform_indices = @transform_0, window_bounds = array<i64: 16, 1024>}, {transform_indices = @transform_1, window_bounds = array<i64: 1024, 256>}, {transform_indices = @transform_2, window_bounds = array<i64: 1, 256>}, {transform_indices = @transform_3, window_bounds = array<i64: 1, 256>}, {transform_indices = @transform_4, window_bounds = array<i64: 16, 256>}]} {
    %c0 = arith.constant 0 : index
    %c0_0 = arith.constant 0 : index
    %0 = vector.load %arg1[%c0, %c0_0] : memref<16x1024xbf16, #tpu.memory_space<vmem>>, vector<16x1024xbf16>
    %c0_1 = arith.constant 0 : index
    %c0_2 = arith.constant 0 : index
    %1 = vector.load %arg2[%c0_1, %c0_2] : memref<1024x256xbf16, #tpu.memory_space<vmem>>, vector<1024x256xbf16>
    %cst = arith.constant dense<0.000000e+00> : vector<16x256xf32>
    %2 = tpu.matmul %0, %1, %cst {dimension_numbers = #tpu.dot_dimension_numbers<[1], [0], [0], [1], [0, 0, 1, 1], [], []>} : vector<16x1024xbf16>, vector<1024x256xbf16>, vector<16x256xf32> -> vector<16x256xf32>
    %3 = vector.extract_strided_slice %2 {offsets = [0, 0], sizes = [8, 256], strides = [1, 1]} : vector<16x256xf32> to vector<8x256xf32>
    %cst_3 = arith.constant dense<0.000000e+00> : vector<256xf32>
    %4 = vector.multi_reduction <add>, %3, %cst_3 [0] : vector<8x256xf32> to vector<256xf32>
    %5 = vector.shape_cast %4 : vector<256xf32> to vector<1x256xf32>
    %cst_4 = arith.constant 8.000000e+00 : f32
    %6 = vector.broadcast %cst_4 : f32 to vector<1x256xf32>
    %7 = arith.divf %5, %6 : vector<1x256xf32>
    %8 = vector.broadcast %7 : vector<1x256xf32> to vector<8x256xf32>
    %9 = arith.subf %3, %8 : vector<8x256xf32>
    %10 = arith.mulf %9, %9 : vector<8x256xf32>
    %cst_5 = arith.constant dense<0.000000e+00> : vector<256xf32>
    %11 = vector.multi_reduction <add>, %10, %cst_5 [0] : vector<8x256xf32> to vector<256xf32>
    %12 = vector.shape_cast %11 : vector<256xf32> to vector<1x256xf32>
    %cst_6 = arith.constant 8.000000e+00 : f32
    %13 = vector.broadcast %cst_6 : f32 to vector<1x256xf32>
    %14 = arith.divf %12, %13 : vector<1x256xf32>
    %cst_7 = arith.constant 9.99999974E-6 : f32
    %15 = vector.broadcast %cst_7 : f32 to vector<1x256xf32>
    %16 = arith.addf %14, %15 : vector<1x256xf32>
    %17 = math.rsqrt %16 : vector<1x256xf32>
    %18 = vector.broadcast %17 : vector<1x256xf32> to vector<8x256xf32>
    %19 = arith.mulf %9, %18 : vector<8x256xf32>
    %c0_8 = arith.constant 0 : index
    %c0_9 = arith.constant 0 : index
    %20 = vector.load %arg3[%c0_8, %c0_9] : memref<1x256xf32, #tpu.memory_space<vmem>>, vector<1x256xf32>
    %21 = vector.broadcast %20 : vector<1x256xf32> to vector<8x256xf32>
    %22 = arith.mulf %19, %21 : vector<8x256xf32>
    %c0_10 = arith.constant 0 : index
    %c0_11 = arith.constant 0 : index
    %23 = vector.load %arg4[%c0_10, %c0_11] : memref<1x256xf32, #tpu.memory_space<vmem>>, vector<1x256xf32>
    %24 = vector.broadcast %23 : vector<1x256xf32> to vector<8x256xf32>
    %25 = arith.addf %22, %24 : vector<8x256xf32>
    %cst_12 = arith.constant 0.000000e+00 : f32
    %26 = vector.broadcast %cst_12 : f32 to vector<8x256xf32>
    %27 = arith.maximumf %25, %26 : vector<8x256xf32>
    %28 = arith.truncf %27 : vector<8x256xf32> to vector<8x256xbf16>
    %c0_13 = arith.constant 0 : index
    %c0_14 = arith.constant 0 : index
    %29 = vector.load %arg5[%c0_13, %c0_14] : memref<16x256xbf16, #tpu.memory_space<vmem>>, vector<8x256xbf16>
    tpu.vector_store %arg5[%c0_13, %c0_14], %28 {strides = array<i32>} : memref<16x256xbf16, #tpu.memory_space<vmem>>, vector<8x256xbf16>,
    %30 = vector.extract_strided_slice %2 {offsets = [8, 0], sizes = [8, 256], strides = [1, 1]} : vector<16x256xf32> to vector<8x256xf32>
    %cst_15 = arith.constant dense<0.000000e+00> : vector<256xf32>
    %31 = vector.multi_reduction <add>, %30, %cst_15 [0] : vector<8x256xf32> to vector<256xf32>
    %32 = vector.shape_cast %31 : vector<256xf32> to vector<1x256xf32>
    %cst_16 = arith.constant 8.000000e+00 : f32
    %33 = vector.broadcast %cst_16 : f32 to vector<1x256xf32>
    %34 = arith.divf %32, %33 : vector<1x256xf32>
    %35 = vector.broadcast %34 : vector<1x256xf32> to vector<8x256xf32>
    %36 = arith.subf %30, %35 : vector<8x256xf32>
    %37 = arith.mulf %36, %36 : vector<8x256xf32>
    %cst_17 = arith.constant dense<0.000000e+00> : vector<256xf32>
    %38 = vector.multi_reduction <add>, %37, %cst_17 [0] : vector<8x256xf32> to vector<256xf32>
    %39 = vector.shape_cast %38 : vector<256xf32> to vector<1x256xf32>
    %cst_18 = arith.constant 8.000000e+00 : f32
    %40 = vector.broadcast %cst_18 : f32 to vector<1x256xf32>
    %41 = arith.divf %39, %40 : vector<1x256xf32>
    %cst_19 = arith.constant 9.99999974E-6 : f32
    %42 = vector.broadcast %cst_19 : f32 to vector<1x256xf32>
    %43 = arith.addf %41, %42 : vector<1x256xf32>
    %44 = math.rsqrt %43 : vector<1x256xf32>
    %45 = vector.broadcast %44 : vector<1x256xf32> to vector<8x256xf32>
    %46 = arith.mulf %36, %45 : vector<8x256xf32>
    %c0_20 = arith.constant 0 : index
    %c0_21 = arith.constant 0 : index
    %47 = vector.load %arg3[%c0_20, %c0_21] : memref<1x256xf32, #tpu.memory_space<vmem>>, vector<1x256xf32>
    %48 = vector.broadcast %47 : vector<1x256xf32> to vector<8x256xf32>
    %49 = arith.mulf %46, %48 : vector<8x256xf32>
    %c0_22 = arith.constant 0 : index
    %c0_23 = arith.constant 0 : index
    %50 = vector.load %arg4[%c0_22, %c0_23] : memref<1x256xf32, #tpu.memory_space<vmem>>, vector<1x256xf32>
    %51 = vector.broadcast %50 : vector<1x256xf32> to vector<8x256xf32>
    %52 = arith.addf %49, %51 : vector<8x256xf32>
    %cst_24 = arith.constant 0.000000e+00 : f32
    %53 = vector.broadcast %cst_24 : f32 to vector<8x256xf32>
    %54 = arith.maximumf %52, %53 : vector<8x256xf32>
    %55 = arith.truncf %54 : vector<8x256xf32> to vector<8x256xbf16>
    %c8 = arith.constant 8 : index
    %c0_25 = arith.constant 0 : index
    %56 = vector.load %arg5[%c8, %c0_25] : memref<16x256xbf16, #tpu.memory_space<vmem>>, vector<8x256xbf16>
    tpu.vector_store %arg5[%c8, %c0_25], %55 {strides = array<i32>} : memref<16x256xbf16, #tpu.memory_space<vmem>>, vector<8x256xbf16>,
    return
  }
  func.func @transform_0(%arg0: i32) -> (i32, i32) {
    %c0_i32 = arith.constant 0 : i32
    %c0_i32_0 = arith.constant 0 : i32
    %c0_i32_1 = arith.constant 0 : i32
    return %c0_i32, %c0_i32_0 : i32, i32
  }
  func.func @transform_1(%arg0: i32) -> (i32, i32) {
    %c0_i32 = arith.constant 0 : i32
    %c0_i32_0 = arith.constant 0 : i32
    return %c0_i32, %arg0 : i32, i32
  }
  func.func @transform_2(%arg0: i32) -> (i32, i32) {
    %c0_i32 = arith.constant 0 : i32
    %c0_i32_0 = arith.constant 0 : i32
    return %c0_i32, %arg0 : i32, i32
  }
  func.func @transform_3(%arg0: i32) -> (i32, i32) {
    %c0_i32 = arith.constant 0 : i32
    %c0_i32_0 = arith.constant 0 : i32
    return %c0_i32, %arg0 : i32, i32
  }
  func.func @transform_4(%arg0: i32) -> (i32, i32) {
    %c0_i32 = arith.constant 0 : i32
    %c0_i32_0 = arith.constant 0 : i32
    return %c0_i32, %arg0 : i32, i32
  }
}

module attributes {stable_mosaic.version = 11 : i64} {
  func.func @_linear_bn_single_kernel(%arg0: i32, %arg1: memref<16x128xbf16, #tpu.memory_space<vmem>>, %arg2: memref<128x256xbf16, #tpu.memory_space<vmem>>, %arg3: memref<1x256xf32, #tpu.memory_space<vmem>>, %arg4: memref<1x256xf32, #tpu.memory_space<vmem>>, %arg5: memref<16x256xbf16, #tpu.memory_space<vmem>>) attributes {dimension_semantics = [#tpu.dimension_semantics<parallel>], iteration_bounds = array<i64: 1>, scalar_prefetch = 0 : i64, scratch_operands = 0 : i64, tpu.core_type = #tpu.core_type<tc>, window_params = [{pipeline_mode = #tpu.pipeline_mode<synchronous>, transform_indices = @transform_0, window_bounds = array<i64: 16, 128>}, {transform_indices = @transform_1, window_bounds = array<i64: 128, 256>}, {transform_indices = @transform_2, window_bounds = array<i64: 1, 256>}, {transform_indices = @transform_3, window_bounds = array<i64: 1, 256>}, {transform_indices = @transform_4, window_bounds = array<i64: 16, 256>}]} {
    %c0 = arith.constant 0 : index
    %c0_0 = arith.constant 0 : index
    %0 = vector.load %arg1[%c0, %c0_0] : memref<16x128xbf16, #tpu.memory_space<vmem>>, vector<16x128xbf16>
    %c0_1 = arith.constant 0 : index
    %c0_2 = arith.constant 0 : index
    %1 = vector.load %arg2[%c0_1, %c0_2] : memref<128x256xbf16, #tpu.memory_space<vmem>>, vector<128x256xbf16>
    %cst = arith.constant dense<0.000000e+00> : vector<16x256xf32>
    %2 = tpu.matmul %0, %1, %cst {dimension_numbers = #tpu.dot_dimension_numbers<[1], [0], [0], [1], [0, 0, 1, 1], [], []>} : vector<16x128xbf16>, vector<128x256xbf16>, vector<16x256xf32> -> vector<16x256xf32>
    %3 = vector.extract_strided_slice %2 {offsets = [0, 0], sizes = [8, 256], strides = [1, 1]} : vector<16x256xf32> to vector<8x256xf32>
    %cst_3 = arith.constant dense<0.000000e+00> : vector<256xf32>
    %4 = vector.multi_reduction <add>, %3, %cst_3 [0] : vector<8x256xf32> to vector<256xf32>
    %5 = vector.shape_cast %4 : vector<256xf32> to vector<1x256xf32>
    %cst_4 = arith.constant 8.000000e+00 : f32
    %6 = vector.broadcast %cst_4 : f32 to vector<1x256xf32>
    %7 = arith.divf %5, %6 : vector<1x256xf32>
    %8 = vector.broadcast %7 : vector<1x256xf32> to vector<8x256xf32>
    %9 = arith.subf %3, %8 : vector<8x256xf32>
    %10 = arith.mulf %9, %9 : vector<8x256xf32>
    %cst_5 = arith.constant dense<0.000000e+00> : vector<256xf32>
    %11 = vector.multi_reduction <add>, %10, %cst_5 [0] : vector<8x256xf32> to vector<256xf32>
    %12 = vector.shape_cast %11 : vector<256xf32> to vector<1x256xf32>
    %cst_6 = arith.constant 8.000000e+00 : f32
    %13 = vector.broadcast %cst_6 : f32 to vector<1x256xf32>
    %14 = arith.divf %12, %13 : vector<1x256xf32>
    %cst_7 = arith.constant 9.99999974E-6 : f32
    %15 = vector.broadcast %cst_7 : f32 to vector<1x256xf32>
    %16 = arith.addf %14, %15 : vector<1x256xf32>
    %17 = math.rsqrt %16 : vector<1x256xf32>
    %18 = vector.broadcast %17 : vector<1x256xf32> to vector<8x256xf32>
    %19 = arith.mulf %9, %18 : vector<8x256xf32>
    %c0_8 = arith.constant 0 : index
    %c0_9 = arith.constant 0 : index
    %20 = vector.load %arg3[%c0_8, %c0_9] : memref<1x256xf32, #tpu.memory_space<vmem>>, vector<1x256xf32>
    %21 = vector.broadcast %20 : vector<1x256xf32> to vector<8x256xf32>
    %22 = arith.mulf %19, %21 : vector<8x256xf32>
    %c0_10 = arith.constant 0 : index
    %c0_11 = arith.constant 0 : index
    %23 = vector.load %arg4[%c0_10, %c0_11] : memref<1x256xf32, #tpu.memory_space<vmem>>, vector<1x256xf32>
    %24 = vector.broadcast %23 : vector<1x256xf32> to vector<8x256xf32>
    %25 = arith.addf %22, %24 : vector<8x256xf32>
    %cst_12 = arith.constant 0.000000e+00 : f32
    %26 = vector.broadcast %cst_12 : f32 to vector<8x256xf32>
    %27 = arith.maximumf %25, %26 : vector<8x256xf32>
    %28 = arith.truncf %27 : vector<8x256xf32> to vector<8x256xbf16>
    %c0_13 = arith.constant 0 : index
    %c0_14 = arith.constant 0 : index
    %29 = vector.load %arg5[%c0_13, %c0_14] : memref<16x256xbf16, #tpu.memory_space<vmem>>, vector<8x256xbf16>
    tpu.vector_store %arg5[%c0_13, %c0_14], %28 {strides = array<i32>} : memref<16x256xbf16, #tpu.memory_space<vmem>>, vector<8x256xbf16>,
    %30 = vector.extract_strided_slice %2 {offsets = [8, 0], sizes = [8, 256], strides = [1, 1]} : vector<16x256xf32> to vector<8x256xf32>
    %cst_15 = arith.constant dense<0.000000e+00> : vector<256xf32>
    %31 = vector.multi_reduction <add>, %30, %cst_15 [0] : vector<8x256xf32> to vector<256xf32>
    %32 = vector.shape_cast %31 : vector<256xf32> to vector<1x256xf32>
    %cst_16 = arith.constant 8.000000e+00 : f32
    %33 = vector.broadcast %cst_16 : f32 to vector<1x256xf32>
    %34 = arith.divf %32, %33 : vector<1x256xf32>
    %35 = vector.broadcast %34 : vector<1x256xf32> to vector<8x256xf32>
    %36 = arith.subf %30, %35 : vector<8x256xf32>
    %37 = arith.mulf %36, %36 : vector<8x256xf32>
    %cst_17 = arith.constant dense<0.000000e+00> : vector<256xf32>
    %38 = vector.multi_reduction <add>, %37, %cst_17 [0] : vector<8x256xf32> to vector<256xf32>
    %39 = vector.shape_cast %38 : vector<256xf32> to vector<1x256xf32>
    %cst_18 = arith.constant 8.000000e+00 : f32
    %40 = vector.broadcast %cst_18 : f32 to vector<1x256xf32>
    %41 = arith.divf %39, %40 : vector<1x256xf32>
    %cst_19 = arith.constant 9.99999974E-6 : f32
    %42 = vector.broadcast %cst_19 : f32 to vector<1x256xf32>
    %43 = arith.addf %41, %42 : vector<1x256xf32>
    %44 = math.rsqrt %43 : vector<1x256xf32>
    %45 = vector.broadcast %44 : vector<1x256xf32> to vector<8x256xf32>
    %46 = arith.mulf %36, %45 : vector<8x256xf32>
    %c0_20 = arith.constant 0 : index
    %c0_21 = arith.constant 0 : index
    %47 = vector.load %arg3[%c0_20, %c0_21] : memref<1x256xf32, #tpu.memory_space<vmem>>, vector<1x256xf32>
    %48 = vector.broadcast %47 : vector<1x256xf32> to vector<8x256xf32>
    %49 = arith.mulf %46, %48 : vector<8x256xf32>
    %c0_22 = arith.constant 0 : index
    %c0_23 = arith.constant 0 : index
    %50 = vector.load %arg4[%c0_22, %c0_23] : memref<1x256xf32, #tpu.memory_space<vmem>>, vector<1x256xf32>
    %51 = vector.broadcast %50 : vector<1x256xf32> to vector<8x256xf32>
    %52 = arith.addf %49, %51 : vector<8x256xf32>
    %cst_24 = arith.constant 0.000000e+00 : f32
    %53 = vector.broadcast %cst_24 : f32 to vector<8x256xf32>
    %54 = arith.maximumf %52, %53 : vector<8x256xf32>
    %55 = arith.truncf %54 : vector<8x256xf32> to vector<8x256xbf16>
    %c8 = arith.constant 8 : index
    %c0_25 = arith.constant 0 : index
    %56 = vector.load %arg5[%c8, %c0_25] : memref<16x256xbf16, #tpu.memory_space<vmem>>, vector<8x256xbf16>
    tpu.vector_store %arg5[%c8, %c0_25], %55 {strides = array<i32>} : memref<16x256xbf16, #tpu.memory_space<vmem>>, vector<8x256xbf16>,
    return
  }
  func.func @transform_0(%arg0: i32) -> (i32, i32) {
    %c0_i32 = arith.constant 0 : i32
    %c0_i32_0 = arith.constant 0 : i32
    %c0_i32_1 = arith.constant 0 : i32
    return %c0_i32, %c0_i32_0 : i32, i32
  }
  func.func @transform_1(%arg0: i32) -> (i32, i32) {
    %c0_i32 = arith.constant 0 : i32
    %c0_i32_0 = arith.constant 0 : i32
    return %c0_i32, %arg0 : i32, i32
  }
  func.func @transform_2(%arg0: i32) -> (i32, i32) {
    %c0_i32 = arith.constant 0 : i32
    %c0_i32_0 = arith.constant 0 : i32
    return %c0_i32, %arg0 : i32, i32
  }
  func.func @transform_3(%arg0: i32) -> (i32, i32) {
    %c0_i32 = arith.constant 0 : i32
    %c0_i32_0 = arith.constant 0 : i32
    return %c0_i32, %arg0 : i32, i32
  }
  func.func @transform_4(%arg0: i32) -> (i32, i32) {
    %c0_i32 = arith.constant 0 : i32
    %c0_i32_0 = arith.constant 0 : i32
    return %c0_i32, %arg0 : i32, i32
  }
}

module attributes {stable_mosaic.version = 11 : i64} {
  func.func @_moco_loss_kernel(%arg0: i32, %arg1: i32, %arg2: memref<1x8x128xbf16, #tpu.memory_space<vmem>>, %arg3: memref<1x8x128xbf16, #tpu.memory_space<vmem>>, %arg4: memref<1x1x1xf32, #tpu.memory_space<vmem>>, %arg5: memref<8x128xbf16, #tpu.memory_space<vmem>>) attributes {dimension_semantics = [#tpu.dimension_semantics<parallel>, #tpu.dimension_semantics<arbitrary>], iteration_bounds = array<i64: 2, 1>, scalar_prefetch = 0 : i64, scratch_operands = 1 : i64, tpu.core_type = #tpu.core_type<tc>, window_params = [{transform_indices = @transform_0, window_bounds = array<i64: 1, 8, 128>}, {transform_indices = @transform_1, window_bounds = array<i64: 1, 8, 128>}, {transform_indices = @transform_2, window_bounds = array<i64: 1, 1, 1>}]} {
    %c0_i32 = arith.constant 0 : i32
    %0 = arith.cmpi eq, %arg1, %c0_i32 : i32
    %1 = arith.extui %0 : i1 to i32
    %c0_i32_0 = arith.constant 0 : i32
    %2 = arith.cmpi ne, %1, %c0_i32_0 : i32
    scf.if %2 {
      %cst_20 = arith.constant 0.000000e+00 : f32
      %51 = vector.broadcast %cst_20 : f32 to vector<1x1xf32>
      %c0_21 = arith.constant 0 : index
      %c0_22 = arith.constant 0 : index
      %c0_23 = arith.constant 0 : index
      %52 = vector.load %arg4[%c0_21, %c0_22, %c0_23] : memref<1x1x1xf32, #tpu.memory_space<vmem>>, vector<1x1x1xf32>
      %53 = vector.shape_cast %52 : vector<1x1x1xf32> to vector<1x1xf32>
      %54 = vector.shape_cast %51 : vector<1x1xf32> to vector<1x1x1xf32>
      tpu.vector_store %arg4[%c0_21, %c0_22, %c0_23], %54 {strides = array<i32>} : memref<1x1x1xf32, #tpu.memory_space<vmem>>, vector<1x1x1xf32>,
      %c0_24 = arith.constant 0 : index
      %c0_25 = arith.constant 0 : index
      %c0_26 = arith.constant 0 : index
      %55 = vector.load %arg3[%c0_24, %c0_25, %c0_26] : memref<1x8x128xbf16, #tpu.memory_space<vmem>>, vector<1x8x128xbf16>
      %56 = vector.shape_cast %55 : vector<1x8x128xbf16> to vector<8x128xbf16>
      %57 = arith.extf %56 : vector<8x128xbf16> to vector<8x128xf32>
      %58 = arith.mulf %57, %57 : vector<8x128xf32>
      %cst_27 = arith.constant dense<0.000000e+00> : vector<8xf32>
      %59 = vector.multi_reduction <add>, %58, %cst_27 [1] : vector<8x128xf32> to vector<8xf32>
      %60 = vector.shape_cast %59 : vector<8xf32> to vector<8x1xf32>
      %cst_28 = arith.constant 1.000000e-24 : f32
      %61 = vector.broadcast %cst_28 : f32 to vector<8x1xf32>
      %62 = arith.maximumf %60, %61 : vector<8x1xf32>
      %63 = math.rsqrt %62 : vector<8x1xf32>
      %64 = vector.broadcast %63 : vector<8x1xf32> to vector<8x128xf32>
      %65 = arith.mulf %57, %64 : vector<8x128xf32>
      %66 = arith.truncf %65 : vector<8x128xf32> to vector<8x128xbf16>
      %c0_29 = arith.constant 0 : index
      %c0_30 = arith.constant 0 : index
      %67 = vector.load %arg5[%c0_29, %c0_30] : memref<8x128xbf16, #tpu.memory_space<vmem>>, vector<8x128xbf16>
      tpu.vector_store %arg5[%c0_29, %c0_30], %66 {strides = array<i32>} : memref<8x128xbf16, #tpu.memory_space<vmem>>, vector<8x128xbf16>,
    } else {
    }
    %c0 = arith.constant 0 : index
    %c0_1 = arith.constant 0 : index
    %c0_2 = arith.constant 0 : index
    %3 = vector.load %arg2[%c0, %c0_1, %c0_2] : memref<1x8x128xbf16, #tpu.memory_space<vmem>>, vector<1x8x128xbf16>
    %4 = vector.shape_cast %3 : vector<1x8x128xbf16> to vector<8x128xbf16>
    %5 = arith.extf %4 : vector<8x128xbf16> to vector<8x128xf32>
    %6 = arith.mulf %5, %5 : vector<8x128xf32>
    %cst = arith.constant dense<0.000000e+00> : vector<8xf32>
    %7 = vector.multi_reduction <add>, %6, %cst [1] : vector<8x128xf32> to vector<8xf32>
    %8 = vector.shape_cast %7 : vector<8xf32> to vector<8x1xf32>
    %cst_3 = arith.constant 1.000000e-24 : f32
    %9 = vector.broadcast %cst_3 : f32 to vector<8x1xf32>
    %10 = arith.maximumf %8, %9 : vector<8x1xf32>
    %11 = math.rsqrt %10 : vector<8x1xf32>
    %12 = vector.broadcast %11 : vector<8x1xf32> to vector<8x128xf32>
    %13 = arith.mulf %5, %12 : vector<8x128xf32>
    %cst_4 = arith.constant 1.000000e+00 : f32
    %14 = vector.broadcast %cst_4 : f32 to vector<8x128xf32>
    %15 = arith.mulf %13, %14 : vector<8x128xf32>
    %16 = arith.truncf %15 : vector<8x128xf32> to vector<8x128xbf16>
    %c0_5 = arith.constant 0 : index
    %c0_6 = arith.constant 0 : index
    %17 = vector.load %arg5[%c0_5, %c0_6] : memref<8x128xbf16, #tpu.memory_space<vmem>>, vector<8x128xbf16>
    %cst_7 = arith.constant dense<0.000000e+00> : vector<8x8xf32>
    %18 = tpu.matmul %16, %17, %cst_7 {dimension_numbers = #tpu.dot_dimension_numbers<[1], [1], [0], [0], [0, 0, 1, 0], [], []>} : vector<8x128xbf16>, vector<8x128xbf16>, vector<8x8xf32> -> vector<8x8xf32>
    %cst_8 = arith.constant dense<0xFF800000> : vector<8xf32>
    %19 = vector.multi_reduction <maximumf>, %18, %cst_8 [1] : vector<8x8xf32> to vector<8xf32>
    %20 = vector.shape_cast %19 : vector<8xf32> to vector<8x1xf32>
    %21 = vector.broadcast %20 : vector<8x1xf32> to vector<8x8xf32>
    %22 = arith.subf %18, %21 : vector<8x8xf32>
    %23 = math.exp %22 : vector<8x8xf32>
    %cst_9 = arith.constant dense<0.000000e+00> : vector<8xf32>
    %24 = vector.multi_reduction <add>, %23, %cst_9 [1] : vector<8x8xf32> to vector<8xf32>
    %25 = vector.shape_cast %24 : vector<8xf32> to vector<8x1xf32>
    %26 = math.log %25 : vector<8x1xf32>
    %27 = arith.addf %26, %20 : vector<8x1xf32>
    %c8_i32 = arith.constant 8 : i32
    %28 = arith.muli %arg1, %c8_i32 : i32
    %29 = tpu.iota {dimensions = array<i32: 0>} : vector<8x8xi32>
    %30 = vector.broadcast %28 : i32 to vector<8x8xi32>
    %31 = arith.addi %29, %30 : vector<8x8xi32>
    %32 = tpu.iota {dimensions = array<i32: 1>} : vector<8x8xi32>
    %33 = arith.cmpi eq, %31, %32 : vector<8x8xi32>
    %cst_10 = arith.constant 0.000000e+00 : f32
    %34 = vector.broadcast %cst_10 : f32 to vector<8x8xf32>
    %35 = arith.select %33, %18, %34 : vector<8x8xi1>, vector<8x8xf32>
    %cst_11 = arith.constant dense<0.000000e+00> : vector<8xf32>
    %36 = vector.multi_reduction <add>, %35, %cst_11 [1] : vector<8x8xf32> to vector<8xf32>
    %37 = vector.shape_cast %36 : vector<8xf32> to vector<8x1xf32>
    %c0_12 = arith.constant 0 : index
    %c0_13 = arith.constant 0 : index
    %c0_14 = arith.constant 0 : index
    %38 = vector.load %arg4[%c0_12, %c0_13, %c0_14] : memref<1x1x1xf32, #tpu.memory_space<vmem>>, vector<1x1x1xf32>
    %39 = vector.shape_cast %38 : vector<1x1x1xf32> to vector<1x1xf32>
    %40 = arith.subf %27, %37 : vector<8x1xf32>
    %41 = vector.shape_cast %40 : vector<8x1xf32> to vector<1x8x1xf32>
    %cst_15 = arith.constant dense<0.000000e+00> : vector<1xf32>
    %42 = vector.multi_reduction <add>, %41, %cst_15 [1, 2] : vector<1x8x1xf32> to vector<1xf32>
    %43 = vector.shape_cast %42 : vector<1xf32> to vector<1x1x1xf32>
    %44 = vector.extract %43[0, 0, 0] : f32 from vector<1x1x1xf32>
    %cst_16 = arith.constant 2.500000e-01 : f32
    %45 = arith.mulf %44, %cst_16 : f32
    %46 = vector.broadcast %45 : f32 to vector<1x1xf32>
    %47 = arith.addf %39, %46 : vector<1x1xf32>
    %c0_17 = arith.constant 0 : index
    %c0_18 = arith.constant 0 : index
    %c0_19 = arith.constant 0 : index
    %48 = vector.load %arg4[%c0_17, %c0_18, %c0_19] : memref<1x1x1xf32, #tpu.memory_space<vmem>>, vector<1x1x1xf32>
    %49 = vector.shape_cast %48 : vector<1x1x1xf32> to vector<1x1xf32>
    %50 = vector.shape_cast %47 : vector<1x1xf32> to vector<1x1x1xf32>
    tpu.vector_store %arg4[%c0_17, %c0_18, %c0_19], %50 {strides = array<i32>} : memref<1x1x1xf32, #tpu.memory_space<vmem>>, vector<1x1x1xf32>,
    return
  }
  func.func @transform_0(%arg0: i32, %arg1: i32) -> (i32, i32, i32) {
    %c0_i32 = arith.constant 0 : i32
    %c0_i32_0 = arith.constant 0 : i32
    return %arg0, %arg1, %c0_i32 : i32, i32, i32
  }
  func.func @transform_1(%arg0: i32, %arg1: i32) -> (i32, i32, i32) {
    %c1_i32 = arith.constant 1 : i32
    %0 = arith.subi %c1_i32, %arg0 : i32
    %c0_i32 = arith.constant 0 : i32
    %c0_i32_0 = arith.constant 0 : i32
    %c0_i32_1 = arith.constant 0 : i32
    return %0, %c0_i32, %c0_i32_0 : i32, i32, i32
  }
  func.func @transform_2(%arg0: i32, %arg1: i32) -> (i32, i32, i32) {
    %c0_i32 = arith.constant 0 : i32
    %c0_i32_0 = arith.constant 0 : i32
    %c0_i32_1 = arith.constant 0 : i32
    return %arg0, %c0_i32, %c0_i32_0 : i32, i32, i32
  }
}

</mosaic_0001>

<llo_original>
// kernel: moco_moe_forward.14
$region0: #{moco_moe_forward.14}
  #allocation0 [shape = 'u32[]', space=smem, size = 0x4, offset = 0x4, fixed_abs, tag = 'smem constant byte address 0x4 - core index']
  #allocation1 [shape = 'u32[144,128]{1,0:T(1,128)}', space=vmem, size = 0x12000, scoped, tag = 'internal scratch']
  %s0 = inlined_call_operand.vmem [shape: bf16[16,256], index: 0, kind: input, shape index: {}]
  %s1 = inlined_call_operand.vmem [shape: bf16[256,128], index: 1, kind: input, shape index: {}]
  %s2 = inlined_call_operand.vmem [shape: bf16[16,128], index: 2, kind: output, shape index: {}]
  %s3 = sld [smem:[#allocation0]]
  $region18: #{moco_moe_forward.14} parent=0
    _
  %s5 = ssub.s32 1, %s3
  %s6 = scalar_select 0, %s5, %s3
  // Predicated region
  $region2: #{moco_moe_forward.14} parent=0 // pred_check
    _
  $region3: #{moco_moe_forward.14} parent=0 // pred_check_branch
    %8 = sbr.rel (0) target = $region5
  $region4: #{moco_moe_forward.14} parent=0 // pred_region
    _
  $region5: #{moco_moe_forward.14} parent=0 // pred_fallthru
    _
  // Predicated region
  $region6: #{moco_moe_forward.14} parent=0 // pred_check
    _
  $region7: #{moco_moe_forward.14} parent=0 // pred_check_branch
    %10 = sbr.rel (0) target = $region9
  $region8: #{moco_moe_forward.14} parent=0 // pred_region
    _
  $region9: #{moco_moe_forward.14} parent=0 // pred_fallthru
    _
  %v12 = vld [vmem:[%s0] sm:$0xff]
  %v13 = vld [vmem:[%s0 + $0x8] sm:$0xff]
  %v14 = vld [vmem:[%s1] sm:$0xf]
  %v15 = vld [vmem:[%s1 + $0x4] sm:$0xf]
  %v16 = vld [vmem:[%s1 + $0x8] sm:$0xf]
  %v17 = vld [vmem:[%s1 + $0xc] sm:$0xf]
  %v18 = vld [vmem:[%s1 + $0x10] sm:$0xf]
  %v19 = vld [vmem:[%s1 + $0x14] sm:$0xf]
  %v20 = vld [vmem:[%s1 + $0x18] sm:$0xf]
  %v21 = vld [vmem:[%s1 + $0x1c] sm:$0xf]
  %v22 = vld [vmem:[%s1 + $0x20] sm:$0xf]
  %v23 = vld [vmem:[%s1 + $0x24] sm:$0xf]
  %v24 = vld [vmem:[%s1 + $0x28] sm:$0xf]
  %v25 = vld [vmem:[%s1 + $0x2c] sm:$0xf]
  %v26 = vld [vmem:[%s1 + $0x30] sm:$0xf]
  %v27 = vld [vmem:[%s1 + $0x34] sm:$0xf]
  %v28 = vld [vmem:[%s1 + $0x38] sm:$0xf]
  %v29 = vld [vmem:[%s1 + $0x3c] sm:$0xf]
  %v30 = vld [vmem:[%s1 + $0x40] sm:$0xf]
  %v31 = vld [vmem:[%s1 + $0x44] sm:$0xf]
  %v32 = vld [vmem:[%s1 + $0x48] sm:$0xf]
  %v33 = vld [vmem:[%s1 + $0x4c] sm:$0xf]
  %v34 = vld [vmem:[%s1 + $0x50] sm:$0xf]
  %v35 = vld [vmem:[%s1 + $0x54] sm:$0xf]
  %v36 = vld [vmem:[%s1 + $0x58] sm:$0xf]
  %v37 = vld [vmem:[%s1 + $0x5c] sm:$0xf]
  %v38 = vld [vmem:[%s1 + $0x60] sm:$0xf]
  %v39 = vld [vmem:[%s1 + $0x64] sm:$0xf]
  %v40 = vld [vmem:[%s1 + $0x68] sm:$0xf]
  %v41 = vld [vmem:[%s1 + $0x6c] sm:$0xf]
  %v42 = vld [vmem:[%s1 + $0x70] sm:$0xf]
  %v43 = vld [vmem:[%s1 + $0x74] sm:$0xf]
  %v44 = vld [vmem:[%s1 + $0x78] sm:$0xf]
  %v45 = vld [vmem:[%s1 + $0x7c] sm:$0xf]
  %v48 = vunpack.c.l.b16 %v12
  %v49 = vunpack.c.h.b16 %v12
  %v50 = vunpack.c.l.b16 %v13
  %v51 = vunpack.c.h.b16 %v13
  %v52 = vpack.c.b16 %v50, %v48
  %v53 = vpack.c.b16 %v51, %v49
  %v88 = vunpack.c.l.b16 %v14
  %v89 = vunpack.c.l.b16 %v15
  %v90 = vunpack.c.l.b16 %v16
  %v91 = vunpack.c.l.b16 %v17
  %v92 = vunpack.c.l.b16 %v18
  %v93 = vunpack.c.l.b16 %v19
  %v94 = vunpack.c.l.b16 %v20
  %v95 = vunpack.c.l.b16 %v21
  %v96 = vunpack.c.l.b16 %v22
  %v97 = vunpack.c.l.b16 %v23
  %v98 = vunpack.c.l.b16 %v24
  %v99 = vunpack.c.l.b16 %v25
  %v100 = vunpack.c.l.b16 %v26
  %v101 = vunpack.c.l.b16 %v27
  %v102 = vunpack.c.l.b16 %v28
  %v103 = vunpack.c.l.b16 %v29
  %v104 = vunpack.c.l.b16 %v30
  %v105 = vunpack.c.l.b16 %v31
  %v106 = vunpack.c.l.b16 %v32
  %v107 = vunpack.c.l.b16 %v33
  %v108 = vunpack.c.l.b16 %v34
  %v109 = vunpack.c.l.b16 %v35
  %v110 = vunpack.c.l.b16 %v36
  %v111 = vunpack.c.l.b16 %v37
  %v112 = vunpack.c.l.b16 %v38
  %v113 = vunpack.c.l.b16 %v39
  %v114 = vunpack.c.l.b16 %v40
  %v115 = vunpack.c.l.b16 %v41
  %v116 = vunpack.c.l.b16 %v42
  %v117 = vunpack.c.l.b16 %v43
  %v118 = vunpack.c.l.b16 %v44
  %v119 = vunpack.c.l.b16 %v45
  %v120 = vpack.c.b16 %v89, %v88
  %v121 = vpack.c.b16 %v91, %v90
  %v122 = vpack.c.b16 %v93, %v92
  %v123 = vpack.c.b16 %v95, %v94
  %v124 = vpack.c.b16 %v97, %v96
  %v125 = vpack.c.b16 %v99, %v98
  %v126 = vpack.c.b16 %v101, %v100
  %v127 = vpack.c.b16 %v103, %v102
  %v128 = vpack.c.b16 %v105, %v104
  %v129 = vpack.c.b16 %v107, %v106
  %v130 = vpack.c.b16 %v109, %v108
  %v131 = vpack.c.b16 %v111, %v110
  %v132 = vpack.c.b16 %v113, %v112
  %v133 = vpack.c.b16 %v115, %v114
  %v134 = vpack.c.b16 %v117, %v116
  %v135 = vpack.c.b16 %v119, %v118
  %152 = vmatprep.subr.bf16.mxu0 0
  %153 = vmatpush1.bf16.msra.mxu0 %v120
  %154 = vmatprep.subr.bf16.mxu0 0
  %155 = vmatpush1.bf16.msra.mxu0 %v121
  %156 = vmatprep.subr.bf16.mxu0 0
  %157 = vmatpush1.bf16.msra.mxu0 %v122
  %158 = vmatprep.subr.bf16.mxu0 0
  %159 = vmatpush1.bf16.msra.mxu0 %v123
  %160 = vmatprep.subr.bf16.mxu0 0
  %161 = vmatpush1.bf16.msra.mxu0 %v124
  %162 = vmatprep.subr.bf16.mxu0 0
  %163 = vmatpush1.bf16.msra.mxu0 %v125
  %164 = vmatprep.subr.bf16.mxu0 0
  %165 = vmatpush1.bf16.msra.mxu0 %v126
  %166 = vmatprep.subr.bf16.mxu0 0
  %167 = vmatpush1.bf16.msra.mxu0 %v127
  %168 = vmatprep.subr.bf16.mxu0 0
  %169 = vmatpush1.bf16.msra.mxu0 %v128
  %170 = vmatprep.subr.bf16.mxu0 0
  %171 = vmatpush1.bf16.msra.mxu0 %v129
  %172 = vmatprep.subr.bf16.mxu0 0
  %173 = vmatpush1.bf16.msra.mxu0 %v130
  %174 = vmatprep.subr.bf16.mxu0 0
  %175 = vmatpush1.bf16.msra.mxu0 %v131
  %176 = vmatprep.subr.bf16.mxu0 0
  %177 = vmatpush1.bf16.msra.mxu0 %v132
  %178 = vmatprep.subr.bf16.mxu0 0
  %179 = vmatpush1.bf16.msra.mxu0 %v133
  %180 = vmatprep.subr.bf16.mxu0 0
  %181 = vmatpush1.bf16.msra.mxu0 %v134
  %182 = vmatprep.subr.bf16.mxu0 0
  %183 = vmatpush1.bf16.msra.mxu0 %v135
  %184 = vmatprep.mubr.bf16.mxu0 %v53
  %185 = vmatmul.mubr.bf16.gmra.mrb[0].mxu0 %v52
  %v186 = vpop.f32.mrb[0].mxu0
  %v187 = vadd.f32 0.0, %v186
  %v188 = vpop.f32.mrb[0].mxu0
  %v189 = vpop.f32.mrb[0].mxu0
  %v190 = vadd.f32 0.0, %v189
  %v191 = vpop.f32.mrb[0].mxu0
  %192 = vdwg.mxu0
  %v193 = vrot.slane %v187, 4
  %v194 = vadd.f32 %v187, %v193
  %v195 = vrot.slane %v194, 2
  %v196 = vadd.f32 %v194, %v195
  %v197 = vrot.slane %v196, 1
  %v198 = vadd.f32 %v196, %v197
  %v199 = vrcp.pop 8.0
  %v200 = vmul.f32 %v198, %v199
  %v201 = vsub.f32 %v187, %v200
  %v202 = vmul.f32 %v201, %v201
  %v203 = vrot.slane %v202, 4
  %v204 = vadd.f32 %v202, %v203
  %v205 = vrot.slane %v204, 2
  %v206 = vadd.f32 %v204, %v205
  %v207 = vrot.slane %v206, 1
  %v208 = vadd.f32 %v206, %v207
  %v209 = vmul.f32 %v208, %v199
  %v210 = vadd.f32 %v209, 1e-05
  %v211 = vrsqrt.pop %v210
  %v212 = vmul.f32 %v201, %v211
  %v213 = vpack.c.bf16 %v212, %v212
  %214 = vst [vmem:[%s2] sm:$0xf] %v213
  %v215 = vrot.slane %v190, 4
  %v216 = vadd.f32 %v190, %v215
  %v217 = vrot.slane %v216, 2
  %v218 = vadd.f32 %v216, %v217
  %v219 = vrot.slane %v218, 1
  %v220 = vadd.f32 %v218, %v219
  %v221 = vmul.f32 %v220, %v199
  %v222 = vsub.f32 %v190, %v221
  %v223 = vmul.f32 %v222, %v222
  %v224 = vrot.slane %v223, 4
  %v225 = vadd.f32 %v223, %v224
  %v226 = vrot.slane %v225, 2
  %v227 = vadd.f32 %v225, %v226
  %v228 = vrot.slane %v227, 1
  %v229 = vadd.f32 %v227, %v228
  %v230 = vmul.f32 %v229, %v199
  %v231 = vadd.f32 %v230, 1e-05
  %v232 = vrsqrt.pop %v231
  %v233 = vmul.f32 %v222, %v232
  %v234 = vpack.c.bf16 %v233, %v233
  %235 = vst [vmem:[%s2 + $0x4] sm:$0xf] %v234
  // Predicated region
  $region10: #{moco_moe_forward.14} parent=0 // pred_check
    _
  $region11: #{moco_moe_forward.14} parent=0 // pred_check_branch
    %237 = sbr.rel (0) target = $region13
  $region12: #{moco_moe_forward.14} parent=0 // pred_region
    _
  $region13: #{moco_moe_forward.14} parent=0 // pred_fallthru
    _
  // Predicated region
  $region14: #{moco_moe_forward.14} parent=0 // pred_check
    _
  $region15: #{moco_moe_forward.14} parent=0 // pred_check_branch
    %239 = sbr.rel (0) target = $region17
  $region16: #{moco_moe_forward.14} parent=0 // pred_region
    _
  $region17: #{moco_moe_forward.14} parent=0 // pred_fallthru
    _

// kernel: moco_moe_forward.13
$region0: #{moco_moe_forward.13}
  #allocation0 [shape = 'u32[]', space=smem, size = 0x4, offset = 0x4, fixed_abs, tag = 'smem constant byte address 0x4 - core index']
  #allocation1 [shape = 'u32[144,128]{1,0:T(1,128)}', space=vmem, size = 0x12000, scoped, tag = 'internal scratch']
  %s0 = inlined_call_operand.vmem [shape: bf16[16,1024], index: 0, kind: input, shape index: {}]
  %s1 = inlined_call_operand.vmem [shape: bf16[1024,256], index: 1, kind: input, shape index: {}]
  %s2 = inlined_call_operand.vmem [shape: f32[1,256], index: 2, kind: input, shape index: {}]
  %s3 = inlined_call_operand.vmem [shape: f32[1,256], index: 3, kind: input, shape index: {}]
  %s4 = inlined_call_operand.vmem [shape: bf16[16,256], index: 4, kind: output, shape index: {}]
  %s5 = sld [smem:[#allocation0]]
  $region26: #{moco_moe_forward.13} parent=0
    _
  %s7 = ssub.s32 1, %s5
  %s8 = scalar_select 0, %s7, %s5
  // Predicated region
  $region2: #{moco_moe_forward.13} parent=0 // pred_check
    _
  $region3: #{moco_moe_forward.13} parent=0 // pred_check_branch
    %10 = sbr.rel (0) target = $region5
  $region4: #{moco_moe_forward.13} parent=0 // pred_region
    _
  $region5: #{moco_moe_forward.13} parent=0 // pred_fallthru
    _
  // Predicated region
  $region6: #{moco_moe_forward.13} parent=0 // pred_check
    _
  $region7: #{moco_moe_forward.13} parent=0 // pred_check_branch
    %12 = sbr.rel (0) target = $region9
  $region8: #{moco_moe_forward.13} parent=0 // pred_region
    _
  $region9: #{moco_moe_forward.13} parent=0 // pred_fallthru
    _
  // Predicated region
  $region10: #{moco_moe_forward.13} parent=0 // pred_check
    _
  $region11: #{moco_moe_forward.13} parent=0 // pred_check_branch
    %14 = sbr.rel (0) target = $region13
  $region12: #{moco_moe_forward.13} parent=0 // pred_region
    _
  $region13: #{moco_moe_forward.13} parent=0 // pred_fallthru
    _
  // Predicated region
  $region14: #{moco_moe_forward.13} parent=0 // pred_check
    _
  $region15: #{moco_moe_forward.13} parent=0 // pred_check_branch
    %16 = sbr.rel (0) target = $region17
  $region16: #{moco_moe_forward.13} parent=0 // pred_region
    _
  $region17: #{moco_moe_forward.13} parent=0 // pred_fallthru
    _
  %v17 = vld [vmem:[%s0] sm:$0xff]
  %v18 = vld [vmem:[%s0 + $0x8] sm:$0xff]
  %v19 = vld [vmem:[%s0 + $0x10] sm:$0xff]
  %v20 = vld [vmem:[%s0 + $0x18] sm:$0xff]
  %v21 = vld [vmem:[%s0 + $0x20] sm:$0xff]
  %v22 = vld [vmem:[%s0 + $0x28] sm:$0xff]
  %v23 = vld [vmem:[%s0 + $0x30] sm:$0xff]
  %v24 = vld [vmem:[%s0 + $0x38] sm:$0xff]
  %v25 = vld [vmem:[%s1] sm:$0xff]
  %v26 = vld [vmem:[%s1 + $0x8] sm:$0xff]
  %v27 = vld [vmem:[%s1 + $0x10] sm:$0xff]
  %v28 = vld [vmem:[%s1 + $0x18] sm:$0xff]
  %v29 = vld [vmem:[%s1 + $0x20] sm:$0xff]
  %v30 = vld [vmem:[%s1 + $0x28] sm:$0xff]
  %v31 = vld [vmem:[%s1 + $0x30] sm:$0xff]
  %v32 = vld [vmem:[%s1 + $0x38] sm:$0xff]
  %v33 = vld [vmem:[%s1 + $0x40] sm:$0xff]
  %v34 = vld [vmem:[%s1 + $0x48] sm:$0xff]
  %v35 = vld [vmem:[%s1 + $0x50] sm:$0xff]
  %v36 = vld [vmem:[%s1 + $0x58] sm:$0xff]
  %v37 = vld [vmem:[%s1 + $0x60] sm:$0xff]
  %v38 = vld [vmem:[%s1 + $0x68] sm:$0xff]
  %v39 = vld [vmem:[%s1 + $0x70] sm:$0xff]
  %v40 = vld [vmem:[%s1 + $0x78] sm:$0xff]
  %v41 = vld [vmem:[%s1 + $0x80] sm:$0xff]
  %v42 = vld [vmem:[%s1 + $0x88] sm:$0xff]
  %v43 = vld [vmem:[%s1 + $0x90] sm:$0xff]
  %v44 = vld [vmem:[%s1 + $0x98] sm:$0xff]
  %v45 = vld [vmem:[%s1 + $0xa0] sm:$0xff]
  %v46 = vld [vmem:[%s1 + $0xa8] sm:$0xff]
  %v47 = vld [vmem:[%s1 + $0xb0] sm:$0xff]
  %v48 = vld [vmem:[%s1 + $0xb8] sm:$0xff]
  %v49 = vld [vmem:[%s1 + $0xc0] sm:$0xff]
  %v50 = vld [vmem:[%s1 + $0xc8] sm:$0xff]
  %v51 = vld [vmem:[%s1 + $0xd0] sm:$0xff]
  %v52 = vld [vmem:[%s1 + $0xd8] sm:$0xff]
  %v53 = vld [vmem:[%s1 + $0xe0] sm:$0xff]
  %v54 = vld [vmem:[%s1 + $0xe8] sm:$0xff]
  %v55 = vld [vmem:[%s1 + $0xf0] sm:$0xff]
  %v56 = vld [vmem:[%s1 + $0xf8] sm:$0xff]
  %v57 = vld [vmem:[%s1 + $0x100] sm:$0xff]
  %v58 = vld [vmem:[%s1 + $0x108] sm:$0xff]
  %v59 = vld [vmem:[%s1 + $0x110] sm:$0xff]
  %v60 = vld [vmem:[%s1 + $0x118] sm:$0xff]
  %v61 = vld [vmem:[%s1 + $0x120] sm:$0xff]
  %v62 = vld [vmem:[%s1 + $0x128] sm:$0xff]
  %v63 = vld [vmem:[%s1 + $0x130] sm:$0xff]
  %v64 = vld [vmem:[%s1 + $0x138] sm:$0xff]
  %v65 = vld [vmem:[%s1 + $0x140] sm:$0xff]
  %v66 = vld [vmem:[%s1 + $0x148] sm:$0xff]
  %v67 = vld [vmem:[%s1 + $0x150] sm:$0xff]
  %v68 = vld [vmem:[%s1 + $0x158] sm:$0xff]
  %v69 = vld [vmem:[%s1 + $0x160] sm:$0xff]
  %v70 = vld [vmem:[%s1 + $0x168] sm:$0xff]
  %v71 = vld [vmem:[%s1 + $0x170] sm:$0xff]
  %v72 = vld [vmem:[%s1 + $0x178] sm:$0xff]
  %v73 = vld [vmem:[%s1 + $0x180] sm:$0xff]
  %v74 = vld [vmem:[%s1 + $0x188] sm:$0xff]
  %v75 = vld [vmem:[%s1 + $0x190] sm:$0xff]
  %v76 = vld [vmem:[%s1 + $0x198] sm:$0xff]
  %v77 = vld [vmem:[%s1 + $0x1a0] sm:$0xff]
  %v78 = vld [vmem:[%s1 + $0x1a8] sm:$0xff]
  %v79 = vld [vmem:[%s1 + $0x1b0] sm:$0xff]
  %v80 = vld [vmem:[%s1 + $0x1b8] sm:$0xff]
  %v81 = vld [vmem:[%s1 + $0x1c0] sm:$0xff]
  %v82 = vld [vmem:[%s1 + $0x1c8] sm:$0xff]
  %v83 = vld [vmem:[%s1 + $0x1d0] sm:$0xff]
  %v84 = vld [vmem:[%s1 + $0x1d8] sm:$0xff]
  %v85 = vld [vmem:[%s1 + $0x1e0] sm:$0xff]
  %v86 = vld [vmem:[%s1 + $0x1e8] sm:$0xff]
  %v87 = vld [vmem:[%s1 + $0x1f0] sm:$0xff]
  %v88 = vld [vmem:[%s1 + $0x1f8] sm:$0xff]
  %v89 = vld [vmem:[%s1 + $0x200] sm:$0xff]
  %v90 = vld [vmem:[%s1 + $0x208] sm:$0xff]
  %v91 = vld [vmem:[%s1 + $0x210] sm:$0xff]
  %v92 = vld [vmem:[%s1 + $0x218] sm:$0xff]
  %v93 = vld [vmem:[%s1 + $0x220] sm:$0xff]
  %v94 = vld [vmem:[%s1 + $0x228] sm:$0xff]
  %v95 = vld [vmem:[%s1 + $0x230] sm:$0xff]
  %v96 = vld [vmem:[%s1 + $0x238] sm:$0xff]
  %v97 = vld [vmem:[%s1 + $0x240] sm:$0xff]
  %v98 = vld [vmem:[%s1 + $0x248] sm:$0xff]
  %v99 = vld [vmem:[%s1 + $0x250] sm:$0xff]
  %v100 = vld [vmem:[%s1 + $0x258] sm:$0xff]
  %v101 = vld [vmem:[%s1 + $0x260] sm:$0xff]
  %v102 = vld [vmem:[%s1 + $0x268] sm:$0xff]
  %v103 = vld [vmem:[%s1 + $0x270] sm:$0xff]
  %v104 = vld [vmem:[%s1 + $0x278] sm:$0xff]
  %v105 = vld [vmem:[%s1 + $0x280] sm:$0xff]
  %v106 = vld [vmem:[%s1 + $0x288] sm:$0xff]
  %v107 = vld [vmem:[%s1 + $0x290] sm:$0xff]
  %v108 = vld [vmem:[%s1 + $0x298] sm:$0xff]
  %v109 = vld [vmem:[%s1 + $0x2a0] sm:$0xff]
  %v110 = vld [vmem:[%s1 + $0x2a8] sm:$0xff]
  %v111 = vld [vmem:[%s1 + $0x2b0] sm:$0xff]
  %v112 = vld [vmem:[%s1 + $0x2b8] sm:$0xff]
  %v113 = vld [vmem:[%s1 + $0x2c0] sm:$0xff]
  %v114 = vld [vmem:[%s1 + $0x2c8] sm:$0xff]
  %v115 = vld [vmem:[%s1 + $0x2d0] sm:$0xff]
  %v116 = vld [vmem:[%s1 + $0x2d8] sm:$0xff]
  %v117 = vld [vmem:[%s1 + $0x2e0] sm:$0xff]
  %v118 = vld [vmem:[%s1 + $0x2e8] sm:$0xff]
  %v119 = vld [vmem:[%s1 + $0x2f0] sm:$0xff]
  %v120 = vld [vmem:[%s1 + $0x2f8] sm:$0xff]
  %v121 = vld [vmem:[%s1 + $0x300] sm:$0xff]
  %v122 = vld [vmem:[%s1 + $0x308] sm:$0xff]
  %v123 = vld [vmem:[%s1 + $0x310] sm:$0xff]
  %v124 = vld [vmem:[%s1 + $0x318] sm:$0xff]
  %v125 = vld [vmem:[%s1 + $0x320] sm:$0xff]
  %v126 = vld [vmem:[%s1 + $0x328] sm:$0xff]
  %v127 = vld [vmem:[%s1 + $0x330] sm:$0xff]
  %v128 = vld [vmem:[%s1 + $0x338] sm:$0xff]
  %v129 = vld [vmem:[%s1 + $0x340] sm:$0xff]
  %v130 = vld [vmem:[%s1 + $0x348] sm:$0xff]
  %v131 = vld [vmem:[%s1 + $0x350] sm:$0xff]
  %v132 = vld [vmem:[%s1 + $0x358] sm:$0xff]
  %v133 = vld [vmem:[%s1 + $0x360] sm:$0xff]
  %v134 = vld [vmem:[%s1 + $0x368] sm:$0xff]
  %v135 = vld [vmem:[%s1 + $0x370] sm:$0xff]
  %v136 = vld [vmem:[%s1 + $0x378] sm:$0xff]
  %v137 = vld [vmem:[%s1 + $0x380] sm:$0xff]
  %v138 = vld [vmem:[%s1 + $0x388] sm:$0xff]
  %v139 = vld [vmem:[%s1 + $0x390] sm:$0xff]
  %v140 = vld [vmem:[%s1 + $0x398] sm:$0xff]
  %v141 = vld [vmem:[%s1 + $0x3a0] sm:$0xff]
  %v142 = vld [vmem:[%s1 + $0x3a8] sm:$0xff]
  %v143 = vld [vmem:[%s1 + $0x3b0] sm:$0xff]
  %v144 = vld [vmem:[%s1 + $0x3b8] sm:$0xff]
  %v145 = vld [vmem:[%s1 + $0x3c0] sm:$0xff]
  %v146 = vld [vmem:[%s1 + $0x3c8] sm:$0xff]
  %v147 = vld [vmem:[%s1 + $0x3d0] sm:$0xff]
  %v148 = vld [vmem:[%s1 + $0x3d8] sm:$0xff]
  %v149 = vld [vmem:[%s1 + $0x3e0] sm:$0xff]
  %v150 = vld [vmem:[%s1 + $0x3e8] sm:$0xff]
  %v151 = vld [vmem:[%s1 + $0x3f0] sm:$0xff]
  %v152 = vld [vmem:[%s1 + $0x3f8] sm:$0xff]
  %v161 = vunpack.c.l.b16 %v17
  %v162 = vunpack.c.h.b16 %v17
  %v163 = vunpack.c.l.b16 %v18
  %v164 = vunpack.c.h.b16 %v18
  %v165 = vunpack.c.l.b16 %v19
  %v166 = vunpack.c.h.b16 %v19
  %v167 = vunpack.c.l.b16 %v20
  %v168 = vunpack.c.h.b16 %v20
  %v169 = vunpack.c.l.b16 %v21
  %v170 = vunpack.c.h.b16 %v21
  %v171 = vunpack.c.l.b16 %v22
  %v172 = vunpack.c.h.b16 %v22
  %v173 = vunpack.c.l.b16 %v23
  %v174 = vunpack.c.h.b16 %v23
  %v175 = vunpack.c.l.b16 %v24
  %v176 = vunpack.c.h.b16 %v24
  %v177 = vpack.c.b16 %v169, %v161
  %v178 = vpack.c.b16 %v170, %v162
  %v179 = vpack.c.b16 %v171, %v163
  %v180 = vpack.c.b16 %v172, %v164
  %v181 = vpack.c.b16 %v173, %v165
  %v182 = vpack.c.b16 %v174, %v166
  %v183 = vpack.c.b16 %v175, %v167
  %v184 = vpack.c.b16 %v176, %v168
  %v321 = vunpack.c.l.b16 %v25
  %v322 = vunpack.c.h.b16 %v25
  %v323 = vunpack.c.l.b16 %v26
  %v324 = vunpack.c.h.b16 %v26
  %v325 = vunpack.c.l.b16 %v27
  %v326 = vunpack.c.h.b16 %v27
  %v327 = vunpack.c.l.b16 %v28
  %v328 = vunpack.c.h.b16 %v28
  %v329 = vunpack.c.l.b16 %v29
  %v330 = vunpack.c.h.b16 %v29
  %v331 = vunpack.c.l.b16 %v30
  %v332 = vunpack.c.h.b16 %v30
  %v333 = vunpack.c.l.b16 %v31
  %v334 = vunpack.c.h.b16 %v31
  %v335 = vunpack.c.l.b16 %v32
  %v336 = vunpack.c.h.b16 %v32
  %v337 = vunpack.c.l.b16 %v33
  %v338 = vunpack.c.h.b16 %v33
  %v339 = vunpack.c.l.b16 %v34
  %v340 = vunpack.c.h.b16 %v34
  %v341 = vunpack.c.l.b16 %v35
  %v342 = vunpack.c.h.b16 %v35
  %v343 = vunpack.c.l.b16 %v36
  %v344 = vunpack.c.h.b16 %v36
  %v345 = vunpack.c.l.b16 %v37
  %v346 = vunpack.c.h.b16 %v37
  %v347 = vunpack.c.l.b16 %v38
  %v348 = vunpack.c.h.b16 %v38
  %v349 = vunpack.c.l.b16 %v39
  %v350 = vunpack.c.h.b16 %v39
  %v351 = vunpack.c.l.b16 %v40
  %v352 = vunpack.c.h.b16 %v40
  %v353 = vunpack.c.l.b16 %v41
  %v354 = vunpack.c.h.b16 %v41
  %v355 = vunpack.c.l.b16 %v42
  %v356 = vunpack.c.h.b16 %v42
  %v357 = vunpack.c.l.b16 %v43
  %v358 = vunpack.c.h.b16 %v43
  %v359 = vunpack.c.l.b16 %v44
  %v360 = vunpack.c.h.b16 %v44
  %v361 = vunpack.c.l.b16 %v45
  %v362 = vunpack.c.h.b16 %v45
  %v363 = vunpack.c.l.b16 %v46
  %v364 = vunpack.c.h.b16 %v46
  %v365 = vunpack.c.l.b16 %v47
  %v366 = vunpack.c.h.b16 %v47
  %v367 = vunpack.c.l.b16 %v48
  %v368 = vunpack.c.h.b16 %v48
  %v369 = vunpack.c.l.b16 %v49
  %v370 = vunpack.c.h.b16 %v49
  %v371 = vunpack.c.l.b16 %v50
  %v372 = vunpack.c.h.b16 %v50
  %v373 = vunpack.c.l.b16 %v51
  %v374 = vunpack.c.h.b16 %v51
  %v375 = vunpack.c.l.b16 %v52
  %v376 = vunpack.c.h.b16 %v52
  %v377 = vunpack.c.l.b16 %v53
  %v378 = vunpack.c.h.b16 %v53
  %v379 = vunpack.c.l.b16 %v54
  %v380 = vunpack.c.h.b16 %v54
  %v381 = vunpack.c.l.b16 %v55
  %v382 = vunpack.c.h.b16 %v55
  %v383 = vunpack.c.l.b16 %v56
  %v384 = vunpack.c.h.b16 %v56
  %v385 = vunpack.c.l.b16 %v57
  %v386 = vunpack.c.h.b16 %v57
  %v387 = vunpack.c.l.b16 %v58
  %v388 = vunpack.c.h.b16 %v58
  %v389 = vunpack.c.l.b16 %v59
  %v390 = vunpack.c.h.b16 %v59
  %v391 = vunpack.c.l.b16 %v60
  %v392 = vunpack.c.h.b16 %v60
  %v393 = vunpack.c.l.b16 %v61
  %v394 = vunpack.c.h.b16 %v61
  %v395 = vunpack.c.l.b16 %v62
  %v396 = vunpack.c.h.b16 %v62
  %v397 = vunpack.c.l.b16 %v63
  %v398 = vunpack.c.h.b16 %v63
  %v399 = vunpack.c.l.b16 %v64
  %v400 = vunpack.c.h.b16 %v64
  %v401 = vunpack.c.l.b16 %v65
  %v402 = vunpack.c.h.b16 %v65
  %v403 = vunpack.c.l.b16 %v66
  %v404 = vunpack.c.h.b16 %v66
  %v405 = vunpack.c.l.b16 %v67
  %v406 = vunpack.c.h.b16 %v67
  %v407 = vunpack.c.l.b16 %v68
  %v408 = vunpack.c.h.b16 %v68
  %v409 = vunpack.c.l.b16 %v69
  %v410 = vunpack.c.h.b16 %v69
  %v411 = vunpack.c.l.b16 %v70
  %v412 = vunpack.c.h.b16 %v70
  %v413 = vunpack.c.l.b16 %v71
  %v414 = vunpack.c.h.b16 %v71
  %v415 = vunpack.c.l.b16 %v72
  %v416 = vunpack.c.h.b16 %v72
  %v417 = vunpack.c.l.b16 %v73
  %v418 = vunpack.c.h.b16 %v73
  %v419 = vunpack.c.l.b16 %v74
  %v420 = vunpack.c.h.b16 %v74
  %v421 = vunpack.c.l.b16 %v75
  %v422 = vunpack.c.h.b16 %v75
  %v423 = vunpack.c.l.b16 %v76
  %v424 = vunpack.c.h.b16 %v76
  %v425 = vunpack.c.l.b16 %v77
  %v426 = vunpack.c.h.b16 %v77
  %v427 = vunpack.c.l.b16 %v78
  %v428 = vunpack.c.h.b16 %v78
  %v429 = vunpack.c.l.b16 %v79
  %v430 = vunpack.c.h.b16 %v79
  %v431 = vunpack.c.l.b16 %v80
  %v432 = vunpack.c.h.b16 %v80
  %v433 = vunpack.c.l.b16 %v81
  %v434 = vunpack.c.h.b16 %v81
  %v435 = vunpack.c.l.b16 %v82
  %v436 = vunpack.c.h.b16 %v82
  %v437 = vunpack.c.l.b16 %v83
  %v438 = vunpack.c.h.b16 %v83
  %v439 = vunpack.c.l.b16 %v84
  %v440 = vunpack.c.h.b16 %v84
  %v441 = vunpack.c.l.b16 %v85
  %v442 = vunpack.c.h.b16 %v85
  %v443 = vunpack.c.l.b16 %v86
  %v444 = vunpack.c.h.b16 %v86
  %v445 = vunpack.c.l.b16 %v87
  %v446 = vunpack.c.h.b16 %v87
  %v447 = vunpack.c.l.b16 %v88
  %v448 = vunpack.c.h.b16 %v88
  %v449 = vunpack.c.l.b16 %v89
  %v450 = vunpack.c.h.b16 %v89
  %v451 = vunpack.c.l.b16 %v90
  %v452 = vunpack.c.h.b16 %v90
  %v453 = vunpack.c.l.b16 %v91
  %v454 = vunpack.c.h.b16 %v91
  %v455 = vunpack.c.l.b16 %v92
  %v456 = vunpack.c.h.b16 %v92
  %v457 = vunpack.c.l.b16 %v93
  %v458 = vunpack.c.h.b16 %v93
  %v459 = vunpack.c.l.b16 %v94
  %v460 = vunpack.c.h.b16 %v94
  %v461 = vunpack.c.l.b16 %v95
  %v462 = vunpack.c.h.b16 %v95
  %v463 = vunpack.c.l.b16 %v96
  %v464 = vunpack.c.h.b16 %v96
  %v465 = vunpack.c.l.b16 %v97
  %v466 = vunpack.c.h.b16 %v97
  %v467 = vunpack.c.l.b16 %v98
  %v468 = vunpack.c.h.b16 %v98
  %v469 = vunpack.c.l.b16 %v99
  %v470 = vunpack.c.h.b16 %v99
  %v471 = vunpack.c.l.b16 %v100
  %v472 = vunpack.c.h.b16 %v100
  %v473 = vunpack.c.l.b16 %v101
  %v474 = vunpack.c.h.b16 %v101
  %v475 = vunpack.c.l.b16 %v102
  %v476 = vunpack.c.h.b16 %v102
  %v477 = vunpack.c.l.b16 %v103
  %v478 = vunpack.c.h.b16 %v103
  %v479 = vunpack.c.l.b16 %v104
  %v480 = vunpack.c.h.b16 %v104
  %v481 = vunpack.c.l.b16 %v105
  %v482 = vunpack.c.h.b16 %v105
  %v483 = vunpack.c.l.b16 %v106
  %v484 = vunpack.c.h.b16 %v106
  %v485 = vunpack.c.l.b16 %v107
  %v486 = vunpack.c.h.b16 %v107
  %v487 = vunpack.c.l.b16 %v108
  %v488 = vunpack.c.h.b16 %v108
  %v489 = vunpack.c.l.b16 %v109
  %v490 = vunpack.c.h.b16 %v109
  %v491 = vunpack.c.l.b16 %v110
  %v492 = vunpack.c.h.b16 %v110
  %v493 = vunpack.c.l.b16 %v111
  %v494 = vunpack.c.h.b16 %v111
  %v495 = vunpack.c.l.b16 %v112
  %v496 = vunpack.c.h.b16 %v112
  %v497 = vunpack.c.l.b16 %v113
  %v498 = vunpack.c.h.b16 %v113
  %v499 = vunpack.c.l.b16 %v114
  %v500 = vunpack.c.h.b16 %v114
  %v501 = vunpack.c.l.b16 %v115
  %v502 = vunpack.c.h.b16 %v115
  %v503 = vunpack.c.l.b16 %v116
  %v504 = vunpack.c.h.b16 %v116
  %v505 = vunpack.c.l.b16 %v117
  %v506 = vunpack.c.h.b16 %v117
  %v507 = vunpack.c.l.b16 %v118
  %v508 = vunpack.c.h.b16 %v118
  %v509 = vunpack.c.l.b16 %v119
  %v510 = vunpack.c.h.b16 %v119
  %v511 = vunpack.c.l.b16 %v120
  %v512 = vunpack.c.h.b16 %v120
  %v513 = vunpack.c.l.b16 %v121
  %v514 = vunpack.c.h.b16 %v121
  %v515 = vunpack.c.l.b16 %v122
  %v516 = vunpack.c.h.b16 %v122
  %v517 = vunpack.c.l.b16 %v123
  %v518 = vunpack.c.h.b16 %v123
  %v519 = vunpack.c.l.b16 %v124
  %v520 = vunpack.c.h.b16 %v124
  %v521 = vunpack.c.l.b16 %v125
  %v522 = vunpack.c.h.b16 %v125
  %v523 = vunpack.c.l.b16 %v126
  %v524 = vunpack.c.h.b16 %v126
  %v525 = vunpack.c.l.b16 %v127
  %v526 = vunpack.c.h.b16 %v127
  %v527 = vunpack.c.l.b16 %v128
  %v528 = vunpack.c.h.b16 %v128
  %v529 = vunpack.c.l.b16 %v129
  %v530 = vunpack.c.h.b16 %v129
  %v531 = vunpack.c.l.b16 %v130
  %v532 = vunpack.c.h.b16 %v130
  %v533 = vunpack.c.l.b16 %v131
  %v534 = vunpack.c.h.b16 %v131
  %v535 = vunpack.c.l.b16 %v132
  %v536 = vunpack.c.h.b16 %v132
  %v537 = vunpack.c.l.b16 %v133
  %v538 = vunpack.c.h.b16 %v133
  %v539 = vunpack.c.l.b16 %v134
  %v540 = vunpack.c.h.b16 %v134
  %v541 = vunpack.c.l.b16 %v135
  %v542 = vunpack.c.h.b16 %v135
  %v543 = vunpack.c.l.b16 %v136
  %v544 = vunpack.c.h.b16 %v136
  %v545 = vunpack.c.l.b16 %v137
  %v546 = vunpack.c.h.b16 %v137
  %v547 = vunpack.c.l.b16 %v138
  %v548 = vunpack.c.h.b16 %v138
  %v549 = vunpack.c.l.b16 %v139
  %v550 = vunpack.c.h.b16 %v139
  %v551 = vunpack.c.l.b16 %v140
  %v552 = vunpack.c.h.b16 %v140
  %v553 = vunpack.c.l.b16 %v141
  %v554 = vunpack.c.h.b16 %v141
  %v555 = vunpack.c.l.b16 %v142
  %v556 = vunpack.c.h.b16 %v142
  %v557 = vunpack.c.l.b16 %v143
  %v558 = vunpack.c.h.b16 %v143
  %v559 = vunpack.c.l.b16 %v144
  %v560 = vunpack.c.h.b16 %v144
  %v561 = vunpack.c.l.b16 %v145
  %v562 = vunpack.c.h.b16 %v145
  %v563 = vunpack.c.l.b16 %v146
  %v564 = vunpack.c.h.b16 %v146
  %v565 = vunpack.c.l.b16 %v147
  %v566 = vunpack.c.h.b16 %v147
  %v567 = vunpack.c.l.b16 %v148
  %v568 = vunpack.c.h.b16 %v148
  %v569 = vunpack.c.l.b16 %v149
  %v570 = vunpack.c.h.b16 %v149
  %v571 = vunpack.c.l.b16 %v150
  %v572 = vunpack.c.h.b16 %v150
  %v573 = vunpack.c.l.b16 %v151
  %v574 = vunpack.c.h.b16 %v151
  %v575 = vunpack.c.l.b16 %v152
  %v576 = vunpack.c.h.b16 %v152
  %v577 = vpack.c.b16 %v323, %v321
  %v578 = vpack.c.b16 %v324, %v322
  %v579 = vpack.c.b16 %v327, %v325
  %v580 = vpack.c.b16 %v328, %v326
  %v581 = vpack.c.b16 %v331, %v329
  %v582 = vpack.c.b16 %v332, %v330
  %v583 = vpack.c.b16 %v335, %v333
  %v584 = vpack.c.b16 %v336, %v334
  %v585 = vpack.c.b16 %v339, %v337
  %v586 = vpack.c.b16 %v340, %v338
  %v587 = vpack.c.b16 %v343, %v341
  %v588 = vpack.c.b16 %v344, %v342
  %v589 = vpack.c.b16 %v347, %v345
  %v590 = vpack.c.b16 %v348, %v346
  %v591 = vpack.c.b16 %v351, %v349
  %v592 = vpack.c.b16 %v352, %v350
  %v593 = vpack.c.b16 %v355, %v353
  %v594 = vpack.c.b16 %v356, %v354
  %v595 = vpack.c.b16 %v359, %v357
  %v596 = vpack.c.b16 %v360, %v358
  %v597 = vpack.c.b16 %v363, %v361
  %v598 = vpack.c.b16 %v364, %v362
  %v599 = vpack.c.b16 %v367, %v365
  %v600 = vpack.c.b16 %v368, %v366
  %v601 = vpack.c.b16 %v371, %v369
  %v602 = vpack.c.b16 %v372, %v370
  %v603 = vpack.c.b16 %v375, %v373
  %v604 = vpack.c.b16 %v376, %v374
  %v605 = vpack.c.b16 %v379, %v377
  %v606 = vpack.c.b16 %v380, %v378
  %v607 = vpack.c.b16 %v383, %v381
  %v608 = vpack.c.b16 %v384, %v382
  %v609 = vpack.c.b16 %v387, %v385
  %v610 = vpack.c.b16 %v388, %v386
  %v611 = vpack.c.b16 %v391, %v389
  %v612 = vpack.c.b16 %v392, %v390
  %v613 = vpack.c.b16 %v395, %v393
  %v614 = vpack.c.b16 %v396, %v394
  %v615 = vpack.c.b16 %v399, %v397
  %v616 = vpack.c.b16 %v400, %v398
  %v617 = vpack.c.b16 %v403, %v401
  %v618 = vpack.c.b16 %v404, %v402
  %v619 = vpack.c.b16 %v407, %v405
  %v620 = vpack.c.b16 %v408, %v406
  %v621 = vpack.c.b16 %v411, %v409
  %v622 = vpack.c.b16 %v412, %v410
  %v623 = vpack.c.b16 %v415, %v413
  %v624 = vpack.c.b16 %v416, %v414
  %v625 = vpack.c.b16 %v419, %v417
  %v626 = vpack.c.b16 %v420, %v418
  %v627 = vpack.c.b16 %v423, %v421
  %v628 = vpack.c.b16 %v424, %v422
  %v629 = vpack.c.b16 %v427, %v425
  %v630 = vpack.c.b16 %v428, %v426
  %v631 = vpack.c.b16 %v431, %v429
  %v632 = vpack.c.b16 %v432, %v430
  %v633 = vpack.c.b16 %v435, %v433
  %v634 = vpack.c.b16 %v436, %v434
  %v635 = vpack.c.b16 %v439, %v437
  %v636 = vpack.c.b16 %v440, %v438
  %v637 = vpack.c.b16 %v443, %v441
  %v638 = vpack.c.b16 %v444, %v442
  %v639 = vpack.c.b16 %v447, %v445
  %v640 = vpack.c.b16 %v448, %v446
  %v641 = vpack.c.b16 %v451, %v449
  %v642 = vpack.c.b16 %v452, %v450
  %v643 = vpack.c.b16 %v455, %v453
  %v644 = vpack.c.b16 %v456, %v454
  %v645 = vpack.c.b16 %v459, %v457
  %v646 = vpack.c.b16 %v460, %v458
  %v647 = vpack.c.b16 %v463, %v461
  %v648 = vpack.c.b16 %v464, %v462
  %v649 = vpack.c.b16 %v467, %v465
  %v650 = vpack.c.b16 %v468, %v466
  %v651 = vpack.c.b16 %v471, %v469
  %v652 = vpack.c.b16 %v472, %v470
  %v653 = vpack.c.b16 %v475, %v473
  %v654 = vpack.c.b16 %v476, %v474
  %v655 = vpack.c.b16 %v479, %v477
  %v656 = vpack.c.b16 %v480, %v478
  %v657 = vpack.c.b16 %v483, %v481
  %v658 = vpack.c.b16 %v484, %v482
  %v659 = vpack.c.b16 %v487, %v485
  %v660 = vpack.c.b16 %v488, %v486
  %v661 = vpack.c.b16 %v491, %v489
  %v662 = vpack.c.b16 %v492, %v490
  %v663 = vpack.c.b16 %v495, %v493
  %v664 = vpack.c.b16 %v496, %v494
  %v665 = vpack.c.b16 %v499, %v497
  %v666 = vpack.c.b16 %v500, %v498
  %v667 = vpack.c.b16 %v503, %v501
  %v668 = vpack.c.b16 %v504, %v502
  %v669 = vpack.c.b16 %v507, %v505
  %v670 = vpack.c.b16 %v508, %v506
  %v671 = vpack.c.b16 %v511, %v509
  %v672 = vpack.c.b16 %v512, %v510
  %v673 = vpack.c.b16 %v515, %v513
  %v674 = vpack.c.b16 %v516, %v514
  %v675 = vpack.c.b16 %v519, %v517
  %v676 = vpack.c.b16 %v520, %v518
  %v677 = vpack.c.b16 %v523, %v521
  %v678 = vpack.c.b16 %v524, %v522
  %v679 = vpack.c.b16 %v527, %v525
  %v680 = vpack.c.b16 %v528, %v526
  %v681 = vpack.c.b16 %v531, %v529
  %v682 = vpack.c.b16 %v532, %v530
  %v683 = vpack.c.b16 %v535, %v533
  %v684 = vpack.c.b16 %v536, %v534
  %v685 = vpack.c.b16 %v539, %v537
  %v686 = vpack.c.b16 %v540, %v538
  %v687 = vpack.c.b16 %v543, %v541
  %v688 = vpack.c.b16 %v544, %v542
  %v689 = vpack.c.b16 %v547, %v545
  %v690 = vpack.c.b16 %v548, %v546
  %v691 = vpack.c.b16 %v551, %v549
  %v692 = vpack.c.b16 %v552, %v550
  %v693 = vpack.c.b16 %v555, %v553
  %v694 = vpack.c.b16 %v556, %v554
  %v695 = vpack.c.b16 %v559, %v557
  %v696 = vpack.c.b16 %v560, %v558
  %v697 = vpack.c.b16 %v563, %v561
  %v698 = vpack.c.b16 %v564, %v562
  %v699 = vpack.c.b16 %v567, %v565
  %v700 = vpack.c.b16 %v568, %v566
  %v701 = vpack.c.b16 %v571, %v569
  %v702 = vpack.c.b16 %v572, %v570
  %v703 = vpack.c.b16 %v575, %v573
  %v704 = vpack.c.b16 %v576, %v574
  %833 = vmatprep.subr.bf16.mxu0 %v578
  %834 = vmatpush1.bf16.msra.mxu0 %v577
  %835 = vmatprep.subr.bf16.mxu0 %v580
  %836 = vmatpush1.bf16.msra.mxu0 %v579
  %837 = vmatprep.subr.bf16.mxu0 %v582
  %838 = vmatpush1.bf16.msra.mxu0 %v581
  %839 = vmatprep.subr.bf16.mxu0 %v584
  %840 = vmatpush1.bf16.msra.mxu0 %v583
  %841 = vmatprep.subr.bf16.mxu0 %v586
  %842 = vmatpush1.bf16.msra.mxu0 %v585
  %843 = vmatprep.subr.bf16.mxu0 %v588
  %844 = vmatpush1.bf16.msra.mxu0 %v587
  %845 = vmatprep.subr.bf16.mxu0 %v590
  %846 = vmatpush1.bf16.msra.mxu0 %v589
  %847 = vmatprep.subr.bf16.mxu0 %v592
  %848 = vmatpush1.bf16.msra.mxu0 %v591
  %849 = vmatprep.subr.bf16.mxu0 %v594
  %850 = vmatpush1.bf16.msra.mxu0 %v593
  %851 = vmatprep.subr.bf16.mxu0 %v596
  %852 = vmatpush1.bf16.msra.mxu0 %v595
  %853 = vmatprep.subr.bf16.mxu0 %v598
  %854 = vmatpush1.bf16.msra.mxu0 %v597
  %855 = vmatprep.subr.bf16.mxu0 %v600
  %856 = vmatpush1.bf16.msra.mxu0 %v599
  %857 = vmatprep.subr.bf16.mxu0 %v602
  %858 = vmatpush1.bf16.msra.mxu0 %v601
  %859 = vmatprep.subr.bf16.mxu0 %v604
  %860 = vmatpush1.bf16.msra.mxu0 %v603
  %861 = vmatprep.subr.bf16.mxu0 %v606
  %862 = vmatpush1.bf16.msra.mxu0 %v605
  %863 = vmatprep.subr.bf16.mxu0 %v608
  %864 = vmatpush1.bf16.msra.mxu0 %v607
  %865 = vmatprep.mubr.bf16.mxu0 %v178
  %866 = vmatmul.mubr.bf16.gmra.mrb[0].mxu0 %v177
  %v867 = vpop.f32.mrb[0].mxu0
  %v868 = vadd.f32 0.0, %v867
  %v869 = vpop.f32.mrb[0].mxu0
  %v870 = vadd.f32 0.0, %v869
  %v871 = vpop.f32.mrb[0].mxu0
  %v872 = vadd.f32 0.0, %v871
  %v873 = vpop.f32.mrb[0].mxu0
  %v874 = vadd.f32 0.0, %v873
  %875 = vdwg.mxu0
  %876 = vmatprep.subr.bf16.mxu0 %v610
  %877 = vmatpush1.bf16.msra.mxu0 %v609
  %878 = vmatprep.subr.bf16.mxu0 %v612
  %879 = vmatpush1.bf16.msra.mxu0 %v611
  %880 = vmatprep.subr.bf16.mxu0 %v614
  %881 = vmatpush1.bf16.msra.mxu0 %v613
  %882 = vmatprep.subr.bf16.mxu0 %v616
  %883 = vmatpush1.bf16.msra.mxu0 %v615
  %884 = vmatprep.subr.bf16.mxu0 %v618
  %885 = vmatpush1.bf16.msra.mxu0 %v617
  %886 = vmatprep.subr.bf16.mxu0 %v620
  %887 = vmatpush1.bf16.msra.mxu0 %v619
  %888 = vmatprep.subr.bf16.mxu0 %v622
  %889 = vmatpush1.bf16.msra.mxu0 %v621
  %890 = vmatprep.subr.bf16.mxu0 %v624
  %891 = vmatpush1.bf16.msra.mxu0 %v623
  %892 = vmatprep.subr.bf16.mxu0 %v626
  %893 = vmatpush1.bf16.msra.mxu0 %v625
  %894 = vmatprep.subr.bf16.mxu0 %v628
  %895 = vmatpush1.bf16.msra.mxu0 %v627
  %896 = vmatprep.subr.bf16.mxu0 %v630
  %897 = vmatpush1.bf16.msra.mxu0 %v629
  %898 = vmatprep.subr.bf16.mxu0 %v632
  %899 = vmatpush1.bf16.msra.mxu0 %v631
  %900 = vmatprep.subr.bf16.mxu0 %v634
  %901 = vmatpush1.bf16.msra.mxu0 %v633
  %902 = vmatprep.subr.bf16.mxu0 %v636
  %903 = vmatpush1.bf16.msra.mxu0 %v635
  %904 = vmatprep.subr.bf16.mxu0 %v638
  %905 = vmatpush1.bf16.msra.mxu0 %v637
  %906 = vmatprep.subr.bf16.mxu0 %v640
  %907 = vmatpush1.bf16.msra.mxu0 %v639
  %908 = vmatprep.mubr.bf16.mxu0 %v180
  %909 = vmatmul.mubr.bf16.gmra.mrb[0].mxu0 %v179
  %v910 = vpop.f32.mrb[0].mxu0
  %v911 = vadd.f32 %v868, %v910
  %v912 = vpop.f32.mrb[0].mxu0
  %v913 = vadd.f32 %v870, %v912
  %v914 = vpop.f32.mrb[0].mxu0
  %v915 = vadd.f32 %v872, %v914
  %v916 = vpop.f32.mrb[0].mxu0
  %v917 = vadd.f32 %v874, %v916
  %918 = vdwg.mxu0
  %919 = vmatprep.subr.bf16.mxu0 %v642
  %920 = vmatpush1.bf16.msra.mxu0 %v641
  %921 = vmatprep.subr.bf16.mxu0 %v644
  %922 = vmatpush1.bf16.msra.mxu0 %v643
  %923 = vmatprep.subr.bf16.mxu0 %v646
  %924 = vmatpush1.bf16.msra.mxu0 %v645
  %925 = vmatprep.subr.bf16.mxu0 %v648
  %926 = vmatpush1.bf16.msra.mxu0 %v647
  %927 = vmatprep.subr.bf16.mxu0 %v650
  %928 = vmatpush1.bf16.msra.mxu0 %v649
  %929 = vmatprep.subr.bf16.mxu0 %v652
  %930 = vmatpush1.bf16.msra.mxu0 %v651
  %931 = vmatprep.subr.bf16.mxu0 %v654
  %932 = vmatpush1.bf16.msra.mxu0 %v653
  %933 = vmatprep.subr.bf16.mxu0 %v656
  %934 = vmatpush1.bf16.msra.mxu0 %v655
  %935 = vmatprep.subr.bf16.mxu0 %v658
  %936 = vmatpush1.bf16.msra.mxu0 %v657
  %937 = vmatprep.subr.bf16.mxu0 %v660
  %938 = vmatpush1.bf16.msra.mxu0 %v659
  %939 = vmatprep.subr.bf16.mxu0 %v662
  %940 = vmatpush1.bf16.msra.mxu0 %v661
  %941 = vmatprep.subr.bf16.mxu0 %v664
  %942 = vmatpush1.bf16.msra.mxu0 %v663
  %943 = vmatprep.subr.bf16.mxu0 %v666
  %944 = vmatpush1.bf16.msra.mxu0 %v665
  %945 = vmatprep.subr.bf16.mxu0 %v668
  %946 = vmatpush1.bf16.msra.mxu0 %v667
  %947 = vmatprep.subr.bf16.mxu0 %v670
  %948 = vmatpush1.bf16.msra.mxu0 %v669
  %949 = vmatprep.subr.bf16.mxu0 %v672
  %950 = vmatpush1.bf16.msra.mxu0 %v671
  %951 = vmatprep.mubr.bf16.mxu0 %v182
  %952 = vmatmul.mubr.bf16.gmra.mrb[0].mxu0 %v181
  %v953 = vpop.f32.mrb[0].mxu0
  %v954 = vadd.f32 %v911, %v953
  %v955 = vpop.f32.mrb[0].mxu0
  %v956 = vadd.f32 %v913, %v955
  %v957 = vpop.f32.mrb[0].mxu0
  %v958 = vadd.f32 %v915, %v957
  %v959 = vpop.f32.mrb[0].mxu0
  %v960 = vadd.f32 %v917, %v959
  %961 = vdwg.mxu0
  %962 = vmatprep.subr.bf16.mxu0 %v674
  %963 = vmatpush1.bf16.msra.mxu0 %v673
  %964 = vmatprep.subr.bf16.mxu0 %v676
  %965 = vmatpush1.bf16.msra.mxu0 %v675
  %966 = vmatprep.subr.bf16.mxu0 %v678
  %967 = vmatpush1.bf16.msra.mxu0 %v677
  %968 = vmatprep.subr.bf16.mxu0 %v680
  %969 = vmatpush1.bf16.msra.mxu0 %v679
  %970 = vmatprep.subr.bf16.mxu0 %v682
  %971 = vmatpush1.bf16.msra.mxu0 %v681
  %972 = vmatprep.subr.bf16.mxu0 %v684
  %973 = vmatpush1.bf16.msra.mxu0 %v683
  %974 = vmatprep.subr.bf16.mxu0 %v686
  %975 = vmatpush1.bf16.msra.mxu0 %v685
  %976 = vmatprep.subr.bf16.mxu0 %v688
  %977 = vmatpush1.bf16.msra.mxu0 %v687
  %978 = vmatprep.subr.bf16.mxu0 %v690
  %979 = vmatpush1.bf16.msra.mxu0 %v689
  %980 = vmatprep.subr.bf16.mxu0 %v692
  %981 = vmatpush1.bf16.msra.mxu0 %v691
  %982 = vmatprep.subr.bf16.mxu0 %v694
  %983 = vmatpush1.bf16.msra.mxu0 %v693
  %984 = vmatprep.subr.bf16.mxu0 %v696
  %985 = vmatpush1.bf16.msra.mxu0 %v695
  %986 = vmatprep.subr.bf16.mxu0 %v698
  %987 = vmatpush1.bf16.msra.mxu0 %v697
  %988 = vmatprep.subr.bf16.mxu0 %v700
  %989 = vmatpush1.bf16.msra.mxu0 %v699
  %990 = vmatprep.subr.bf16.mxu0 %v702
  %991 = vmatpush1.bf16.msra.mxu0 %v701
  %992 = vmatprep.subr.bf16.mxu0 %v704
  %993 = vmatpush1.bf16.msra.mxu0 %v703
  %994 = vmatprep.mubr.bf16.mxu0 %v184
  %995 = vmatmul.mubr.bf16.gmra.mrb[0].mxu0 %v183
  %v996 = vpop.f32.mrb[0].mxu0
  %v997 = vadd.f32 %v954, %v996
  %v998 = vpop.f32.mrb[0].mxu0
  %v999 = vadd.f32 %v956, %v998
  %v1000 = vpop.f32.mrb[0].mxu0
  %v1001 = vadd.f32 %v958, %v1000
  %v1002 = vpop.f32.mrb[0].mxu0
  %v1003 = vadd.f32 %v960, %v1002
  %1004 = vdwg.mxu0
  %v1005 = vrot.slane %v997, 4
  %v1006 = vadd.f32 %v997, %v1005
  %v1007 = vrot.slane %v1006, 2
  %v1008 = vadd.f32 %v1006, %v1007
  %v1009 = vrot.slane %v1008, 1
  %v1010 = vadd.f32 %v1008, %v1009
  %v1011 = vrot.slane %v999, 4
  %v1012 = vadd.f32 %v999, %v1011
  %v1013 = vrot.slane %v1012, 2
  %v1014 = vadd.f32 %v1012, %v1013
  %v1015 = vrot.slane %v1014, 1
  %v1016 = vadd.f32 %v1014, %v1015
  %v1017 = vrcp.pop 8.0
  %v1018 = vmul.f32 %v1010, %v1017
  %v1019 = vmul.f32 %v1016, %v1017
  %v1020 = vsub.f32 %v997, %v1018
  %v1021 = vsub.f32 %v999, %v1019
  %v1022 = vmul.f32 %v1020, %v1020
  %v1023 = vmul.f32 %v1021, %v1021
  %v1024 = vrot.slane %v1022, 4
  %v1025 = vadd.f32 %v1022, %v1024
  %v1026 = vrot.slane %v1025, 2
  %v1027 = vadd.f32 %v1025, %v1026
  %v1028 = vrot.slane %v1027, 1
  %v1029 = vadd.f32 %v1027, %v1028
  %v1030 = vrot.slane %v1023, 4
  %v1031 = vadd.f32 %v1023, %v1030
  %v1032 = vrot.slane %v1031, 2
  %v1033 = vadd.f32 %v1031, %v1032
  %v1034 = vrot.slane %v1033, 1
  %v1035 = vadd.f32 %v1033, %v1034
  %v1036 = vmul.f32 %v1029, %v1017
  %v1037 = vmul.f32 %v1035, %v1017
  %v1038 = vadd.f32 %v1036, 1e-05
  %v1039 = vadd.f32 %v1037, 1e-05
  %v1040 = vrsqrt.pop %v1038
  %v1041 = vrsqrt.pop %v1039
  %v1042 = vmul.f32 %v1020, %v1040
  %v1043 = vmul.f32 %v1021, %v1041
  %v1044 = vld [vmem:[%s2] sm:$0x3]
  %v1046 = vlaneseq
  %v1047 = vshrl.u32 %v1046, 7
  %v1048 = vsub.s32 0, %v1047
  %v1049 = vrot.slane %v1044, %v1048
  %v1050 = vlaneseq
  %v1051 = vshrl.u32 %v1050, 7
  %v1052 = vsub.s32 1, %v1051
  %v1053 = vrot.slane %v1044, %v1052
  %v1056 = vmul.f32 %v1042, %v1049
  %v1057 = vmul.f32 %v1043, %v1053
  %v1058 = vld [vmem:[%s3] sm:$0x3]
  %v1060 = vlaneseq
  %v1061 = vshrl.u32 %v1060, 7
  %v1062 = vsub.s32 0, %v1061
  %v1063 = vrot.slane %v1058, %v1062
  %v1064 = vlaneseq
  %v1065 = vshrl.u32 %v1064, 7
  %v1066 = vsub.s32 1, %v1065
  %v1067 = vrot.slane %v1058, %v1066
  %v1070 = vadd.f32 %v1056, %v1063
  %v1071 = vadd.f32 %v1057, %v1067
  %v1072 = vmax.f32 %v1070, 0.0
  %v1073 = vmax.f32 %v1071, 0.0
  %v1074 = vpack.c.bf16 %v1072, %v1072
  %v1075 = vpack.c.bf16 %v1073, %v1073
  %v1078 = vunpack.c.l.b16 %v1074
  %v1079 = vunpack.c.l.b16 %v1075
  %v1080 = vpack.c.b16 %v1079, %v1078
  %1082 = vst [vmem:[%s4] sm:$0xff] %v1080
  %v1083 = vrot.slane %v1001, 4
  %v1084 = vadd.f32 %v1001, %v1083
  %v1085 = vrot.slane %v1084, 2
  %v1086 = vadd.f32 %v1084, %v1085
  %v1087 = vrot.slane %v1086, 1
  %v1088 = vadd.f32 %v1086, %v1087
  %v1089 = vrot.slane %v1003, 4
  %v1090 = vadd.f32 %v1003, %v1089
  %v1091 = vrot.slane %v1090, 2
  %v1092 = vadd.f32 %v1090, %v1091
  %v1093 = vrot.slane %v1092, 1
  %v1094 = vadd.f32 %v1092, %v1093
  %v1095 = vmul.f32 %v1088, %v1017
  %v1096 = vmul.f32 %v1094, %v1017
  %v1097 = vsub.f32 %v1001, %v1095
  %v1098 = vsub.f32 %v1003, %v1096
  %v1099 = vmul.f32 %v1097, %v1097
  %v1100 = vmul.f32 %v1098, %v1098
  %v1101 = vrot.slane %v1099, 4
  %v1102 = vadd.f32 %v1099, %v1101
  %v1103 = vrot.slane %v1102, 2
  %v1104 = vadd.f32 %v1102, %v1103
  %v1105 = vrot.slane %v1104, 1
  %v1106 = vadd.f32 %v1104, %v1105
  %v1107 = vrot.slane %v1100, 4
  %v1108 = vadd.f32 %v1100, %v1107
  %v1109 = vrot.slane %v1108, 2
  %v1110 = vadd.f32 %v1108, %v1109
  %v1111 = vrot.slane %v1110, 1
  %v1112 = vadd.f32 %v1110, %v1111
  %v1113 = vmul.f32 %v1106, %v1017
  %v1114 = vmul.f32 %v1112, %v1017
  %v1115 = vadd.f32 %v1113, 1e-05
  %v1116 = vadd.f32 %v1114, 1e-05
  %v1117 = vrsqrt.pop %v1115
  %v1118 = vrsqrt.pop %v1116
  %v1119 = vmul.f32 %v1097, %v1117
  %v1120 = vmul.f32 %v1098, %v1118
  %v1121 = vld [vmem:[%s2] sm:$0x3]
  %v1123 = vlaneseq
  %v1124 = vshrl.u32 %v1123, 7
  %v1125 = vsub.s32 0, %v1124
  %v1126 = vrot.slane %v1121, %v1125
  %v1127 = vlaneseq
  %v1128 = vshrl.u32 %v1127, 7
  %v1129 = vsub.s32 1, %v1128
  %v1130 = vrot.slane %v1121, %v1129
  %v1133 = vmul.f32 %v1119, %v1126
  %v1134 = vmul.f32 %v1120, %v1130
  %v1135 = vld [vmem:[%s3] sm:$0x3]
  %v1137 = vlaneseq
  %v1138 = vshrl.u32 %v1137, 7
  %v1139 = vsub.s32 0, %v1138
  %v1140 = vrot.slane %v1135, %v1139
  %v1141 = vlaneseq
  %v1142 = vshrl.u32 %v1141, 7
  %v1143 = vsub.s32 1, %v1142
  %v1144 = vrot.slane %v1135, %v1143
  %v1147 = vadd.f32 %v1133, %v1140
  %v1148 = vadd.f32 %v1134, %v1144
  %v1149 = vmax.f32 %v1147, 0.0
  %v1150 = vmax.f32 %v1148, 0.0
  %v1151 = vpack.c.bf16 %v1149, %v1149
  %v1152 = vpack.c.bf16 %v1150, %v1150
  %v1155 = vunpack.c.l.b16 %v1151
  %v1156 = vunpack.c.l.b16 %v1152
  %v1157 = vpack.c.b16 %v1156, %v1155
  %1159 = vst [vmem:[%s4 + $0x8] sm:$0xff] %v1157
  // Predicated region
  $region18: #{moco_moe_forward.13} parent=0 // pred_check
    _
  $region19: #{moco_moe_forward.13} parent=0 // pred_check_branch
    %1161 = sbr.rel (0) target = $region21
  $region20: #{moco_moe_forward.13} parent=0 // pred_region
    _
  $region21: #{moco_moe_forward.13} parent=0 // pred_fallthru
    _
  // Predicated region
  $region22: #{moco_moe_forward.13} parent=0 // pred_check
    _
  $region23: #{moco_moe_forward.13} parent=0 // pred_check_branch
    %1163 = sbr.rel (0) target = $region25
  $region24: #{moco_moe_forward.13} parent=0 // pred_region
    _
  $region25: #{moco_moe_forward.13} parent=0 // pred_fallthru
    _

// kernel: moco_moe_forward.10
$region0: #{moco_moe_forward.10}
  #allocation0 [shape = 'u32[]', space=smem, size = 0x4, offset = 0x4, fixed_abs, tag = 'smem constant byte address 0x4 - core index']
  #allocation1 [shape = 'u32[144,128]{1,0:T(1,128)}', space=vmem, size = 0x12000, scoped, tag = 'internal scratch']
  %s0 = inlined_call_operand.vmem [shape: bf16[16,128], index: 0, kind: input, shape index: {}]
  %s1 = inlined_call_operand.vmem [shape: bf16[128,256], index: 1, kind: input, shape index: {}]
  %s2 = inlined_call_operand.vmem [shape: f32[1,256], index: 2, kind: input, shape index: {}]
  %s3 = inlined_call_operand.vmem [shape: f32[1,256], index: 3, kind: input, shape index: {}]
  %s4 = inlined_call_operand.vmem [shape: bf16[16,256], index: 4, kind: output, shape index: {}]
  %s5 = sld [smem:[#allocation0]]
  $region26: #{moco_moe_forward.10} parent=0
    _
  %s7 = ssub.s32 1, %s5
  %s8 = scalar_select 0, %s7, %s5
  // Predicated region
  $region2: #{moco_moe_forward.10} parent=0 // pred_check
    _
  $region3: #{moco_moe_forward.10} parent=0 // pred_check_branch
    %10 = sbr.rel (0) target = $region5
  $region4: #{moco_moe_forward.10} parent=0 // pred_region
    _
  $region5: #{moco_moe_forward.10} parent=0 // pred_fallthru
    _
  // Predicated region
  $region6: #{moco_moe_forward.10} parent=0 // pred_check
    _
  $region7: #{moco_moe_forward.10} parent=0 // pred_check_branch
    %12 = sbr.rel (0) target = $region9
  $region8: #{moco_moe_forward.10} parent=0 // pred_region
    _
  $region9: #{moco_moe_forward.10} parent=0 // pred_fallthru
    _
  // Predicated region
  $region10: #{moco_moe_forward.10} parent=0 // pred_check
    _
  $region11: #{moco_moe_forward.10} parent=0 // pred_check_branch
    %14 = sbr.rel (0) target = $region13
  $region12: #{moco_moe_forward.10} parent=0 // pred_region
    _
  $region13: #{moco_moe_forward.10} parent=0 // pred_fallthru
    _
  // Predicated region
  $region14: #{moco_moe_forward.10} parent=0 // pred_check
    _
  $region15: #{moco_moe_forward.10} parent=0 // pred_check_branch
    %16 = sbr.rel (0) target = $region17
  $region16: #{moco_moe_forward.10} parent=0 // pred_region
    _
  $region17: #{moco_moe_forward.10} parent=0 // pred_fallthru
    _
  %v18 = vld [vmem:[%s0] sm:$0xf]
  %v19 = vld [vmem:[%s0 + $0x4] sm:$0xf]
  %v20 = vld [vmem:[%s1] sm:$0xff]
  %v21 = vld [vmem:[%s1 + $0x8] sm:$0xff]
  %v22 = vld [vmem:[%s1 + $0x10] sm:$0xff]
  %v23 = vld [vmem:[%s1 + $0x18] sm:$0xff]
  %v24 = vld [vmem:[%s1 + $0x20] sm:$0xff]
  %v25 = vld [vmem:[%s1 + $0x28] sm:$0xff]
  %v26 = vld [vmem:[%s1 + $0x30] sm:$0xff]
  %v27 = vld [vmem:[%s1 + $0x38] sm:$0xff]
  %v28 = vld [vmem:[%s1 + $0x40] sm:$0xff]
  %v29 = vld [vmem:[%s1 + $0x48] sm:$0xff]
  %v30 = vld [vmem:[%s1 + $0x50] sm:$0xff]
  %v31 = vld [vmem:[%s1 + $0x58] sm:$0xff]
  %v32 = vld [vmem:[%s1 + $0x60] sm:$0xff]
  %v33 = vld [vmem:[%s1 + $0x68] sm:$0xff]
  %v34 = vld [vmem:[%s1 + $0x70] sm:$0xff]
  %v35 = vld [vmem:[%s1 + $0x78] sm:$0xff]
  %v38 = vunpack.c.l.b16 %v18
  %v39 = vunpack.c.l.b16 %v19
  %v40 = vpack.c.b16 %v39, %v38
  %v58 = vunpack.c.l.b16 %v20
  %v59 = vunpack.c.h.b16 %v20
  %v60 = vunpack.c.l.b16 %v21
  %v61 = vunpack.c.h.b16 %v21
  %v62 = vunpack.c.l.b16 %v22
  %v63 = vunpack.c.h.b16 %v22
  %v64 = vunpack.c.l.b16 %v23
  %v65 = vunpack.c.h.b16 %v23
  %v66 = vunpack.c.l.b16 %v24
  %v67 = vunpack.c.h.b16 %v24
  %v68 = vunpack.c.l.b16 %v25
  %v69 = vunpack.c.h.b16 %v25
  %v70 = vunpack.c.l.b16 %v26
  %v71 = vunpack.c.h.b16 %v26
  %v72 = vunpack.c.l.b16 %v27
  %v73 = vunpack.c.h.b16 %v27
  %v74 = vunpack.c.l.b16 %v28
  %v75 = vunpack.c.h.b16 %v28
  %v76 = vunpack.c.l.b16 %v29
  %v77 = vunpack.c.h.b16 %v29
  %v78 = vunpack.c.l.b16 %v30
  %v79 = vunpack.c.h.b16 %v30
  %v80 = vunpack.c.l.b16 %v31
  %v81 = vunpack.c.h.b16 %v31
  %v82 = vunpack.c.l.b16 %v32
  %v83 = vunpack.c.h.b16 %v32
  %v84 = vunpack.c.l.b16 %v33
  %v85 = vunpack.c.h.b16 %v33
  %v86 = vunpack.c.l.b16 %v34
  %v87 = vunpack.c.h.b16 %v34
  %v88 = vunpack.c.l.b16 %v35
  %v89 = vunpack.c.h.b16 %v35
  %v90 = vpack.c.b16 %v60, %v58
  %v91 = vpack.c.b16 %v61, %v59
  %v92 = vpack.c.b16 %v64, %v62
  %v93 = vpack.c.b16 %v65, %v63
  %v94 = vpack.c.b16 %v68, %v66
  %v95 = vpack.c.b16 %v69, %v67
  %v96 = vpack.c.b16 %v72, %v70
  %v97 = vpack.c.b16 %v73, %v71
  %v98 = vpack.c.b16 %v76, %v74
  %v99 = vpack.c.b16 %v77, %v75
  %v100 = vpack.c.b16 %v80, %v78
  %v101 = vpack.c.b16 %v81, %v79
  %v102 = vpack.c.b16 %v84, %v82
  %v103 = vpack.c.b16 %v85, %v83
  %v104 = vpack.c.b16 %v88, %v86
  %v105 = vpack.c.b16 %v89, %v87
  %122 = vmatprep.subr.bf16.mxu0 %v91
  %123 = vmatpush1.bf16.msra.mxu0 %v90
  %124 = vmatprep.subr.bf16.mxu0 %v93
  %125 = vmatpush1.bf16.msra.mxu0 %v92
  %126 = vmatprep.subr.bf16.mxu0 %v95
  %127 = vmatpush1.bf16.msra.mxu0 %v94
  %128 = vmatprep.subr.bf16.mxu0 %v97
  %129 = vmatpush1.bf16.msra.mxu0 %v96
  %130 = vmatprep.subr.bf16.mxu0 %v99
  %131 = vmatpush1.bf16.msra.mxu0 %v98
  %132 = vmatprep.subr.bf16.mxu0 %v101
  %133 = vmatpush1.bf16.msra.mxu0 %v100
  %134 = vmatprep.subr.bf16.mxu0 %v103
  %135 = vmatpush1.bf16.msra.mxu0 %v102
  %136 = vmatprep.subr.bf16.mxu0 %v105
  %137 = vmatpush1.bf16.msra.mxu0 %v104
  %138 = vmatprep.subr.bf16.mxu0 0
  %139 = vmatpush1.bf16.msra.mxu0 0
  %140 = vmatprep.subr.bf16.mxu0 0
  %141 = vmatpush1.bf16.msra.mxu0 0
  %142 = vmatprep.subr.bf16.mxu0 0
  %143 = vmatpush1.bf16.msra.mxu0 0
  %144 = vmatprep.subr.bf16.mxu0 0
  %145 = vmatpush1.bf16.msra.mxu0 0
  %146 = vmatprep.subr.bf16.mxu0 0
  %147 = vmatpush1.bf16.msra.mxu0 0
  %148 = vmatprep.subr.bf16.mxu0 0
  %149 = vmatpush1.bf16.msra.mxu0 0
  %150 = vmatprep.subr.bf16.mxu0 0
  %151 = vmatpush1.bf16.msra.mxu0 0
  %152 = vmatprep.subr.bf16.mxu0 0
  %153 = vmatpush1.bf16.msra.mxu0 0
  %154 = vmatprep.mubr.bf16.mxu0 0
  %155 = vmatmul.mubr.bf16.gmra.mrb[0].mxu0 %v40
  %v156 = vpop.f32.mrb[0].mxu0
  %v157 = vadd.f32 0.0, %v156
  %v158 = vpop.f32.mrb[0].mxu0
  %v159 = vadd.f32 0.0, %v158
  %v160 = vpop.f32.mrb[0].mxu0
  %v161 = vadd.f32 0.0, %v160
  %v162 = vpop.f32.mrb[0].mxu0
  %v163 = vadd.f32 0.0, %v162
  %164 = vdwg.mxu0
  %v165 = vrot.slane %v157, 4
  %v166 = vadd.f32 %v157, %v165
  %v167 = vrot.slane %v166, 2
  %v168 = vadd.f32 %v166, %v167
  %v169 = vrot.slane %v168, 1
  %v170 = vadd.f32 %v168, %v169
  %v171 = vrot.slane %v159, 4
  %v172 = vadd.f32 %v159, %v171
  %v173 = vrot.slane %v172, 2
  %v174 = vadd.f32 %v172, %v173
  %v175 = vrot.slane %v174, 1
  %v176 = vadd.f32 %v174, %v175
  %v177 = vrcp.pop 8.0
  %v178 = vmul.f32 %v170, %v177
  %v179 = vmul.f32 %v176, %v177
  %v180 = vsub.f32 %v157, %v178
  %v181 = vsub.f32 %v159, %v179
  %v182 = vmul.f32 %v180, %v180
  %v183 = vmul.f32 %v181, %v181
  %v184 = vrot.slane %v182, 4
  %v185 = vadd.f32 %v182, %v184
  %v186 = vrot.slane %v185, 2
  %v187 = vadd.f32 %v185, %v186
  %v188 = vrot.slane %v187, 1
  %v189 = vadd.f32 %v187, %v188
  %v190 = vrot.slane %v183, 4
  %v191 = vadd.f32 %v183, %v190
  %v192 = vrot.slane %v191, 2
  %v193 = vadd.f32 %v191, %v192
  %v194 = vrot.slane %v193, 1
  %v195 = vadd.f32 %v193, %v194
  %v196 = vmul.f32 %v189, %v177
  %v197 = vmul.f32 %v195, %v177
  %v198 = vadd.f32 %v196, 1e-05
  %v199 = vadd.f32 %v197, 1e-05
  %v200 = vrsqrt.pop %v198
  %v201 = vrsqrt.pop %v199
  %v202 = vmul.f32 %v180, %v200
  %v203 = vmul.f32 %v181, %v201
  %v204 = vld [vmem:[%s2] sm:$0x3]
  %v206 = vlaneseq
  %v207 = vshrl.u32 %v206, 7
  %v208 = vsub.s32 0, %v207
  %v209 = vrot.slane %v204, %v208
  %v210 = vlaneseq
  %v211 = vshrl.u32 %v210, 7
  %v212 = vsub.s32 1, %v211
  %v213 = vrot.slane %v204, %v212
  %v216 = vmul.f32 %v202, %v209
  %v217 = vmul.f32 %v203, %v213
  %v218 = vld [vmem:[%s3] sm:$0x3]
  %v220 = vlaneseq
  %v221 = vshrl.u32 %v220, 7
  %v222 = vsub.s32 0, %v221
  %v223 = vrot.slane %v218, %v222
  %v224 = vlaneseq
  %v225 = vshrl.u32 %v224, 7
  %v226 = vsub.s32 1, %v225
  %v227 = vrot.slane %v218, %v226
  %v230 = vadd.f32 %v216, %v223
  %v231 = vadd.f32 %v217, %v227
  %v232 = vmax.f32 %v230, 0.0
  %v233 = vmax.f32 %v231, 0.0
  %v234 = vpack.c.bf16 %v232, %v232
  %v235 = vpack.c.bf16 %v233, %v233
  %v238 = vunpack.c.l.b16 %v234
  %v239 = vunpack.c.l.b16 %v235
  %v240 = vpack.c.b16 %v239, %v238
  %242 = vst [vmem:[%s4] sm:$0xff] %v240
  %v243 = vrot.slane %v161, 4
  %v244 = vadd.f32 %v161, %v243
  %v245 = vrot.slane %v244, 2
  %v246 = vadd.f32 %v244, %v245
  %v247 = vrot.slane %v246, 1
  %v248 = vadd.f32 %v246, %v247
  %v249 = vrot.slane %v163, 4
  %v250 = vadd.f32 %v163, %v249
  %v251 = vrot.slane %v250, 2
  %v252 = vadd.f32 %v250, %v251
  %v253 = vrot.slane %v252, 1
  %v254 = vadd.f32 %v252, %v253
  %v255 = vmul.f32 %v248, %v177
  %v256 = vmul.f32 %v254, %v177
  %v257 = vsub.f32 %v161, %v255
  %v258 = vsub.f32 %v163, %v256
  %v259 = vmul.f32 %v257, %v257
  %v260 = vmul.f32 %v258, %v258
  %v261 = vrot.slane %v259, 4
  %v262 = vadd.f32 %v259, %v261
  %v263 = vrot.slane %v262, 2
  %v264 = vadd.f32 %v262, %v263
  %v265 = vrot.slane %v264, 1
  %v266 = vadd.f32 %v264, %v265
  %v267 = vrot.slane %v260, 4
  %v268 = vadd.f32 %v260, %v267
  %v269 = vrot.slane %v268, 2
  %v270 = vadd.f32 %v268, %v269
  %v271 = vrot.slane %v270, 1
  %v272 = vadd.f32 %v270, %v271
  %v273 = vmul.f32 %v266, %v177
  %v274 = vmul.f32 %v272, %v177
  %v275 = vadd.f32 %v273, 1e-05
  %v276 = vadd.f32 %v274, 1e-05
  %v277 = vrsqrt.pop %v275
  %v278 = vrsqrt.pop %v276
  %v279 = vmul.f32 %v257, %v277
  %v280 = vmul.f32 %v258, %v278
  %v281 = vld [vmem:[%s2] sm:$0x3]
  %v283 = vlaneseq
  %v284 = vshrl.u32 %v283, 7
  %v285 = vsub.s32 0, %v284
  %v286 = vrot.slane %v281, %v285
  %v287 = vlaneseq
  %v288 = vshrl.u32 %v287, 7
  %v289 = vsub.s32 1, %v288
  %v290 = vrot.slane %v281, %v289
  %v293 = vmul.f32 %v279, %v286
  %v294 = vmul.f32 %v280, %v290
  %v295 = vld [vmem:[%s3] sm:$0x3]
  %v297 = vlaneseq
  %v298 = vshrl.u32 %v297, 7
  %v299 = vsub.s32 0, %v298
  %v300 = vrot.slane %v295, %v299
  %v301 = vlaneseq
  %v302 = vshrl.u32 %v301, 7
  %v303 = vsub.s32 1, %v302
  %v304 = vrot.slane %v295, %v303
  %v307 = vadd.f32 %v293, %v300
  %v308 = vadd.f32 %v294, %v304
  %v309 = vmax.f32 %v307, 0.0
  %v310 = vmax.f32 %v308, 0.0
  %v311 = vpack.c.bf16 %v309, %v309
  %v312 = vpack.c.bf16 %v310, %v310
  %v315 = vunpack.c.l.b16 %v311
  %v316 = vunpack.c.l.b16 %v312
  %v317 = vpack.c.b16 %v316, %v315
  %319 = vst [vmem:[%s4 + $0x8] sm:$0xff] %v317
  // Predicated region
  $region18: #{moco_moe_forward.10} parent=0 // pred_check
    _
  $region19: #{moco_moe_forward.10} parent=0 // pred_check_branch
    %321 = sbr.rel (0) target = $region21
  $region20: #{moco_moe_forward.10} parent=0 // pred_region
    _
  $region21: #{moco_moe_forward.10} parent=0 // pred_fallthru
    _
  // Predicated region
  $region22: #{moco_moe_forward.10} parent=0 // pred_check
    _
  $region23: #{moco_moe_forward.10} parent=0 // pred_check_branch
    %323 = sbr.rel (0) target = $region25
  $region24: #{moco_moe_forward.10} parent=0 // pred_region
    _
  $region25: #{moco_moe_forward.10} parent=0 // pred_fallthru
    _

// kernel: moco_moe_forward.15
$region0: #{moco_moe_forward.15}
  #allocation0 [shape = 'u32[]', space=smem, size = 0x4, offset = 0x4, fixed_abs, tag = 'smem constant byte address 0x4 - core index']
  #allocation1 [shape = 'u32[144,128]{1,0:T(1,128)}', space=vmem, size = 0x12000, scoped, tag = 'internal scratch']
  #allocation2 [shape = 'bf16[8,128]{1,0:T(8,128)(2,1)}', space=vmem, size = 0x800, scoped, tag = 'scratch operand']
  %s0 = inlined_call_operand.vmem [shape: bf16[2,8,128], index: 0, kind: input, shape index: {}]
  %s1 = inlined_call_operand.vmem [shape: bf16[2,8,128], index: 1, kind: input, shape index: {}]
  %s2 = inlined_call_operand.vmem [shape: f32[2,1,1], index: 2, kind: output, shape index: {}]
  %s3 = sld [smem:[#allocation0]]
  $region45: #{moco_moe_forward.15} parent=0
    _
  %s5 = ssub.s32 1, %s3
  %s6 = scalar_select 0, %s5, %s3
  loop: start=0, step=1, limit=4
  $region2: #{moco_moe_forward.15} parent=0 // loop_pre_header
    _
  $region3: #{moco_moe_forward.15} parent=0 // loop_header
    %s8 = sphi 0, %s12
    %p9 = scmp.ge.s32.totalorder %s8, 4
    %s15 = sphi 0, %s27
    %s16 = sphi 0, %s23
    %s17 = sphi 0, %s15
    %s18 = sphi 0, %s16
    %s19 = sphi 0, %s17
    %s20 = sphi 0, %s18
    %s32 = sphi 0, %s34
    %s35 = sphi 0, %s32
    %s36 = sphi 0, %s35
    %s52 = sphi 0, %s36
    %s60 = sphi 0, %s62
    %s63 = sphi 0, %s60
    %s64 = sphi 0, %s63
    %s80 = sphi 0, %s64
    %s86 = sphi 0, %s88
    %s89 = sphi 0, %s86
    %s90 = sphi 0, %s89
    %s106 = sphi 0, %s90
  $region4: #{moco_moe_forward.15} parent=0 // loop_header_branch
    %11 = sbr.rel (%p9) target = $region8
  $region5: #{moco_moe_forward.15} parent=0 // loop_body
    %s13 = ssub.s32 %s8, 1
    %s14 = ssub.s32 %s8, 2
    %s21 = sadd.s32 1, %s16
    %p22 = scmp.ge.s32.totalorder %s21, 1
    %s23 = scalar_select %p22, 0, %s21
    %s24 = sadd.s32 1, %s15
    %s25 = scalar_select %p22, %s24, %s15
    %p26 = scmp.ge.s32.totalorder %s25, 2
    %s27 = scalar_select %p26, 0, %s25
    %s28 = ssub.s32 %s15, %s27
    %s29 = ssub.s32 %s16, %s23
    %s30 = sor.u32 %s28, %s29
    %p31 = scmp.eq.s32.totalorder %s30, 0
    %s33 = sadd.s32 %s32, 1
    %s34 = scalar_select %p31, %s32, %s33
    %p37 = pneg %p31
    %p38 = scmp.eq.s32.totalorder %s8, 1
    %p39 = por %p37, %p38
    %p40 = scmp.ne.s32.totalorder %s32, %s35
    %p41 = scmp.eq.s32.totalorder %s8, 0
    %p42 = por %p40, %p41
    %p43 = scmp.ne.s32.totalorder %s32, %s35
    %p44 = scmp.eq.s32.totalorder %s13, 1
    %p45 = por %p43, %p44
    %p46 = scmp.ne.s32.totalorder %s35, %s36
    %p47 = scmp.eq.s32.totalorder %s13, 0
    %p48 = por %p46, %p47
    %p49 = scmp.ne.s32.totalorder %s35, %s36
    %p50 = scmp.eq.s32.totalorder %s14, 1
    %p51 = por %p49, %p50
    %p53 = scmp.ne.s32.totalorder %s36, %s52
    %p54 = scmp.eq.s32.totalorder %s14, 0
    %p55 = por %p53, %p54
    %s56 = ssub.s32 1, %s15
    %s57 = ssub.s32 1, %s27
    %s58 = ssub.s32 %s56, %s57
    %p59 = scmp.eq.s32.totalorder %s58, 0
    %s61 = sadd.s32 %s60, 1
    %s62 = scalar_select %p59, %s60, %s61
    %p65 = pneg %p59
    %p66 = scmp.eq.s32.totalorder %s8, 1
    %p67 = por %p65, %p66
    %p68 = scmp.ne.s32.totalorder %s60, %s63
    %p69 = scmp.eq.s32.totalorder %s8, 0
    %p70 = por %p68, %p69
    %p71 = scmp.ne.s32.totalorder %s60, %s63
    %p72 = scmp.eq.s32.totalorder %s13, 1
    %p73 = por %p71, %p72
    %p74 = scmp.ne.s32.totalorder %s63, %s64
    %p75 = scmp.eq.s32.totalorder %s13, 0
    %p76 = por %p74, %p75
    %p77 = scmp.ne.s32.totalorder %s63, %s64
    %p78 = scmp.eq.s32.totalorder %s14, 1
    %p79 = por %p77, %p78
    %p81 = scmp.ne.s32.totalorder %s64, %s80
    %p82 = scmp.eq.s32.totalorder %s14, 0
    %p83 = por %p81, %p82
    %s84 = ssub.s32 %s15, %s27
    %p85 = scmp.eq.s32.totalorder %s84, 0
    %s87 = sadd.s32 %s86, 1
    %s88 = scalar_select %p85, %s86, %s87
    %p91 = pneg %p85
    %p92 = scmp.eq.s32.totalorder %s8, 1
    %p93 = por %p91, %p92
    %p94 = scmp.ne.s32.totalorder %s86, %s89
    %p95 = scmp.eq.s32.totalorder %s8, 0
    %p96 = por %p94, %p95
    %p97 = scmp.ne.s32.totalorder %s86, %s89
    %p98 = scmp.eq.s32.totalorder %s13, 1
    %p99 = por %p97, %p98
    %p100 = scmp.ne.s32.totalorder %s89, %s90
    %p101 = scmp.eq.s32.totalorder %s13, 0
    %p102 = por %p100, %p101
    %p103 = scmp.ne.s32.totalorder %s89, %s90
    %p104 = scmp.eq.s32.totalorder %s14, 1
    %p105 = por %p103, %p104
    %p107 = scmp.ne.s32.totalorder %s90, %s106
    %p108 = scmp.eq.s32.totalorder %s14, 0
    %p109 = por %p107, %p108
    %p110 = scmp.le.s32.totalorder 1, %s8
    %p111 = scmp.lt.s32.totalorder %s8, 3
    %p112 = pnand %p110, %p111
    %p113 = pneg %p112
    // Predicated region
    $region9: #{moco_moe_forward.15} parent=5 // pred_check
      _
    $region10: #{moco_moe_forward.15} parent=5 // pred_check_branch
      %115 = sbr.rel (%p112) target = $region12
    $region11: #{moco_moe_forward.15} parent=5 // pred_region
      %s116 = ssub.s32 %s8, 1
    $region12: #{moco_moe_forward.15} parent=5 // pred_fallthru
      _
    %p117 = scmp.lt.s32.totalorder %s8, 2
    // Predicated region
    $region13: #{moco_moe_forward.15} parent=5 // pred_check
      %p118 = pneg %p117
    $region14: #{moco_moe_forward.15} parent=5 // pred_check_branch
      %120 = sbr.rel (%p118) target = $region16
    $region15: #{moco_moe_forward.15} parent=5 // pred_region
      // Predicated region
      $region17: #{moco_moe_forward.15} parent=15 // pred_check
        %p121 = pneg %p42
      $region18: #{moco_moe_forward.15} parent=15 // pred_check_branch
        %123 = sbr.rel (%p121) target = $region20
      $region19: #{moco_moe_forward.15} parent=15 // pred_region
        %p124 = scmp.lt.s32.totalorder %s15, 1
        %s125 = scalar_select %p124, %s15, 1
        %p126 = scmp.lt.s32.totalorder %s16, 0
        %s127 = scalar_select %p126, %s16, 0
        %s128 = sadd.s32 %s127, %s125
        %s129 = smul.addr %s128, 4
        %s130 = scalar_lea.vmem %s0, %s129
      $region20: #{moco_moe_forward.15} parent=15 // pred_fallthru
        _
      // Predicated region
      $region21: #{moco_moe_forward.15} parent=15 // pred_check
        %p131 = pneg %p70
      $region22: #{moco_moe_forward.15} parent=15 // pred_check_branch
        %133 = sbr.rel (%p131) target = $region24
      $region23: #{moco_moe_forward.15} parent=15 // pred_region
        %s134 = ssub.s32 1, %s15
        %p135 = scmp.lt.s32.totalorder %s134, 1
        %s136 = scalar_select %p135, %s134, 1
        %s137 = smul.addr %s136, 4
        %s138 = scalar_lea.vmem %s1, %s137
        %s139 = ssub.s32 1, %s15
      $region24: #{moco_moe_forward.15} parent=15 // pred_fallthru
        _
    $region16: #{moco_moe_forward.15} parent=5 // pred_fallthru
      _
    %p140 = scmp.le.s32.totalorder 1, %s8
    %p141 = scmp.lt.s32.totalorder %s8, 3
    %p142 = pnand %p140, %p141
    %p143 = pneg %p142
    // Predicated region
    $region25: #{moco_moe_forward.15} parent=5 // pred_check
      _
    $region26: #{moco_moe_forward.15} parent=5 // pred_check_branch
      %145 = sbr.rel (%p142) target = $region28
    $region27: #{moco_moe_forward.15} parent=5 // pred_region
      %s146 = ssub.s32 %s8, 1
      %p147 = scmp.lt.s32.totalorder %s17, 1
      %s148 = scalar_select %p147, %s17, 1
      %p149 = scmp.lt.s32.totalorder %s18, 0
      %s150 = scalar_select %p149, %s18, 0
      %s151 = sadd.s32 %s150, %s148
      %s152 = smul.addr %s151, 4
      %s153 = scalar_lea.vmem %s0, %s152
      %p154 = pneg %p48
      %p155 = pneg %p45
      %s156 = ssub.s32 1, %s17
      %p157 = scmp.lt.s32.totalorder %s156, 1
      %s158 = scalar_select %p157, %s156, 1
      %s159 = smul.addr %s158, 4
      %s160 = scalar_lea.vmem %s1, %s159
      %p161 = pneg %p76
      %p162 = pneg %p73
      %p163 = pneg %p102
      %p164 = pneg %p99
      %p165 = scmp.lt.s32.totalorder %s17, 1
      %s166 = scalar_select %p165, %s17, 1
      %s167 = scalar_lea.vmem %s2, %s166
      %p168 = scmp.lt.s32.totalorder %s17, 1
      %s169 = scalar_select %p168, %s17, 1
      %p170 = scmp.lt.s32.totalorder %s18, 0
      %s171 = scalar_select %p170, %s18, 0
      %s172 = sadd.s32 %s171, %s169
      %s173 = smul.addr %s172, 4
      %s174 = scalar_lea.vmem %s0, %s173
      %s175 = ssub.s32 1, %s17
      %p176 = scmp.lt.s32.totalorder %s175, 1
      %s177 = scalar_select %p176, %s175, 1
      %s178 = smul.addr %s177, 4
      %s179 = scalar_lea.vmem %s1, %s178
      %s180 = ssub.s32 1, %s17
      %p181 = scmp.lt.s32.totalorder %s17, 1
      %s182 = scalar_select %p181, %s17, 1
      %s183 = scalar_lea.vmem %s2, %s182
      %p185 = scmp.eq.s32.totalorder %s18, 0
      // Predicated region
      $region29: #{moco_moe_forward.15} parent=27 // pred_check
        %p186 = pneg %p185
      $region30: #{moco_moe_forward.15} parent=27 // pred_check_branch
        %188 = sbr.rel (%p186) target = $region32
      $region31: #{moco_moe_forward.15} parent=27 // pred_region
        %vm189 = vcmask 0
        %190 = vst.msk [vmem:[%s183] sm:$0x1] %vm189, 0.0
        %v191 = vld [vmem:[%s179] sm:$0xf]
        %v192 = vunpack.c.l.bf16 %v191
        %v193 = vmul.f32 %v192, %v192
        %194 = vadd.xlane.f32.xlu0 %v193
        %v195 = vpop.xlane.xlu0 %194
        %v196 = vmax.f32 %v195, 1e-24
        %v197 = vrsqrt.pop %v196
        %v198 = vmul.f32 %v192, %v197
        %v199 = vpack.c.bf16 %v198, %v198
        %200 = vst [vmem:[#allocation2] sm:$0xf] %v199
      $region32: #{moco_moe_forward.15} parent=27 // pred_fallthru
        _
      %v201 = vld [vmem:[%s174] sm:$0xf]
      %v202 = vunpack.c.l.bf16 %v201
      %v203 = vmul.f32 %v202, %v202
      %204 = vadd.xlane.f32.xlu0 %v203
      %v205 = vpop.xlane.xlu0 %204
      %v206 = vmax.f32 %v205, 1e-24
      %v207 = vrsqrt.pop %v206
      %v208 = vmul.f32 %v202, %v207
      %v209 = vpack.c.bf16 %v208, %v208
      %v210 = vld [vmem:[#allocation2] sm:$0xf]
      %211 = vmatprep.subr.bf16.mxu0 0
      %212 = vmatpush1.bf16.xpose.msra.mxu0 %v210
      %213 = vmatprep.subr.bf16.mxu0 0
      %214 = vmatpush1.bf16.xpose.msra.mxu0 0
      %215 = vmatprep.subr.bf16.mxu0 0
      %216 = vmatpush1.bf16.xpose.msra.mxu0 0
      %217 = vmatprep.subr.bf16.mxu0 0
      %218 = vmatpush1.bf16.xpose.msra.mxu0 0
      %219 = vmatprep.subr.bf16.mxu0 0
      %220 = vmatpush1.bf16.xpose.msra.mxu0 0
      %221 = vmatprep.subr.bf16.mxu0 0
      %222 = vmatpush1.bf16.xpose.msra.mxu0 0
      %223 = vmatprep.subr.bf16.mxu0 0
      %224 = vmatpush1.bf16.xpose.msra.mxu0 0
      %225 = vmatprep.subr.bf16.mxu0 0
      %226 = vmatpush1.bf16.xpose.msra.mxu0 0
      %227 = vmatprep.subr.bf16.mxu0 0
      %228 = vmatpush1.bf16.xpose.msra.mxu0 0
      %229 = vmatprep.subr.bf16.mxu0 0
      %230 = vmatpush1.bf16.xpose.msra.mxu0 0
      %231 = vmatprep.subr.bf16.mxu0 0
      %232 = vmatpush1.bf16.xpose.msra.mxu0 0
      %233 = vmatprep.subr.bf16.mxu0 0
      %234 = vmatpush1.bf16.xpose.msra.mxu0 0
      %235 = vmatprep.subr.bf16.mxu0 0
      %236 = vmatpush1.bf16.xpose.msra.mxu0 0
      %237 = vmatprep.subr.bf16.mxu0 0
      %238 = vmatpush1.bf16.xpose.msra.mxu0 0
      %239 = vmatprep.subr.bf16.mxu0 0
      %240 = vmatpush1.bf16.xpose.msra.mxu0 0
      %241 = vmatprep.subr.bf16.mxu0 0
      %242 = vmatpush1.bf16.xpose.msra.mxu0 0
      %243 = vmatprep.mubr.bf16.mxu0 0
      %244 = vmatmul.mubr.bf16.gmra.mrb[0].mxu0 %v209
      %v245 = vpop.f32.mrb[0].mxu0
      %v246 = vadd.f32 0.0, %v245
      %v247 = vpop.f32.mrb[0].mxu0
      %v248 = vpop.f32.mrb[0].mxu0
      %v249 = vpop.f32.mrb[0].mxu0
      %250 = vdwg.mxu0
      %vm251 = vcmask 64512
      %v252 = vsel %vm251, %v246, -inf
      %253 = vmax.xlane.f32.xlu0 %v252
      %v254 = vpop.xlane.xlu0 %253
      %v255 = vsub.f32 %v246, %v254
      %v256 = vmul.f32 %v255, 1.442695
      %v257 = vpow.pop %v256
      %v258 = vsel %vm251, %v257, 0.0
      %259 = vadd.xlane.f32.xlu0 %v258
      %v260 = vpop.xlane.xlu0 %259
      %v261 = vlog2.pop %v260
      %v262 = vmul.f32 %v261, 0.6931472
      %v263 = vadd.f32 %v262, %v254
      %s264 = smul.u32 %s18, 8
      %v265 = vlaneseq
      %v266 = vshrl.u32 %v265, 7
      %v267 = vstv %s264
      %v268 = vadd.s32 %v266, %v267
      %v269 = vlaneseq
      %v270 = vand.u32 %v269, 127
      %vm271 = vcmp.eq.s32.totalorder %v268, %v270
      %v272 = vsel %vm271, %v246, 0.0
      %v273 = vsel %vm251, %v272, 0.0
      %274 = vadd.xlane.f32.xlu0 %v273
      %v275 = vpop.xlane.xlu0 %274
      %v276 = vld [vmem:[%s183] sm:$0x1]
      %v277 = vsub.f32 %v263, %v275
      %vm278 = vcmask 7168
      %v279 = vsel %vm278, %v277, 0.0
      %280 = vadd.xlane.f32.xlu0 %v279
      %v281 = vpop.xlane.xlu0 %280
      %v282 = vrot.slane %v281, 4
      %v283 = vadd.f32 %v281, %v282
      %v284 = vrot.slane %v283, 2
      %v285 = vadd.f32 %v283, %v284
      %v286 = vrot.slane %v285, 1
      %v287 = vadd.f32 %v285, %v286
      %s288 = vtos %v287
      %s289 = smul.f32 %s288, 0.25
      %v290 = vstv %s289
      %v291 = vadd.f32 %v276, %v290
      %vm292 = vcmask 0
      %293 = vst.msk [vmem:[%s183] sm:$0x1] %vm292, %v291
      %p294 = scmp.lt.s32.totalorder %s17, 1
      %s295 = scalar_select %p294, %s17, 1
      %s296 = scalar_lea.vmem %s2, %s295
      // Predicated region
      $region33: #{moco_moe_forward.15} parent=27 // pred_check
        %p297 = pneg %p99
      $region34: #{moco_moe_forward.15} parent=27 // pred_check_branch
        %299 = sbr.rel (%p297) target = $region36
      $region35: #{moco_moe_forward.15} parent=27 // pred_region
        _
      $region36: #{moco_moe_forward.15} parent=27 // pred_fallthru
        _
    $region28: #{moco_moe_forward.15} parent=5 // pred_fallthru
      _
    %p300 = scmp.le.s32.totalorder 2, %s8
    // Predicated region
    $region37: #{moco_moe_forward.15} parent=5 // pred_check
      %p301 = pneg %p300
    $region38: #{moco_moe_forward.15} parent=5 // pred_check_branch
      %303 = sbr.rel (%p301) target = $region40
    $region39: #{moco_moe_forward.15} parent=5 // pred_region
      %s304 = ssub.s32 %s8, 2
      // Predicated region
      $region41: #{moco_moe_forward.15} parent=39 // pred_check
        %p305 = pneg %p105
      $region42: #{moco_moe_forward.15} parent=39 // pred_check_branch
        %307 = sbr.rel (%p305) target = $region44
      $region43: #{moco_moe_forward.15} parent=39 // pred_region
        %p308 = scmp.lt.s32.totalorder %s19, 1
        %s309 = scalar_select %p308, %s19, 1
        %s310 = scalar_lea.vmem %s2, %s309
      $region44: #{moco_moe_forward.15} parent=39 // pred_fallthru
        _
    $region40: #{moco_moe_forward.15} parent=5 // pred_fallthru
      _
  $region6: #{moco_moe_forward.15} parent=0 // loop_footer
    %s12 = sadd.s32 1, %s8
  $region7: #{moco_moe_forward.15} parent=0 // loop_footer_branch
    %7 = sbr.rel target = $region3
  $region8: #{moco_moe_forward.15} parent=0 // loop_exit
    _

// kernel: moco_moe_forward.12
$region0: #{moco_moe_forward.12}
  #allocation0 [shape = 'u32[]', space=smem, size = 0x4, offset = 0x4, fixed_abs, tag = 'smem constant byte address 0x4 - core index']
  #allocation1 [shape = 'u32[144,128]{1,0:T(1,128)}', space=vmem, size = 0x12000, scoped, tag = 'internal scratch']
  #allocation2 [shape = 'f32[1]{0:T(128)S(6)}', space=smem, size = 0x200, scoped, tag = 'scoped memory for moco_moe_forward.12']
  %s0 = inlined_call_operand.<no memory space> [shape: f32[1], index: 0, kind: input, shape index: {}]
  %s1 = inlined_call_operand.vmem [shape: f32[1,256], index: 1, kind: input, shape index: {}]
  %s2 = inlined_call_operand.vmem [shape: f32[1,256], index: 2, kind: input, shape index: {}]
  %s3 = inlined_call_operand.vmem [shape: f32[1024,256], index: 3, kind: input, shape index: {}]
  %s4 = inlined_call_operand.vmem [shape: f32[256,128], index: 4, kind: input, shape index: {}]
  %s5 = inlined_call_operand.vmem [shape: f32[1,256], index: 5, kind: input, shape index: {}, may-alias: {5,9}]
  %s6 = inlined_call_operand.vmem [shape: f32[1,256], index: 6, kind: input, shape index: {}, may-alias: {6,10}]
  %s7 = inlined_call_operand.vmem [shape: f32[1024,256], index: 7, kind: input, shape index: {}, may-alias: {7,11}]
  %s8 = inlined_call_operand.vmem [shape: f32[256,128], index: 8, kind: input, shape index: {}, may-alias: {8,12}]
  %s9 = inlined_call_operand.vmem [shape: f32[1,256], index: 9, kind: output, shape index: {0}, may-alias: {5,9}]
  %s10 = inlined_call_operand.vmem [shape: f32[1,256], index: 10, kind: output, shape index: {1}, may-alias: {6,10}]
  %s11 = inlined_call_operand.vmem [shape: f32[1024,256], index: 11, kind: output, shape index: {2}, may-alias: {7,11}]
  %s12 = inlined_call_operand.vmem [shape: f32[256,128], index: 12, kind: output, shape index: {3}, may-alias: {8,12}]
  %s13 = inlined_call_operand.hbm [shape: bf16[1,256], index: 13, kind: output, shape index: {4}]
  %s14 = inlined_call_operand.hbm [shape: bf16[1,256], index: 14, kind: output, shape index: {5}]
  %s15 = inlined_call_operand.vmem [shape: bf16[1024,256], index: 15, kind: output, shape index: {6}]
  %s16 = inlined_call_operand.vmem [shape: bf16[256,128], index: 16, kind: output, shape index: {7}]
  %17 = xla_tuple %s9, %s10, %s11, %s12, %s13, %s14, %s15, %s16
  %s18 = sld [smem:[#allocation0]]
  $region102: #{moco_moe_forward.12} parent=0
    _
  %s20 = ssub.s32 1, %s18
  %s21 = scalar_select 0, %s20, %s18
  %22 = sst [smem:[#allocation2]] %s0
  $region1: #{moco_moe_forward.12} parent=0
    #allocation3 [shape = 'u8[1024]{0}', space=vmem, size = 0x400, scoped, tag = 'output window, operand 4, single buffered']
    #allocation4 [shape = 's32[1]{0}', space=sflag, size = 0x4, scoped, tag = 'scoped memory for moco_moe_forward.12']
    #allocation5 [shape = 'u8[1024]{0}', space=vmem, size = 0x400, scoped, tag = 'output window, operand 5, single buffered']
    #allocation6 [shape = 's32[1]{0}', space=sflag, size = 0x4, scoped, tag = 'scoped memory for moco_moe_forward.12']
    %23 = vsyncpa [#allocation4], 0
    %24 = vsyncpa [#allocation6], 0
    // Predicated region
    $region2: #{moco_moe_forward.12} parent=1 // pred_check
      _
    $region3: #{moco_moe_forward.12} parent=1 // pred_check_branch
      %26 = sbr.rel (0) target = $region5
    $region4: #{moco_moe_forward.12} parent=1 // pred_region
      _
    $region5: #{moco_moe_forward.12} parent=1 // pred_fallthru
      _
    // Predicated region
    $region6: #{moco_moe_forward.12} parent=1 // pred_check
      _
    $region7: #{moco_moe_forward.12} parent=1 // pred_check_branch
      %28 = sbr.rel (0) target = $region9
    $region8: #{moco_moe_forward.12} parent=1 // pred_region
      _
    $region9: #{moco_moe_forward.12} parent=1 // pred_fallthru
      _
    // Predicated region
    $region10: #{moco_moe_forward.12} parent=1 // pred_check
      _
    $region11: #{moco_moe_forward.12} parent=1 // pred_check_branch
      %30 = sbr.rel (0) target = $region13
    $region12: #{moco_moe_forward.12} parent=1 // pred_region
      _
    $region13: #{moco_moe_forward.12} parent=1 // pred_fallthru
      _
    // Predicated region
    $region14: #{moco_moe_forward.12} parent=1 // pred_check
      _
    $region15: #{moco_moe_forward.12} parent=1 // pred_check_branch
      %32 = sbr.rel (0) target = $region17
    $region16: #{moco_moe_forward.12} parent=1 // pred_region
      _
    $region17: #{moco_moe_forward.12} parent=1 // pred_fallthru
      _
    // Predicated region
    $region18: #{moco_moe_forward.12} parent=1 // pred_check
      _
    $region19: #{moco_moe_forward.12} parent=1 // pred_check_branch
      %34 = sbr.rel (0) target = $region21
    $region20: #{moco_moe_forward.12} parent=1 // pred_region
      _
    $region21: #{moco_moe_forward.12} parent=1 // pred_fallthru
      _
    // Predicated region
    $region22: #{moco_moe_forward.12} parent=1 // pred_check
      _
    $region23: #{moco_moe_forward.12} parent=1 // pred_check_branch
      %36 = sbr.rel (0) target = $region25
    $region24: #{moco_moe_forward.12} parent=1 // pred_region
      _
    $region25: #{moco_moe_forward.12} parent=1 // pred_fallthru
      _
    // Predicated region
    $region26: #{moco_moe_forward.12} parent=1 // pred_check
      _
    $region27: #{moco_moe_forward.12} parent=1 // pred_check_branch
      %38 = sbr.rel (0) target = $region29
    $region28: #{moco_moe_forward.12} parent=1 // pred_region
      _
    $region29: #{moco_moe_forward.12} parent=1 // pred_fallthru
      _
    // Predicated region
    $region30: #{moco_moe_forward.12} parent=1 // pred_check
      _
    $region31: #{moco_moe_forward.12} parent=1 // pred_check_branch
      %40 = sbr.rel (0) target = $region33
    $region32: #{moco_moe_forward.12} parent=1 // pred_region
      _
    $region33: #{moco_moe_forward.12} parent=1 // pred_fallthru
      _
    // Predicated region
    $region34: #{moco_moe_forward.12} parent=1 // pred_check
      _
    $region35: #{moco_moe_forward.12} parent=1 // pred_check_branch
      %42 = sbr.rel (0) target = $region37
    $region36: #{moco_moe_forward.12} parent=1 // pred_region
      _
    $region37: #{moco_moe_forward.12} parent=1 // pred_fallthru
      _
    %s43 = sld [smem:[#allocation2]]
    %v44 = vld [vmem:[%s5] sm:$0x3]
    %v45 = vstv %s43
    %v46 = vmul.f32 %v45, %v44
    %s47 = ssub.f32 1.0, %s43
    %v48 = vld [vmem:[%s1] sm:$0x3]
    %v49 = vstv %s47
    %v50 = vmul.f32 %v49, %v48
    %v51 = vadd.f32 %v46, %v50
    %v52 = vlaneseq
    %vm53 = vcmp.ge.s32.totalorder %v52, 0
    %vm54 = vcmp.lt.s32.totalorder %v52, 256
    %vm55 = vmand %vm53, %vm54
    %56 = vst.msk [vmem:[%s9] sm:$0x3] %vm55, %v51
    %v58 = vlaneseq
    %v59 = vshrl.u32 %v58, 7
    %v60 = vsub.s32 0, %v59
    %v61 = vrot.slane %v51, %v60
    %v62 = vlaneseq
    %v63 = vshrl.u32 %v62, 7
    %v64 = vsub.s32 1, %v63
    %v65 = vrot.slane %v51, %v64
    %v68 = vpack.c.bf16 %v61, %v61
    %v69 = vpack.c.bf16 %v65, %v65
    %v72 = vcombine.low %v68, %v69
    %v74 = vunpack.c.l.s4 1966171168
    %v75 = vunpack.c.0.s8 %v74
    %v76 = vlaneseq
    %v77 = vshrl.u32 %v76, 7
    %v78 = vsub.s32 %v75, %v77
    %v79 = vrot.slane %v72, %v78
    %v81 = vunpack.c.l.s4 1966171168
    %v82 = vunpack.c.0.s8 %v81
    %v83 = vlaneseq
    %v84 = vshrl.u32 %v83, 7
    %v85 = vsub.s32 %v82, %v84
    %v86 = vrot.slane %v79, %v85
    %vm88 = vcmask 1040384
    %vm89 = vsmask.f32 256
    %vm90 = vmand %vm88, %vm89
    %vm91 = vcmask 1041409
    %vm92 = vsmask.f32 1280
    %vm93 = vmand %vm91, %vm92
    %vm94 = vmor %vm93, %vm90
    %v95 = vld [vmem:[#allocation3] sm:$0x3]
    %v96 = vsel %vm94, %v86, %v95
    %97 = vst [vmem:[#allocation3] sm:$0x3] %v96
    %v98 = vld [vmem:[%s6] sm:$0x3]
    %v99 = vmul.f32 %v45, %v98
    %v100 = vld [vmem:[%s2] sm:$0x3]
    %v101 = vmul.f32 %v49, %v100
    %v102 = vadd.f32 %v99, %v101
    %103 = vst.msk [vmem:[%s10] sm:$0x3] %vm55, %v102
    %v105 = vlaneseq
    %v106 = vshrl.u32 %v105, 7
    %v107 = vsub.s32 0, %v106
    %v108 = vrot.slane %v102, %v107
    %v109 = vlaneseq
    %v110 = vshrl.u32 %v109, 7
    %v111 = vsub.s32 1, %v110
    %v112 = vrot.slane %v102, %v111
    %v115 = vpack.c.bf16 %v108, %v108
    %v116 = vpack.c.bf16 %v112, %v112
    %v119 = vcombine.low %v115, %v116
    %v121 = vunpack.c.l.s4 1966171168
    %v122 = vunpack.c.0.s8 %v121
    %v123 = vlaneseq
    %v124 = vshrl.u32 %v123, 7
    %v125 = vsub.s32 %v122, %v124
    %v126 = vrot.slane %v119, %v125
    %v128 = vunpack.c.l.s4 1966171168
    %v129 = vunpack.c.0.s8 %v128
    %v130 = vlaneseq
    %v131 = vshrl.u32 %v130, 7
    %v132 = vsub.s32 %v129, %v131
    %v133 = vrot.slane %v126, %v132
    %v135 = vld [vmem:[#allocation5] sm:$0x3]
    %v136 = vsel %vm94, %v133, %v135
    %137 = vst [vmem:[#allocation5] sm:$0x3] %v136
    %v138 = vld [vmem:[%s7] sm:$0xff]
    %v139 = vld [vmem:[%s7 + $0x8] sm:$0xff]
    %v140 = vld [vmem:[%s7 + $0x10] sm:$0xff]
    %v141 = vld [vmem:[%s7 + $0x18] sm:$0xff]
    %v142 = vld [vmem:[%s7 + $0x20] sm:$0xff]
    %v143 = vld [vmem:[%s7 + $0x28] sm:$0xff]
    %v144 = vld [vmem:[%s7 + $0x30] sm:$0xff]
    %v145 = vld [vmem:[%s7 + $0x38] sm:$0xff]
    %v146 = vld [vmem:[%s7 + $0x40] sm:$0xff]
    %v147 = vld [vmem:[%s7 + $0x48] sm:$0xff]
    %v148 = vld [vmem:[%s7 + $0x50] sm:$0xff]
    %v149 = vld [vmem:[%s7 + $0x58] sm:$0xff]
    %v150 = vld [vmem:[%s7 + $0x60] sm:$0xff]
    %v151 = vld [vmem:[%s7 + $0x68] sm:$0xff]
    %v152 = vld [vmem:[%s7 + $0x70] sm:$0xff]
    %v153 = vld [vmem:[%s7 + $0x78] sm:$0xff]
    %v154 = vld [vmem:[%s7 + $0x80] sm:$0xff]
    %v155 = vld [vmem:[%s7 + $0x88] sm:$0xff]
    %v156 = vld [vmem:[%s7 + $0x90] sm:$0xff]
    %v157 = vld [vmem:[%s7 + $0x98] sm:$0xff]
    %v158 = vld [vmem:[%s7 + $0xa0] sm:$0xff]
    %v159 = vld [vmem:[%s7 + $0xa8] sm:$0xff]
    %v160 = vld [vmem:[%s7 + $0xb0] sm:$0xff]
    %v161 = vld [vmem:[%s7 + $0xb8] sm:$0xff]
    %v162 = vld [vmem:[%s7 + $0xc0] sm:$0xff]
    %v163 = vld [vmem:[%s7 + $0xc8] sm:$0xff]
    %v164 = vld [vmem:[%s7 + $0xd0] sm:$0xff]
    %v165 = vld [vmem:[%s7 + $0xd8] sm:$0xff]
    %v166 = vld [vmem:[%s7 + $0xe0] sm:$0xff]
    %v167 = vld [vmem:[%s7 + $0xe8] sm:$0xff]
    %v168 = vld [vmem:[%s7 + $0xf0] sm:$0xff]
    %v169 = vld [vmem:[%s7 + $0xf8] sm:$0xff]
    %v170 = vld [vmem:[%s7 + $0x100] sm:$0xff]
    %v171 = vld [vmem:[%s7 + $0x108] sm:$0xff]
    %v172 = vld [vmem:[%s7 + $0x110] sm:$0xff]
    %v173 = vld [vmem:[%s7 + $0x118] sm:$0xff]
    %v174 = vld [vmem:[%s7 + $0x120] sm:$0xff]
    %v175 = vld [vmem:[%s7 + $0x128] sm:$0xff]
    %v176 = vld [vmem:[%s7 + $0x130] sm:$0xff]
    %v177 = vld [vmem:[%s7 + $0x138] sm:$0xff]
    %v178 = vld [vmem:[%s7 + $0x140] sm:$0xff]
    %v179 = vld [vmem:[%s7 + $0x148] sm:$0xff]
    %v180 = vld [vmem:[%s7 + $0x150] sm:$0xff]
    %v181 = vld [vmem:[%s7 + $0x158] sm:$0xff]
    %v182 = vld [vmem:[%s7 + $0x160] sm:$0xff]
    %v183 = vld [vmem:[%s7 + $0x168] sm:$0xff]
    %v184 = vld [vmem:[%s7 + $0x170] sm:$0xff]
    %v185 = vld [vmem:[%s7 + $0x178] sm:$0xff]
    %v186 = vld [vmem:[%s7 + $0x180] sm:$0xff]
    %v187 = vld [vmem:[%s7 + $0x188] sm:$0xff]
    %v188 = vld [vmem:[%s7 + $0x190] sm:$0xff]
    %v189 = vld [vmem:[%s7 + $0x198] sm:$0xff]
    %v190 = vld [vmem:[%s7 + $0x1a0] sm:$0xff]
    %v191 = vld [vmem:[%s7 + $0x1a8] sm:$0xff]
    %v192 = vld [vmem:[%s7 + $0x1b0] sm:$0xff]
    %v193 = vld [vmem:[%s7 + $0x1b8] sm:$0xff]
    %v194 = vld [vmem:[%s7 + $0x1c0] sm:$0xff]
    %v195 = vld [vmem:[%s7 + $0x1c8] sm:$0xff]
    %v196 = vld [vmem:[%s7 + $0x1d0] sm:$0xff]
    %v197 = vld [vmem:[%s7 + $0x1d8] sm:$0xff]
    %v198 = vld [vmem:[%s7 + $0x1e0] sm:$0xff]
    %v199 = vld [vmem:[%s7 + $0x1e8] sm:$0xff]
    %v200 = vld [vmem:[%s7 + $0x1f0] sm:$0xff]
    %v201 = vld [vmem:[%s7 + $0x1f8] sm:$0xff]
    %v202 = vld [vmem:[%s7 + $0x200] sm:$0xff]
    %v203 = vld [vmem:[%s7 + $0x208] sm:$0xff]
    %v204 = vld [vmem:[%s7 + $0x210] sm:$0xff]
    %v205 = vld [vmem:[%s7 + $0x218] sm:$0xff]
    %v206 = vld [vmem:[%s7 + $0x220] sm:$0xff]
    %v207 = vld [vmem:[%s7 + $0x228] sm:$0xff]
    %v208 = vld [vmem:[%s7 + $0x230] sm:$0xff]
    %v209 = vld [vmem:[%s7 + $0x238] sm:$0xff]
    %v210 = vld [vmem:[%s7 + $0x240] sm:$0xff]
    %v211 = vld [vmem:[%s7 + $0x248] sm:$0xff]
    %v212 = vld [vmem:[%s7 + $0x250] sm:$0xff]
    %v213 = vld [vmem:[%s7 + $0x258] sm:$0xff]
    %v214 = vld [vmem:[%s7 + $0x260] sm:$0xff]
    %v215 = vld [vmem:[%s7 + $0x268] sm:$0xff]
    %v216 = vld [vmem:[%s7 + $0x270] sm:$0xff]
    %v217 = vld [vmem:[%s7 + $0x278] sm:$0xff]
    %v218 = vld [vmem:[%s7 + $0x280] sm:$0xff]
    %v219 = vld [vmem:[%s7 + $0x288] sm:$0xff]
    %v220 = vld [vmem:[%s7 + $0x290] sm:$0xff]
    %v221 = vld [vmem:[%s7 + $0x298] sm:$0xff]
    %v222 = vld [vmem:[%s7 + $0x2a0] sm:$0xff]
    %v223 = vld [vmem:[%s7 + $0x2a8] sm:$0xff]
    %v224 = vld [vmem:[%s7 + $0x2b0] sm:$0xff]
    %v225 = vld [vmem:[%s7 + $0x2b8] sm:$0xff]
    %v226 = vld [vmem:[%s7 + $0x2c0] sm:$0xff]
    %v227 = vld [vmem:[%s7 + $0x2c8] sm:$0xff]
    %v228 = vld [vmem:[%s7 + $0x2d0] sm:$0xff]
    %v229 = vld [vmem:[%s7 + $0x2d8] sm:$0xff]
    %v230 = vld [vmem:[%s7 + $0x2e0] sm:$0xff]
    %v231 = vld [vmem:[%s7 + $0x2e8] sm:$0xff]
    %v232 = vld [vmem:[%s7 + $0x2f0] sm:$0xff]
    %v233 = vld [vmem:[%s7 + $0x2f8] sm:$0xff]
    %v234 = vld [vmem:[%s7 + $0x300] sm:$0xff]
    %v235 = vld [vmem:[%s7 + $0x308] sm:$0xff]
    %v236 = vld [vmem:[%s7 + $0x310] sm:$0xff]
    %v237 = vld [vmem:[%s7 + $0x318] sm:$0xff]
    %v238 = vld [vmem:[%s7 + $0x320] sm:$0xff]
    %v239 = vld [vmem:[%s7 + $0x328] sm:$0xff]
    %v240 = vld [vmem:[%s7 + $0x330] sm:$0xff]
    %v241 = vld [vmem:[%s7 + $0x338] sm:$0xff]
    %v242 = vld [vmem:[%s7 + $0x340] sm:$0xff]
    %v243 = vld [vmem:[%s7 + $0x348] sm:$0xff]
    %v244 = vld [vmem:[%s7 + $0x350] sm:$0xff]
    %v245 = vld [vmem:[%s7 + $0x358] sm:$0xff]
    %v246 = vld [vmem:[%s7 + $0x360] sm:$0xff]
    %v247 = vld [vmem:[%s7 + $0x368] sm:$0xff]
    %v248 = vld [vmem:[%s7 + $0x370] sm:$0xff]
    %v249 = vld [vmem:[%s7 + $0x378] sm:$0xff]
    %v250 = vld [vmem:[%s7 + $0x380] sm:$0xff]
    %v251 = vld [vmem:[%s7 + $0x388] sm:$0xff]
    %v252 = vld [vmem:[%s7 + $0x390] sm:$0xff]
    %v253 = vld [vmem:[%s7 + $0x398] sm:$0xff]
    %v254 = vld [vmem:[%s7 + $0x3a0] sm:$0xff]
    %v255 = vld [vmem:[%s7 + $0x3a8] sm:$0xff]
    %v256 = vld [vmem:[%s7 + $0x3b0] sm:$0xff]
    %v257 = vld [vmem:[%s7 + $0x3b8] sm:$0xff]
    %v258 = vld [vmem:[%s7 + $0x3c0] sm:$0xff]
    %v259 = vld [vmem:[%s7 + $0x3c8] sm:$0xff]
    %v260 = vld [vmem:[%s7 + $0x3d0] sm:$0xff]
    %v261 = vld [vmem:[%s7 + $0x3d8] sm:$0xff]
    %v262 = vld [vmem:[%s7 + $0x3e0] sm:$0xff]
    %v263 = vld [vmem:[%s7 + $0x3e8] sm:$0xff]
    %v264 = vld [vmem:[%s7 + $0x3f0] sm:$0xff]
    %v265 = vld [vmem:[%s7 + $0x3f8] sm:$0xff]
    %v266 = vld [vmem:[%s7 + $0x400] sm:$0xff]
    %v267 = vld [vmem:[%s7 + $0x408] sm:$0xff]
    %v268 = vld [vmem:[%s7 + $0x410] sm:$0xff]
    %v269 = vld [vmem:[%s7 + $0x418] sm:$0xff]
    %v270 = vld [vmem:[%s7 + $0x420] sm:$0xff]
    %v271 = vld [vmem:[%s7 + $0x428] sm:$0xff]
    %v272 = vld [vmem:[%s7 + $0x430] sm:$0xff]
    %v273 = vld [vmem:[%s7 + $0x438] sm:$0xff]
    %v274 = vld [vmem:[%s7 + $0x440] sm:$0xff]
    %v275 = vld [vmem:[%s7 + $0x448] sm:$0xff]
    %v276 = vld [vmem:[%s7 + $0x450] sm:$0xff]
    %v277 = vld [vmem:[%s7 + $0x458] sm:$0xff]
    %v278 = vld [vmem:[%s7 + $0x460] sm:$0xff]
    %v279 = vld [vmem:[%s7 + $0x468] sm:$0xff]
    %v280 = vld [vmem:[%s7 + $0x470] sm:$0xff]
    %v281 = vld [vmem:[%s7 + $0x478] sm:$0xff]
    %v282 = vld [vmem:[%s7 + $0x480] sm:$0xff]
    %v283 = vld [vmem:[%s7 + $0x488] sm:$0xff]
    %v284 = vld [vmem:[%s7 + $0x490] sm:$0xff]
    %v285 = vld [vmem:[%s7 + $0x498] sm:$0xff]
    %v286 = vld [vmem:[%s7 + $0x4a0] sm:$0xff]
    %v287 = vld [vmem:[%s7 + $0x4a8] sm:$0xff]
    %v288 = vld [vmem:[%s7 + $0x4b0] sm:$0xff]
    %v289 = vld [vmem:[%s7 + $0x4b8] sm:$0xff]
    %v290 = vld [vmem:[%s7 + $0x4c0] sm:$0xff]
    %v291 = vld [vmem:[%s7 + $0x4c8] sm:$0xff]
    %v292 = vld [vmem:[%s7 + $0x4d0] sm:$0xff]
    %v293 = vld [vmem:[%s7 + $0x4d8] sm:$0xff]
    %v294 = vld [vmem:[%s7 + $0x4e0] sm:$0xff]
    %v295 = vld [vmem:[%s7 + $0x4e8] sm:$0xff]
    %v296 = vld [vmem:[%s7 + $0x4f0] sm:$0xff]
    %v297 = vld [vmem:[%s7 + $0x4f8] sm:$0xff]
    %v298 = vld [vmem:[%s7 + $0x500] sm:$0xff]
    %v299 = vld [vmem:[%s7 + $0x508] sm:$0xff]
    %v300 = vld [vmem:[%s7 + $0x510] sm:$0xff]
    %v301 = vld [vmem:[%s7 + $0x518] sm:$0xff]
    %v302 = vld [vmem:[%s7 + $0x520] sm:$0xff]
    %v303 = vld [vmem:[%s7 + $0x528] sm:$0xff]
    %v304 = vld [vmem:[%s7 + $0x530] sm:$0xff]
    %v305 = vld [vmem:[%s7 + $0x538] sm:$0xff]
    %v306 = vld [vmem:[%s7 + $0x540] sm:$0xff]
    %v307 = vld [vmem:[%s7 + $0x548] sm:$0xff]
    %v308 = vld [vmem:[%s7 + $0x550] sm:$0xff]
    %v309 = vld [vmem:[%s7 + $0x558] sm:$0xff]
    %v310 = vld [vmem:[%s7 + $0x560] sm:$0xff]
    %v311 = vld [vmem:[%s7 + $0x568] sm:$0xff]
    %v312 = vld [vmem:[%s7 + $0x570] sm:$0xff]
    %v313 = vld [vmem:[%s7 + $0x578] sm:$0xff]
    %v314 = vld [vmem:[%s7 + $0x580] sm:$0xff]
    %v315 = vld [vmem:[%s7 + $0x588] sm:$0xff]
    %v316 = vld [vmem:[%s7 + $0x590] sm:$0xff]
    %v317 = vld [vmem:[%s7 + $0x598] sm:$0xff]
    %v318 = vld [vmem:[%s7 + $0x5a0] sm:$0xff]
    %v319 = vld [vmem:[%s7 + $0x5a8] sm:$0xff]
    %v320 = vld [vmem:[%s7 + $0x5b0] sm:$0xff]
    %v321 = vld [vmem:[%s7 + $0x5b8] sm:$0xff]
    %v322 = vld [vmem:[%s7 + $0x5c0] sm:$0xff]
    %v323 = vld [vmem:[%s7 + $0x5c8] sm:$0xff]
    %v324 = vld [vmem:[%s7 + $0x5d0] sm:$0xff]
    %v325 = vld [vmem:[%s7 + $0x5d8] sm:$0xff]
    %v326 = vld [vmem:[%s7 + $0x5e0] sm:$0xff]
    %v327 = vld [vmem:[%s7 + $0x5e8] sm:$0xff]
    %v328 = vld [vmem:[%s7 + $0x5f0] sm:$0xff]
    %v329 = vld [vmem:[%s7 + $0x5f8] sm:$0xff]
    %v330 = vld [vmem:[%s7 + $0x600] sm:$0xff]
    %v331 = vld [vmem:[%s7 + $0x608] sm:$0xff]
    %v332 = vld [vmem:[%s7 + $0x610] sm:$0xff]
    %v333 = vld [vmem:[%s7 + $0x618] sm:$0xff]
    %v334 = vld [vmem:[%s7 + $0x620] sm:$0xff]
    %v335 = vld [vmem:[%s7 + $0x628] sm:$0xff]
    %v336 = vld [vmem:[%s7 + $0x630] sm:$0xff]
    %v337 = vld [vmem:[%s7 + $0x638] sm:$0xff]
    %v338 = vld [vmem:[%s7 + $0x640] sm:$0xff]
    %v339 = vld [vmem:[%s7 + $0x648] sm:$0xff]
    %v340 = vld [vmem:[%s7 + $0x650] sm:$0xff]
    %v341 = vld [vmem:[%s7 + $0x658] sm:$0xff]
    %v342 = vld [vmem:[%s7 + $0x660] sm:$0xff]
    %v343 = vld [vmem:[%s7 + $0x668] sm:$0xff]
    %v344 = vld [vmem:[%s7 + $0x670] sm:$0xff]
    %v345 = vld [vmem:[%s7 + $0x678] sm:$0xff]
    %v346 = vld [vmem:[%s7 + $0x680] sm:$0xff]
    %v347 = vld [vmem:[%s7 + $0x688] sm:$0xff]
    %v348 = vld [vmem:[%s7 + $0x690] sm:$0xff]
    %v349 = vld [vmem:[%s7 + $0x698] sm:$0xff]
    %v350 = vld [vmem:[%s7 + $0x6a0] sm:$0xff]
    %v351 = vld [vmem:[%s7 + $0x6a8] sm:$0xff]
    %v352 = vld [vmem:[%s7 + $0x6b0] sm:$0xff]
    %v353 = vld [vmem:[%s7 + $0x6b8] sm:$0xff]
    %v354 = vld [vmem:[%s7 + $0x6c0] sm:$0xff]
    %v355 = vld [vmem:[%s7 + $0x6c8] sm:$0xff]
    %v356 = vld [vmem:[%s7 + $0x6d0] sm:$0xff]
    %v357 = vld [vmem:[%s7 + $0x6d8] sm:$0xff]
    %v358 = vld [vmem:[%s7 + $0x6e0] sm:$0xff]
    %v359 = vld [vmem:[%s7 + $0x6e8] sm:$0xff]
    %v360 = vld [vmem:[%s7 + $0x6f0] sm:$0xff]
    %v361 = vld [vmem:[%s7 + $0x6f8] sm:$0xff]
    %v362 = vld [vmem:[%s7 + $0x700] sm:$0xff]
    %v363 = vld [vmem:[%s7 + $0x708] sm:$0xff]
    %v364 = vld [vmem:[%s7 + $0x710] sm:$0xff]
    %v365 = vld [vmem:[%s7 + $0x718] sm:$0xff]
    %v366 = vld [vmem:[%s7 + $0x720] sm:$0xff]
    %v367 = vld [vmem:[%s7 + $0x728] sm:$0xff]
    %v368 = vld [vmem:[%s7 + $0x730] sm:$0xff]
    %v369 = vld [vmem:[%s7 + $0x738] sm:$0xff]
    %v370 = vld [vmem:[%s7 + $0x740] sm:$0xff]
    %v371 = vld [vmem:[%s7 + $0x748] sm:$0xff]
    %v372 = vld [vmem:[%s7 + $0x750] sm:$0xff]
    %v373 = vld [vmem:[%s7 + $0x758] sm:$0xff]
    %v374 = vld [vmem:[%s7 + $0x760] sm:$0xff]
    %v375 = vld [vmem:[%s7 + $0x768] sm:$0xff]
    %v376 = vld [vmem:[%s7 + $0x770] sm:$0xff]
    %v377 = vld [vmem:[%s7 + $0x778] sm:$0xff]
    %v378 = vld [vmem:[%s7 + $0x780] sm:$0xff]
    %v379 = vld [vmem:[%s7 + $0x788] sm:$0xff]
    %v380 = vld [vmem:[%s7 + $0x790] sm:$0xff]
    %v381 = vld [vmem:[%s7 + $0x798] sm:$0xff]
    %v382 = vld [vmem:[%s7 + $0x7a0] sm:$0xff]
    %v383 = vld [vmem:[%s7 + $0x7a8] sm:$0xff]
    %v384 = vld [vmem:[%s7 + $0x7b0] sm:$0xff]
    %v385 = vld [vmem:[%s7 + $0x7b8] sm:$0xff]
    %v386 = vld [vmem:[%s7 + $0x7c0] sm:$0xff]
    %v387 = vld [vmem:[%s7 + $0x7c8] sm:$0xff]
    %v388 = vld [vmem:[%s7 + $0x7d0] sm:$0xff]
    %v389 = vld [vmem:[%s7 + $0x7d8] sm:$0xff]
    %v390 = vld [vmem:[%s7 + $0x7e0] sm:$0xff]
    %v391 = vld [vmem:[%s7 + $0x7e8] sm:$0xff]
    %v392 = vld [vmem:[%s7 + $0x7f0] sm:$0xff]
    %v393 = vld [vmem:[%s7 + $0x7f8] sm:$0xff]
    %v394 = vmul.f32 %v45, %v138
    %v395 = vmul.f32 %v45, %v139
    %v396 = vmul.f32 %v45, %v140
    %v397 = vmul.f32 %v45, %v141
    %v398 = vmul.f32 %v45, %v142
    %v399 = vmul.f32 %v45, %v143
    %v400 = vmul.f32 %v45, %v144
    %v401 = vmul.f32 %v45, %v145
    %v402 = vmul.f32 %v45, %v146
    %v403 = vmul.f32 %v45, %v147
    %v404 = vmul.f32 %v45, %v148
    %v405 = vmul.f32 %v45, %v149
    %v406 = vmul.f32 %v45, %v150
    %v407 = vmul.f32 %v45, %v151
    %v408 = vmul.f32 %v45, %v152
    %v409 = vmul.f32 %v45, %v153
    %v410 = vmul.f32 %v45, %v154
    %v411 = vmul.f32 %v45, %v155
    %v412 = vmul.f32 %v45, %v156
    %v413 = vmul.f32 %v45, %v157
    %v414 = vmul.f32 %v45, %v158
    %v415 = vmul.f32 %v45, %v159
    %v416 = vmul.f32 %v45, %v160
    %v417 = vmul.f32 %v45, %v161
    %v418 = vmul.f32 %v45, %v162
    %v419 = vmul.f32 %v45, %v163
    %v420 = vmul.f32 %v45, %v164
    %v421 = vmul.f32 %v45, %v165
    %v422 = vmul.f32 %v45, %v166
    %v423 = vmul.f32 %v45, %v167
    %v424 = vmul.f32 %v45, %v168
    %v425 = vmul.f32 %v45, %v169
    %v426 = vmul.f32 %v45, %v170
    %v427 = vmul.f32 %v45, %v171
    %v428 = vmul.f32 %v45, %v172
    %v429 = vmul.f32 %v45, %v173
    %v430 = vmul.f32 %v45, %v174
    %v431 = vmul.f32 %v45, %v175
    %v432 = vmul.f32 %v45, %v176
    %v433 = vmul.f32 %v45, %v177
    %v434 = vmul.f32 %v45, %v178
    %v435 = vmul.f32 %v45, %v179
    %v436 = vmul.f32 %v45, %v180
    %v437 = vmul.f32 %v45, %v181
    %v438 = vmul.f32 %v45, %v182
    %v439 = vmul.f32 %v45, %v183
    %v440 = vmul.f32 %v45, %v184
    %v441 = vmul.f32 %v45, %v185
    %v442 = vmul.f32 %v45, %v186
    %v443 = vmul.f32 %v45, %v187
    %v444 = vmul.f32 %v45, %v188
    %v445 = vmul.f32 %v45, %v189
    %v446 = vmul.f32 %v45, %v190
    %v447 = vmul.f32 %v45, %v191
    %v448 = vmul.f32 %v45, %v192
    %v449 = vmul.f32 %v45, %v193
    %v450 = vmul.f32 %v45, %v194
    %v451 = vmul.f32 %v45, %v195
    %v452 = vmul.f32 %v45, %v196
    %v453 = vmul.f32 %v45, %v197
    %v454 = vmul.f32 %v45, %v198
    %v455 = vmul.f32 %v45, %v199
    %v456 = vmul.f32 %v45, %v200
    %v457 = vmul.f32 %v45, %v201
    %v458 = vmul.f32 %v45, %v202
    %v459 = vmul.f32 %v45, %v203
    %v460 = vmul.f32 %v45, %v204
    %v461 = vmul.f32 %v45, %v205
    %v462 = vmul.f32 %v45, %v206
    %v463 = vmul.f32 %v45, %v207
    %v464 = vmul.f32 %v45, %v208
    %v465 = vmul.f32 %v45, %v209
    %v466 = vmul.f32 %v45, %v210
    %v467 = vmul.f32 %v45, %v211
    %v468 = vmul.f32 %v45, %v212
    %v469 = vmul.f32 %v45, %v213
    %v470 = vmul.f32 %v45, %v214
    %v471 = vmul.f32 %v45, %v215
    %v472 = vmul.f32 %v45, %v216
    %v473 = vmul.f32 %v45, %v217
    %v474 = vmul.f32 %v45, %v218
    %v475 = vmul.f32 %v45, %v219
    %v476 = vmul.f32 %v45, %v220
    %v477 = vmul.f32 %v45, %v221
    %v478 = vmul.f32 %v45, %v222
    %v479 = vmul.f32 %v45, %v223
    %v480 = vmul.f32 %v45, %v224
    %v481 = vmul.f32 %v45, %v225
    %v482 = vmul.f32 %v45, %v226
    %v483 = vmul.f32 %v45, %v227
    %v484 = vmul.f32 %v45, %v228
    %v485 = vmul.f32 %v45, %v229
    %v486 = vmul.f32 %v45, %v230
    %v487 = vmul.f32 %v45, %v231
    %v488 = vmul.f32 %v45, %v232
    %v489 = vmul.f32 %v45, %v233
    %v490 = vmul.f32 %v45, %v234
    %v491 = vmul.f32 %v45, %v235
    %v492 = vmul.f32 %v45, %v236
    %v493 = vmul.f32 %v45, %v237
    %v494 = vmul.f32 %v45, %v238
    %v495 = vmul.f32 %v45, %v239
    %v496 = vmul.f32 %v45, %v240
    %v497 = vmul.f32 %v45, %v241
    %v498 = vmul.f32 %v45, %v242
    %v499 = vmul.f32 %v45, %v243
    %v500 = vmul.f32 %v45, %v244
    %v501 = vmul.f32 %v45, %v245
    %v502 = vmul.f32 %v45, %v246
    %v503 = vmul.f32 %v45, %v247
    %v504 = vmul.f32 %v45, %v248
    %v505 = vmul.f32 %v45, %v249
    %v506 = vmul.f32 %v45, %v250
    %v507 = vmul.f32 %v45, %v251
    %v508 = vmul.f32 %v45, %v252
    %v509 = vmul.f32 %v45, %v253
    %v510 = vmul.f32 %v45, %v254
    %v511 = vmul.f32 %v45, %v255
    %v512 = vmul.f32 %v45, %v256
    %v513 = vmul.f32 %v45, %v257
    %v514 = vmul.f32 %v45, %v258
    %v515 = vmul.f32 %v45, %v259
    %v516 = vmul.f32 %v45, %v260
    %v517 = vmul.f32 %v45, %v261
    %v518 = vmul.f32 %v45, %v262
    %v519 = vmul.f32 %v45, %v263
    %v520 = vmul.f32 %v45, %v264
    %v521 = vmul.f32 %v45, %v265
    %v522 = vmul.f32 %v45, %v266
    %v523 = vmul.f32 %v45, %v267
    %v524 = vmul.f32 %v45, %v268
    %v525 = vmul.f32 %v45, %v269
    %v526 = vmul.f32 %v45, %v270
    %v527 = vmul.f32 %v45, %v271
    %v528 = vmul.f32 %v45, %v272
    %v529 = vmul.f32 %v45, %v273
    %v530 = vmul.f32 %v45, %v274
    %v531 = vmul.f32 %v45, %v275
    %v532 = vmul.f32 %v45, %v276
    %v533 = vmul.f32 %v45, %v277
    %v534 = vmul.f32 %v45, %v278
    %v535 = vmul.f32 %v45, %v279
    %v536 = vmul.f32 %v45, %v280
    %v537 = vmul.f32 %v45, %v281
    %v538 = vmul.f32 %v45, %v282
    %v539 = vmul.f32 %v45, %v283
    %v540 = vmul.f32 %v45, %v284
    %v541 = vmul.f32 %v45, %v285
    %v542 = vmul.f32 %v45, %v286
    %v543 = vmul.f32 %v45, %v287
    %v544 = vmul.f32 %v45, %v288
    %v545 = vmul.f32 %v45, %v289
    %v546 = vmul.f32 %v45, %v290
    %v547 = vmul.f32 %v45, %v291
    %v548 = vmul.f32 %v45, %v292
    %v549 = vmul.f32 %v45, %v293
    %v550 = vmul.f32 %v45, %v294
    %v551 = vmul.f32 %v45, %v295
    %v552 = vmul.f32 %v45, %v296
    %v553 = vmul.f32 %v45, %v297
    %v554 = vmul.f32 %v45, %v298
    %v555 = vmul.f32 %v45, %v299
    %v556 = vmul.f32 %v45, %v300
    %v557 = vmul.f32 %v45, %v301
    %v558 = vmul.f32 %v45, %v302
    %v559 = vmul.f32 %v45, %v303
    %v560 = vmul.f32 %v45, %v304
    %v561 = vmul.f32 %v45, %v305
    %v562 = vmul.f32 %v45, %v306
    %v563 = vmul.f32 %v45, %v307
    %v564 = vmul.f32 %v45, %v308
    %v565 = vmul.f32 %v45, %v309
    %v566 = vmul.f32 %v45, %v310
    %v567 = vmul.f32 %v45, %v311
    %v568 = vmul.f32 %v45, %v312
    %v569 = vmul.f32 %v45, %v313
    %v570 = vmul.f32 %v45, %v314
    %v571 = vmul.f32 %v45, %v315
    %v572 = vmul.f32 %v45, %v316
    %v573 = vmul.f32 %v45, %v317
    %v574 = vmul.f32 %v45, %v318
    %v575 = vmul.f32 %v45, %v319
    %v576 = vmul.f32 %v45, %v320
    %v577 = vmul.f32 %v45, %v321
    %v578 = vmul.f32 %v45, %v322
    %v579 = vmul.f32 %v45, %v323
    %v580 = vmul.f32 %v45, %v324
    %v581 = vmul.f32 %v45, %v325
    %v582 = vmul.f32 %v45, %v326
    %v583 = vmul.f32 %v45, %v327
    %v584 = vmul.f32 %v45, %v328
    %v585 = vmul.f32 %v45, %v329
    %v586 = vmul.f32 %v45, %v330
    %v587 = vmul.f32 %v45, %v331
    %v588 = vmul.f32 %v45, %v332
    %v589 = vmul.f32 %v45, %v333
    %v590 = vmul.f32 %v45, %v334
    %v591 = vmul.f32 %v45, %v335
    %v592 = vmul.f32 %v45, %v336
    %v593 = vmul.f32 %v45, %v337
    %v594 = vmul.f32 %v45, %v338
    %v595 = vmul.f32 %v45, %v339
    %v596 = vmul.f32 %v45, %v340
    %v597 = vmul.f32 %v45, %v341
    %v598 = vmul.f32 %v45, %v342
    %v599 = vmul.f32 %v45, %v343
    %v600 = vmul.f32 %v45, %v344
    %v601 = vmul.f32 %v45, %v345
    %v602 = vmul.f32 %v45, %v346
    %v603 = vmul.f32 %v45, %v347
    %v604 = vmul.f32 %v45, %v348
    %v605 = vmul.f32 %v45, %v349
    %v606 = vmul.f32 %v45, %v350
    %v607 = vmul.f32 %v45, %v351
    %v608 = vmul.f32 %v45, %v352
    %v609 = vmul.f32 %v45, %v353
    %v610 = vmul.f32 %v45, %v354
    %v611 = vmul.f32 %v45, %v355
    %v612 = vmul.f32 %v45, %v356
    %v613 = vmul.f32 %v45, %v357
    %v614 = vmul.f32 %v45, %v358
    %v615 = vmul.f32 %v45, %v359
    %v616 = vmul.f32 %v45, %v360
    %v617 = vmul.f32 %v45, %v361
    %v618 = vmul.f32 %v45, %v362
    %v619 = vmul.f32 %v45, %v363
    %v620 = vmul.f32 %v45, %v364
    %v621 = vmul.f32 %v45, %v365
    %v622 = vmul.f32 %v45, %v366
    %v623 = vmul.f32 %v45, %v367
    %v624 = vmul.f32 %v45, %v368
    %v625 = vmul.f32 %v45, %v369
    %v626 = vmul.f32 %v45, %v370
    %v627 = vmul.f32 %v45, %v371
    %v628 = vmul.f32 %v45, %v372
    %v629 = vmul.f32 %v45, %v373
    %v630 = vmul.f32 %v45, %v374
    %v631 = vmul.f32 %v45, %v375
    %v632 = vmul.f32 %v45, %v376
    %v633 = vmul.f32 %v45, %v377
    %v634 = vmul.f32 %v45, %v378
    %v635 = vmul.f32 %v45, %v379
    %v636 = vmul.f32 %v45, %v380
    %v637 = vmul.f32 %v45, %v381
    %v638 = vmul.f32 %v45, %v382
    %v639 = vmul.f32 %v45, %v383
    %v640 = vmul.f32 %v45, %v384
    %v641 = vmul.f32 %v45, %v385
    %v642 = vmul.f32 %v45, %v386
    %v643 = vmul.f32 %v45, %v387
    %v644 = vmul.f32 %v45, %v388
    %v645 = vmul.f32 %v45, %v389
    %v646 = vmul.f32 %v45, %v390
    %v647 = vmul.f32 %v45, %v391
    %v648 = vmul.f32 %v45, %v392
    %v649 = vmul.f32 %v45, %v393
    %v650 = vld [vmem:[%s3] sm:$0xff]
    %v651 = vld [vmem:[%s3 + $0x8] sm:$0xff]
    %v652 = vld [vmem:[%s3 + $0x10] sm:$0xff]
    %v653 = vld [vmem:[%s3 + $0x18] sm:$0xff]
    %v654 = vld [vmem:[%s3 + $0x20] sm:$0xff]
    %v655 = vld [vmem:[%s3 + $0x28] sm:$0xff]
    %v656 = vld [vmem:[%s3 + $0x30] sm:$0xff]
    %v657 = vld [vmem:[%s3 + $0x38] sm:$0xff]
    %v658 = vld [vmem:[%s3 + $0x40] sm:$0xff]
    %v659 = vld [vmem:[%s3 + $0x48] sm:$0xff]
    %v660 = vld [vmem:[%s3 + $0x50] sm:$0xff]
    %v661 = vld [vmem:[%s3 + $0x58] sm:$0xff]
    %v662 = vld [vmem:[%s3 + $0x60] sm:$0xff]
    %v663 = vld [vmem:[%s3 + $0x68] sm:$0xff]
    %v664 = vld [vmem:[%s3 + $0x70] sm:$0xff]
    %v665 = vld [vmem:[%s3 + $0x78] sm:$0xff]
    %v666 = vld [vmem:[%s3 + $0x80] sm:$0xff]
    %v667 = vld [vmem:[%s3 + $0x88] sm:$0xff]
    %v668 = vld [vmem:[%s3 + $0x90] sm:$0xff]
    %v669 = vld [vmem:[%s3 + $0x98] sm:$0xff]
    %v670 = vld [vmem:[%s3 + $0xa0] sm:$0xff]
    %v671 = vld [vmem:[%s3 + $0xa8] sm:$0xff]
    %v672 = vld [vmem:[%s3 + $0xb0] sm:$0xff]
    %v673 = vld [vmem:[%s3 + $0xb8] sm:$0xff]
    %v674 = vld [vmem:[%s3 + $0xc0] sm:$0xff]
    %v675 = vld [vmem:[%s3 + $0xc8] sm:$0xff]
    %v676 = vld [vmem:[%s3 + $0xd0] sm:$0xff]
    %v677 = vld [vmem:[%s3 + $0xd8] sm:$0xff]
    %v678 = vld [vmem:[%s3 + $0xe0] sm:$0xff]
    %v679 = vld [vmem:[%s3 + $0xe8] sm:$0xff]
    %v680 = vld [vmem:[%s3 + $0xf0] sm:$0xff]
    %v681 = vld [vmem:[%s3 + $0xf8] sm:$0xff]
    %v682 = vld [vmem:[%s3 + $0x100] sm:$0xff]
    %v683 = vld [vmem:[%s3 + $0x108] sm:$0xff]
    %v684 = vld [vmem:[%s3 + $0x110] sm:$0xff]
    %v685 = vld [vmem:[%s3 + $0x118] sm:$0xff]
    %v686 = vld [vmem:[%s3 + $0x120] sm:$0xff]
    %v687 = vld [vmem:[%s3 + $0x128] sm:$0xff]
    %v688 = vld [vmem:[%s3 + $0x130] sm:$0xff]
    %v689 = vld [vmem:[%s3 + $0x138] sm:$0xff]
    %v690 = vld [vmem:[%s3 + $0x140] sm:$0xff]
    %v691 = vld [vmem:[%s3 + $0x148] sm:$0xff]
    %v692 = vld [vmem:[%s3 + $0x150] sm:$0xff]
    %v693 = vld [vmem:[%s3 + $0x158] sm:$0xff]
    %v694 = vld [vmem:[%s3 + $0x160] sm:$0xff]
    %v695 = vld [vmem:[%s3 + $0x168] sm:$0xff]
    %v696 = vld [vmem:[%s3 + $0x170] sm:$0xff]
    %v697 = vld [vmem:[%s3 + $0x178] sm:$0xff]
    %v698 = vld [vmem:[%s3 + $0x180] sm:$0xff]
    %v699 = vld [vmem:[%s3 + $0x188] sm:$0xff]
    %v700 = vld [vmem:[%s3 + $0x190] sm:$0xff]
    %v701 = vld [vmem:[%s3 + $0x198] sm:$0xff]
    %v702 = vld [vmem:[%s3 + $0x1a0] sm:$0xff]
    %v703 = vld [vmem:[%s3 + $0x1a8] sm:$0xff]
    %v704 = vld [vmem:[%s3 + $0x1b0] sm:$0xff]
    %v705 = vld [vmem:[%s3 + $0x1b8] sm:$0xff]
    %v706 = vld [vmem:[%s3 + $0x1c0] sm:$0xff]
    %v707 = vld [vmem:[%s3 + $0x1c8] sm:$0xff]
    %v708 = vld [vmem:[%s3 + $0x1d0] sm:$0xff]
    %v709 = vld [vmem:[%s3 + $0x1d8] sm:$0xff]
    %v710 = vld [vmem:[%s3 + $0x1e0] sm:$0xff]
    %v711 = vld [vmem:[%s3 + $0x1e8] sm:$0xff]
    %v712 = vld [vmem:[%s3 + $0x1f0] sm:$0xff]
    %v713 = vld [vmem:[%s3 + $0x1f8] sm:$0xff]
    %v714 = vld [vmem:[%s3 + $0x200] sm:$0xff]
    %v715 = vld [vmem:[%s3 + $0x208] sm:$0xff]
    %v716 = vld [vmem:[%s3 + $0x210] sm:$0xff]
    %v717 = vld [vmem:[%s3 + $0x218] sm:$0xff]
    %v718 = vld [vmem:[%s3 + $0x220] sm:$0xff]
    %v719 = vld [vmem:[%s3 + $0x228] sm:$0xff]
    %v720 = vld [vmem:[%s3 + $0x230] sm:$0xff]
    %v721 = vld [vmem:[%s3 + $0x238] sm:$0xff]
    %v722 = vld [vmem:[%s3 + $0x240] sm:$0xff]
    %v723 = vld [vmem:[%s3 + $0x248] sm:$0xff]
    %v724 = vld [vmem:[%s3 + $0x250] sm:$0xff]
    %v725 = vld [vmem:[%s3 + $0x258] sm:$0xff]
    %v726 = vld [vmem:[%s3 + $0x260] sm:$0xff]
    %v727 = vld [vmem:[%s3 + $0x268] sm:$0xff]
    %v728 = vld [vmem:[%s3 + $0x270] sm:$0xff]
    %v729 = vld [vmem:[%s3 + $0x278] sm:$0xff]
    %v730 = vld [vmem:[%s3 + $0x280] sm:$0xff]
    %v731 = vld [vmem:[%s3 + $0x288] sm:$0xff]
    %v732 = vld [vmem:[%s3 + $0x290] sm:$0xff]
    %v733 = vld [vmem:[%s3 + $0x298] sm:$0xff]
    %v734 = vld [vmem:[%s3 + $0x2a0] sm:$0xff]
    %v735 = vld [vmem:[%s3 + $0x2a8] sm:$0xff]
    %v736 = vld [vmem:[%s3 + $0x2b0] sm:$0xff]
    %v737 = vld [vmem:[%s3 + $0x2b8] sm:$0xff]
    %v738 = vld [vmem:[%s3 + $0x2c0] sm:$0xff]
    %v739 = vld [vmem:[%s3 + $0x2c8] sm:$0xff]
    %v740 = vld [vmem:[%s3 + $0x2d0] sm:$0xff]
    %v741 = vld [vmem:[%s3 + $0x2d8] sm:$0xff]
    %v742 = vld [vmem:[%s3 + $0x2e0] sm:$0xff]
    %v743 = vld [vmem:[%s3 + $0x2e8] sm:$0xff]
    %v744 = vld [vmem:[%s3 + $0x2f0] sm:$0xff]
    %v745 = vld [vmem:[%s3 + $0x2f8] sm:$0xff]
    %v746 = vld [vmem:[%s3 + $0x300] sm:$0xff]
    %v747 = vld [vmem:[%s3 + $0x308] sm:$0xff]
    %v748 = vld [vmem:[%s3 + $0x310] sm:$0xff]
    %v749 = vld [vmem:[%s3 + $0x318] sm:$0xff]
    %v750 = vld [vmem:[%s3 + $0x320] sm:$0xff]
    %v751 = vld [vmem:[%s3 + $0x328] sm:$0xff]
    %v752 = vld [vmem:[%s3 + $0x330] sm:$0xff]
    %v753 = vld [vmem:[%s3 + $0x338] sm:$0xff]
    %v754 = vld [vmem:[%s3 + $0x340] sm:$0xff]
    %v755 = vld [vmem:[%s3 + $0x348] sm:$0xff]
    %v756 = vld [vmem:[%s3 + $0x350] sm:$0xff]
    %v757 = vld [vmem:[%s3 + $0x358] sm:$0xff]
    %v758 = vld [vmem:[%s3 + $0x360] sm:$0xff]
    %v759 = vld [vmem:[%s3 + $0x368] sm:$0xff]
    %v760 = vld [vmem:[%s3 + $0x370] sm:$0xff]
    %v761 = vld [vmem:[%s3 + $0x378] sm:$0xff]
    %v762 = vld [vmem:[%s3 + $0x380] sm:$0xff]
    %v763 = vld [vmem:[%s3 + $0x388] sm:$0xff]
    %v764 = vld [vmem:[%s3 + $0x390] sm:$0xff]
    %v765 = vld [vmem:[%s3 + $0x398] sm:$0xff]
    %v766 = vld [vmem:[%s3 + $0x3a0] sm:$0xff]
    %v767 = vld [vmem:[%s3 + $0x3a8] sm:$0xff]
    %v768 = vld [vmem:[%s3 + $0x3b0] sm:$0xff]
    %v769 = vld [vmem:[%s3 + $0x3b8] sm:$0xff]
    %v770 = vld [vmem:[%s3 + $0x3c0] sm:$0xff]
    %v771 = vld [vmem:[%s3 + $0x3c8] sm:$0xff]
    %v772 = vld [vmem:[%s3 + $0x3d0] sm:$0xff]
    %v773 = vld [vmem:[%s3 + $0x3d8] sm:$0xff]
    %v774 = vld [vmem:[%s3 + $0x3e0] sm:$0xff]
    %v775 = vld [vmem:[%s3 + $0x3e8] sm:$0xff]
    %v776 = vld [vmem:[%s3 + $0x3f0] sm:$0xff]
    %v777 = vld [vmem:[%s3 + $0x3f8] sm:$0xff]
    %v778 = vld [vmem:[%s3 + $0x400] sm:$0xff]
    %v779 = vld [vmem:[%s3 + $0x408] sm:$0xff]
    %v780 = vld [vmem:[%s3 + $0x410] sm:$0xff]
    %v781 = vld [vmem:[%s3 + $0x418] sm:$0xff]
    %v782 = vld [vmem:[%s3 + $0x420] sm:$0xff]
    %v783 = vld [vmem:[%s3 + $0x428] sm:$0xff]
    %v784 = vld [vmem:[%s3 + $0x430] sm:$0xff]
    %v785 = vld [vmem:[%s3 + $0x438] sm:$0xff]
    %v786 = vld [vmem:[%s3 + $0x440] sm:$0xff]
    %v787 = vld [vmem:[%s3 + $0x448] sm:$0xff]
    %v788 = vld [vmem:[%s3 + $0x450] sm:$0xff]
    %v789 = vld [vmem:[%s3 + $0x458] sm:$0xff]
    %v790 = vld [vmem:[%s3 + $0x460] sm:$0xff]
    %v791 = vld [vmem:[%s3 + $0x468] sm:$0xff]
    %v792 = vld [vmem:[%s3 + $0x470] sm:$0xff]
    %v793 = vld [vmem:[%s3 + $0x478] sm:$0xff]
    %v794 = vld [vmem:[%s3 + $0x480] sm:$0xff]
    %v795 = vld [vmem:[%s3 + $0x488] sm:$0xff]
    %v796 = vld [vmem:[%s3 + $0x490] sm:$0xff]
    %v797 = vld [vmem:[%s3 + $0x498] sm:$0xff]
    %v798 = vld [vmem:[%s3 + $0x4a0] sm:$0xff]
    %v799 = vld [vmem:[%s3 + $0x4a8] sm:$0xff]
    %v800 = vld [vmem:[%s3 + $0x4b0] sm:$0xff]
    %v801 = vld [vmem:[%s3 + $0x4b8] sm:$0xff]
    %v802 = vld [vmem:[%s3 + $0x4c0] sm:$0xff]
    %v803 = vld [vmem:[%s3 + $0x4c8] sm:$0xff]
    %v804 = vld [vmem:[%s3 + $0x4d0] sm:$0xff]
    %v805 = vld [vmem:[%s3 + $0x4d8] sm:$0xff]
    %v806 = vld [vmem:[%s3 + $0x4e0] sm:$0xff]
    %v807 = vld [vmem:[%s3 + $0x4e8] sm:$0xff]
    %v808 = vld [vmem:[%s3 + $0x4f0] sm:$0xff]
    %v809 = vld [vmem:[%s3 + $0x4f8] sm:$0xff]
    %v810 = vld [vmem:[%s3 + $0x500] sm:$0xff]
    %v811 = vld [vmem:[%s3 + $0x508] sm:$0xff]
    %v812 = vld [vmem:[%s3 + $0x510] sm:$0xff]
    %v813 = vld [vmem:[%s3 + $0x518] sm:$0xff]
    %v814 = vld [vmem:[%s3 + $0x520] sm:$0xff]
    %v815 = vld [vmem:[%s3 + $0x528] sm:$0xff]
    %v816 = vld [vmem:[%s3 + $0x530] sm:$0xff]
    %v817 = vld [vmem:[%s3 + $0x538] sm:$0xff]
    %v818 = vld [vmem:[%s3 + $0x540] sm:$0xff]
    %v819 = vld [vmem:[%s3 + $0x548] sm:$0xff]
    %v820 = vld [vmem:[%s3 + $0x550] sm:$0xff]
    %v821 = vld [vmem:[%s3 + $0x558] sm:$0xff]
    %v822 = vld [vmem:[%s3 + $0x560] sm:$0xff]
    %v823 = vld [vmem:[%s3 + $0x568] sm:$0xff]
    %v824 = vld [vmem:[%s3 + $0x570] sm:$0xff]
    %v825 = vld [vmem:[%s3 + $0x578] sm:$0xff]
    %v826 = vld [vmem:[%s3 + $0x580] sm:$0xff]
    %v827 = vld [vmem:[%s3 + $0x588] sm:$0xff]
    %v828 = vld [vmem:[%s3 + $0x590] sm:$0xff]
    %v829 = vld [vmem:[%s3 + $0x598] sm:$0xff]
    %v830 = vld [vmem:[%s3 + $0x5a0] sm:$0xff]
    %v831 = vld [vmem:[%s3 + $0x5a8] sm:$0xff]
    %v832 = vld [vmem:[%s3 + $0x5b0] sm:$0xff]
    %v833 = vld [vmem:[%s3 + $0x5b8] sm:$0xff]
    %v834 = vld [vmem:[%s3 + $0x5c0] sm:$0xff]
    %v835 = vld [vmem:[%s3 + $0x5c8] sm:$0xff]
    %v836 = vld [vmem:[%s3 + $0x5d0] sm:$0xff]
    %v837 = vld [vmem:[%s3 + $0x5d8] sm:$0xff]
    %v838 = vld [vmem:[%s3 + $0x5e0] sm:$0xff]
    %v839 = vld [vmem:[%s3 + $0x5e8] sm:$0xff]
    %v840 = vld [vmem:[%s3 + $0x5f0] sm:$0xff]
    %v841 = vld [vmem:[%s3 + $0x5f8] sm:$0xff]
    %v842 = vld [vmem:[%s3 + $0x600] sm:$0xff]
    %v843 = vld [vmem:[%s3 + $0x608] sm:$0xff]
    %v844 = vld [vmem:[%s3 + $0x610] sm:$0xff]
    %v845 = vld [vmem:[%s3 + $0x618] sm:$0xff]
    %v846 = vld [vmem:[%s3 + $0x620] sm:$0xff]
    %v847 = vld [vmem:[%s3 + $0x628] sm:$0xff]
    %v848 = vld [vmem:[%s3 + $0x630] sm:$0xff]
    %v849 = vld [vmem:[%s3 + $0x638] sm:$0xff]
    %v850 = vld [vmem:[%s3 + $0x640] sm:$0xff]
    %v851 = vld [vmem:[%s3 + $0x648] sm:$0xff]
    %v852 = vld [vmem:[%s3 + $0x650] sm:$0xff]
    %v853 = vld [vmem:[%s3 + $0x658] sm:$0xff]
    %v854 = vld [vmem:[%s3 + $0x660] sm:$0xff]
    %v855 = vld [vmem:[%s3 + $0x668] sm:$0xff]
    %v856 = vld [vmem:[%s3 + $0x670] sm:$0xff]
    %v857 = vld [vmem:[%s3 + $0x678] sm:$0xff]
    %v858 = vld [vmem:[%s3 + $0x680] sm:$0xff]
    %v859 = vld [vmem:[%s3 + $0x688] sm:$0xff]
    %v860 = vld [vmem:[%s3 + $0x690] sm:$0xff]
    %v861 = vld [vmem:[%s3 + $0x698] sm:$0xff]
    %v862 = vld [vmem:[%s3 + $0x6a0] sm:$0xff]
    %v863 = vld [vmem:[%s3 + $0x6a8] sm:$0xff]
    %v864 = vld [vmem:[%s3 + $0x6b0] sm:$0xff]
    %v865 = vld [vmem:[%s3 + $0x6b8] sm:$0xff]
    %v866 = vld [vmem:[%s3 + $0x6c0] sm:$0xff]
    %v867 = vld [vmem:[%s3 + $0x6c8] sm:$0xff]
    %v868 = vld [vmem:[%s3 + $0x6d0] sm:$0xff]
    %v869 = vld [vmem:[%s3 + $0x6d8] sm:$0xff]
    %v870 = vld [vmem:[%s3 + $0x6e0] sm:$0xff]
    %v871 = vld [vmem:[%s3 + $0x6e8] sm:$0xff]
    %v872 = vld [vmem:[%s3 + $0x6f0] sm:$0xff]
    %v873 = vld [vmem:[%s3 + $0x6f8] sm:$0xff]
    %v874 = vld [vmem:[%s3 + $0x700] sm:$0xff]
    %v875 = vld [vmem:[%s3 + $0x708] sm:$0xff]
    %v876 = vld [vmem:[%s3 + $0x710] sm:$0xff]
    %v877 = vld [vmem:[%s3 + $0x718] sm:$0xff]
    %v878 = vld [vmem:[%s3 + $0x720] sm:$0xff]
    %v879 = vld [vmem:[%s3 + $0x728] sm:$0xff]
    %v880 = vld [vmem:[%s3 + $0x730] sm:$0xff]
    %v881 = vld [vmem:[%s3 + $0x738] sm:$0xff]
    %v882 = vld [vmem:[%s3 + $0x740] sm:$0xff]
    %v883 = vld [vmem:[%s3 + $0x748] sm:$0xff]
    %v884 = vld [vmem:[%s3 + $0x750] sm:$0xff]
    %v885 = vld [vmem:[%s3 + $0x758] sm:$0xff]
    %v886 = vld [vmem:[%s3 + $0x760] sm:$0xff]
    %v887 = vld [vmem:[%s3 + $0x768] sm:$0xff]
    %v888 = vld [vmem:[%s3 + $0x770] sm:$0xff]
    %v889 = vld [vmem:[%s3 + $0x778] sm:$0xff]
    %v890 = vld [vmem:[%s3 + $0x780] sm:$0xff]
    %v891 = vld [vmem:[%s3 + $0x788] sm:$0xff]
    %v892 = vld [vmem:[%s3 + $0x790] sm:$0xff]
    %v893 = vld [vmem:[%s3 + $0x798] sm:$0xff]
    %v894 = vld [vmem:[%s3 + $0x7a0] sm:$0xff]
    %v895 = vld [vmem:[%s3 + $0x7a8] sm:$0xff]
    %v896 = vld [vmem:[%s3 + $0x7b0] sm:$0xff]
    %v897 = vld [vmem:[%s3 + $0x7b8] sm:$0xff]
    %v898 = vld [vmem:[%s3 + $0x7c0] sm:$0xff]
    %v899 = vld [vmem:[%s3 + $0x7c8] sm:$0xff]
    %v900 = vld [vmem:[%s3 + $0x7d0] sm:$0xff]
    %v901 = vld [vmem:[%s3 + $0x7d8] sm:$0xff]
    %v902 = vld [vmem:[%s3 + $0x7e0] sm:$0xff]
    %v903 = vld [vmem:[%s3 + $0x7e8] sm:$0xff]
    %v904 = vld [vmem:[%s3 + $0x7f0] sm:$0xff]
    %v905 = vld [vmem:[%s3 + $0x7f8] sm:$0xff]
    %v906 = vmul.f32 %v49, %v650
    %v907 = vmul.f32 %v49, %v651
    %v908 = vmul.f32 %v49, %v652
    %v909 = vmul.f32 %v49, %v653
    %v910 = vmul.f32 %v49, %v654
    %v911 = vmul.f32 %v49, %v655
    %v912 = vmul.f32 %v49, %v656
    %v913 = vmul.f32 %v49, %v657
    %v914 = vmul.f32 %v49, %v658
    %v915 = vmul.f32 %v49, %v659
    %v916 = vmul.f32 %v49, %v660
    %v917 = vmul.f32 %v49, %v661
    %v918 = vmul.f32 %v49, %v662
    %v919 = vmul.f32 %v49, %v663
    %v920 = vmul.f32 %v49, %v664
    %v921 = vmul.f32 %v49, %v665
    %v922 = vmul.f32 %v49, %v666
    %v923 = vmul.f32 %v49, %v667
    %v924 = vmul.f32 %v49, %v668
    %v925 = vmul.f32 %v49, %v669
    %v926 = vmul.f32 %v49, %v670
    %v927 = vmul.f32 %v49, %v671
    %v928 = vmul.f32 %v49, %v672
    %v929 = vmul.f32 %v49, %v673
    %v930 = vmul.f32 %v49, %v674
    %v931 = vmul.f32 %v49, %v675
    %v932 = vmul.f32 %v49, %v676
    %v933 = vmul.f32 %v49, %v677
    %v934 = vmul.f32 %v49, %v678
    %v935 = vmul.f32 %v49, %v679
    %v936 = vmul.f32 %v49, %v680
    %v937 = vmul.f32 %v49, %v681
    %v938 = vmul.f32 %v49, %v682
    %v939 = vmul.f32 %v49, %v683
    %v940 = vmul.f32 %v49, %v684
    %v941 = vmul.f32 %v49, %v685
    %v942 = vmul.f32 %v49, %v686
    %v943 = vmul.f32 %v49, %v687
    %v944 = vmul.f32 %v49, %v688
    %v945 = vmul.f32 %v49, %v689
    %v946 = vmul.f32 %v49, %v690
    %v947 = vmul.f32 %v49, %v691
    %v948 = vmul.f32 %v49, %v692
    %v949 = vmul.f32 %v49, %v693
    %v950 = vmul.f32 %v49, %v694
    %v951 = vmul.f32 %v49, %v695
    %v952 = vmul.f32 %v49, %v696
    %v953 = vmul.f32 %v49, %v697
    %v954 = vmul.f32 %v49, %v698
    %v955 = vmul.f32 %v49, %v699
    %v956 = vmul.f32 %v49, %v700
    %v957 = vmul.f32 %v49, %v701
    %v958 = vmul.f32 %v49, %v702
    %v959 = vmul.f32 %v49, %v703
    %v960 = vmul.f32 %v49, %v704
    %v961 = vmul.f32 %v49, %v705
    %v962 = vmul.f32 %v49, %v706
    %v963 = vmul.f32 %v49, %v707
    %v964 = vmul.f32 %v49, %v708
    %v965 = vmul.f32 %v49, %v709
    %v966 = vmul.f32 %v49, %v710
    %v967 = vmul.f32 %v49, %v711
    %v968 = vmul.f32 %v49, %v712
    %v969 = vmul.f32 %v49, %v713
    %v970 = vmul.f32 %v49, %v714
    %v971 = vmul.f32 %v49, %v715
    %v972 = vmul.f32 %v49, %v716
    %v973 = vmul.f32 %v49, %v717
    %v974 = vmul.f32 %v49, %v718
    %v975 = vmul.f32 %v49, %v719
    %v976 = vmul.f32 %v49, %v720
    %v977 = vmul.f32 %v49, %v721
    %v978 = vmul.f32 %v49, %v722
    %v979 = vmul.f32 %v49, %v723
    %v980 = vmul.f32 %v49, %v724
    %v981 = vmul.f32 %v49, %v725
    %v982 = vmul.f32 %v49, %v726
    %v983 = vmul.f32 %v49, %v727
    %v984 = vmul.f32 %v49, %v728
    %v985 = vmul.f32 %v49, %v729
    %v986 = vmul.f32 %v49, %v730
    %v987 = vmul.f32 %v49, %v731
    %v988 = vmul.f32 %v49, %v732
    %v989 = vmul.f32 %v49, %v733
    %v990 = vmul.f32 %v49, %v734
    %v991 = vmul.f32 %v49, %v735
    %v992 = vmul.f32 %v49, %v736
    %v993 = vmul.f32 %v49, %v737
    %v994 = vmul.f32 %v49, %v738
    %v995 = vmul.f32 %v49, %v739
    %v996 = vmul.f32 %v49, %v740
    %v997 = vmul.f32 %v49, %v741
    %v998 = vmul.f32 %v49, %v742
    %v999 = vmul.f32 %v49, %v743
    %v1000 = vmul.f32 %v49, %v744
    %v1001 = vmul.f32 %v49, %v745
    %v1002 = vmul.f32 %v49, %v746
    %v1003 = vmul.f32 %v49, %v747
    %v1004 = vmul.f32 %v49, %v748
    %v1005 = vmul.f32 %v49, %v749
    %v1006 = vmul.f32 %v49, %v750
    %v1007 = vmul.f32 %v49, %v751
    %v1008 = vmul.f32 %v49, %v752
    %v1009 = vmul.f32 %v49, %v753
    %v1010 = vmul.f32 %v49, %v754
    %v1011 = vmul.f32 %v49, %v755
    %v1012 = vmul.f32 %v49, %v756
    %v1013 = vmul.f32 %v49, %v757
    %v1014 = vmul.f32 %v49, %v758
    %v1015 = vmul.f32 %v49, %v759
    %v1016 = vmul.f32 %v49, %v760
    %v1017 = vmul.f32 %v49, %v761
    %v1018 = vmul.f32 %v49, %v762
    %v1019 = vmul.f32 %v49, %v763
    %v1020 = vmul.f32 %v49, %v764
    %v1021 = vmul.f32 %v49, %v765
    %v1022 = vmul.f32 %v49, %v766
    %v1023 = vmul.f32 %v49, %v767
    %v1024 = vmul.f32 %v49, %v768
    %v1025 = vmul.f32 %v49, %v769
    %v1026 = vmul.f32 %v49, %v770
    %v1027 = vmul.f32 %v49, %v771
    %v1028 = vmul.f32 %v49, %v772
    %v1029 = vmul.f32 %v49, %v773
    %v1030 = vmul.f32 %v49, %v774
    %v1031 = vmul.f32 %v49, %v775
    %v1032 = vmul.f32 %v49, %v776
    %v1033 = vmul.f32 %v49, %v777
    %v1034 = vmul.f32 %v49, %v778
    %v1035 = vmul.f32 %v49, %v779
    %v1036 = vmul.f32 %v49, %v780
    %v1037 = vmul.f32 %v49, %v781
    %v1038 = vmul.f32 %v49, %v782
    %v1039 = vmul.f32 %v49, %v783
    %v1040 = vmul.f32 %v49, %v784
    %v1041 = vmul.f32 %v49, %v785
    %v1042 = vmul.f32 %v49, %v786
    %v1043 = vmul.f32 %v49, %v787
    %v1044 = vmul.f32 %v49, %v788
    %v1045 = vmul.f32 %v49, %v789
    %v1046 = vmul.f32 %v49, %v790
    %v1047 = vmul.f32 %v49, %v791
    %v1048 = vmul.f32 %v49, %v792
    %v1049 = vmul.f32 %v49, %v793
    %v1050 = vmul.f32 %v49, %v794
    %v1051 = vmul.f32 %v49, %v795
    %v1052 = vmul.f32 %v49, %v796
    %v1053 = vmul.f32 %v49, %v797
    %v1054 = vmul.f32 %v49, %v798
    %v1055 = vmul.f32 %v49, %v799
    %v1056 = vmul.f32 %v49, %v800
    %v1057 = vmul.f32 %v49, %v801
    %v1058 = vmul.f32 %v49, %v802
    %v1059 = vmul.f32 %v49, %v803
    %v1060 = vmul.f32 %v49, %v804
    %v1061 = vmul.f32 %v49, %v805
    %v1062 = vmul.f32 %v49, %v806
    %v1063 = vmul.f32 %v49, %v807
    %v1064 = vmul.f32 %v49, %v808
    %v1065 = vmul.f32 %v49, %v809
    %v1066 = vmul.f32 %v49, %v810
    %v1067 = vmul.f32 %v49, %v811
    %v1068 = vmul.f32 %v49, %v812
    %v1069 = vmul.f32 %v49, %v813
    %v1070 = vmul.f32 %v49, %v814
    %v1071 = vmul.f32 %v49, %v815
    %v1072 = vmul.f32 %v49, %v816
    %v1073 = vmul.f32 %v49, %v817
    %v1074 = vmul.f32 %v49, %v818
    %v1075 = vmul.f32 %v49, %v819
    %v1076 = vmul.f32 %v49, %v820
    %v1077 = vmul.f32 %v49, %v821
    %v1078 = vmul.f32 %v49, %v822
    %v1079 = vmul.f32 %v49, %v823
    %v1080 = vmul.f32 %v49, %v824
    %v1081 = vmul.f32 %v49, %v825
    %v1082 = vmul.f32 %v49, %v826
    %v1083 = vmul.f32 %v49, %v827
    %v1084 = vmul.f32 %v49, %v828
    %v1085 = vmul.f32 %v49, %v829
    %v1086 = vmul.f32 %v49, %v830
    %v1087 = vmul.f32 %v49, %v831
    %v1088 = vmul.f32 %v49, %v832
    %v1089 = vmul.f32 %v49, %v833
    %v1090 = vmul.f32 %v49, %v834
    %v1091 = vmul.f32 %v49, %v835
    %v1092 = vmul.f32 %v49, %v836
    %v1093 = vmul.f32 %v49, %v837
    %v1094 = vmul.f32 %v49, %v838
    %v1095 = vmul.f32 %v49, %v839
    %v1096 = vmul.f32 %v49, %v840
    %v1097 = vmul.f32 %v49, %v841
    %v1098 = vmul.f32 %v49, %v842
    %v1099 = vmul.f32 %v49, %v843
    %v1100 = vmul.f32 %v49, %v844
    %v1101 = vmul.f32 %v49, %v845
    %v1102 = vmul.f32 %v49, %v846
    %v1103 = vmul.f32 %v49, %v847
    %v1104 = vmul.f32 %v49, %v848
    %v1105 = vmul.f32 %v49, %v849
    %v1106 = vmul.f32 %v49, %v850
    %v1107 = vmul.f32 %v49, %v851
    %v1108 = vmul.f32 %v49, %v852
    %v1109 = vmul.f32 %v49, %v853
    %v1110 = vmul.f32 %v49, %v854
    %v1111 = vmul.f32 %v49, %v855
    %v1112 = vmul.f32 %v49, %v856
    %v1113 = vmul.f32 %v49, %v857
    %v1114 = vmul.f32 %v49, %v858
    %v1115 = vmul.f32 %v49, %v859
    %v1116 = vmul.f32 %v49, %v860
    %v1117 = vmul.f32 %v49, %v861
    %v1118 = vmul.f32 %v49, %v862
    %v1119 = vmul.f32 %v49, %v863
    %v1120 = vmul.f32 %v49, %v864
    %v1121 = vmul.f32 %v49, %v865
    %v1122 = vmul.f32 %v49, %v866
    %v1123 = vmul.f32 %v49, %v867
    %v1124 = vmul.f32 %v49, %v868
    %v1125 = vmul.f32 %v49, %v869
    %v1126 = vmul.f32 %v49, %v870
    %v1127 = vmul.f32 %v49, %v871
    %v1128 = vmul.f32 %v49, %v872
    %v1129 = vmul.f32 %v49, %v873
    %v1130 = vmul.f32 %v49, %v874
    %v1131 = vmul.f32 %v49, %v875
    %v1132 = vmul.f32 %v49, %v876
    %v1133 = vmul.f32 %v49, %v877
    %v1134 = vmul.f32 %v49, %v878
    %v1135 = vmul.f32 %v49, %v879
    %v1136 = vmul.f32 %v49, %v880
    %v1137 = vmul.f32 %v49, %v881
    %v1138 = vmul.f32 %v49, %v882
    %v1139 = vmul.f32 %v49, %v883
    %v1140 = vmul.f32 %v49, %v884
    %v1141 = vmul.f32 %v49, %v885
    %v1142 = vmul.f32 %v49, %v886
    %v1143 = vmul.f32 %v49, %v887
    %v1144 = vmul.f32 %v49, %v888
    %v1145 = vmul.f32 %v49, %v889
    %v1146 = vmul.f32 %v49, %v890
    %v1147 = vmul.f32 %v49, %v891
    %v1148 = vmul.f32 %v49, %v892
    %v1149 = vmul.f32 %v49, %v893
    %v1150 = vmul.f32 %v49, %v894
    %v1151 = vmul.f32 %v49, %v895
    %v1152 = vmul.f32 %v49, %v896
    %v1153 = vmul.f32 %v49, %v897
    %v1154 = vmul.f32 %v49, %v898
    %v1155 = vmul.f32 %v49, %v899
    %v1156 = vmul.f32 %v49, %v900
    %v1157 = vmul.f32 %v49, %v901
    %v1158 = vmul.f32 %v49, %v902
    %v1159 = vmul.f32 %v49, %v903
    %v1160 = vmul.f32 %v49, %v904
    %v1161 = vmul.f32 %v49, %v905
    %v1162 = vadd.f32 %v394, %v906
    %v1163 = vadd.f32 %v395, %v907
    %v1164 = vadd.f32 %v396, %v908
    %v1165 = vadd.f32 %v397, %v909
    %v1166 = vadd.f32 %v398, %v910
    %v1167 = vadd.f32 %v399, %v911
    %v1168 = vadd.f32 %v400, %v912
    %v1169 = vadd.f32 %v401, %v913
    %v1170 = vadd.f32 %v402, %v914
    %v1171 = vadd.f32 %v403, %v915
    %v1172 = vadd.f32 %v404, %v916
    %v1173 = vadd.f32 %v405, %v917
    %v1174 = vadd.f32 %v406, %v918
    %v1175 = vadd.f32 %v407, %v919
    %v1176 = vadd.f32 %v408, %v920
    %v1177 = vadd.f32 %v409, %v921
    %v1178 = vadd.f32 %v410, %v922
    %v1179 = vadd.f32 %v411, %v923
    %v1180 = vadd.f32 %v412, %v924
    %v1181 = vadd.f32 %v413, %v925
    %v1182 = vadd.f32 %v414, %v926
    %v1183 = vadd.f32 %v415, %v927
    %v1184 = vadd.f32 %v416, %v928
    %v1185 = vadd.f32 %v417, %v929
    %v1186 = vadd.f32 %v418, %v930
    %v1187 = vadd.f32 %v419, %v931
    %v1188 = vadd.f32 %v420, %v932
    %v1189 = vadd.f32 %v421, %v933
    %v1190 = vadd.f32 %v422, %v934
    %v1191 = vadd.f32 %v423, %v935
    %v1192 = vadd.f32 %v424, %v936
    %v1193 = vadd.f32 %v425, %v937
    %v1194 = vadd.f32 %v426, %v938
    %v1195 = vadd.f32 %v427, %v939
    %v1196 = vadd.f32 %v428, %v940
    %v1197 = vadd.f32 %v429, %v941
    %v1198 = vadd.f32 %v430, %v942
    %v1199 = vadd.f32 %v431, %v943
    %v1200 = vadd.f32 %v432, %v944
    %v1201 = vadd.f32 %v433, %v945
    %v1202 = vadd.f32 %v434, %v946
    %v1203 = vadd.f32 %v435, %v947
    %v1204 = vadd.f32 %v436, %v948
    %v1205 = vadd.f32 %v437, %v949
    %v1206 = vadd.f32 %v438, %v950
    %v1207 = vadd.f32 %v439, %v951
    %v1208 = vadd.f32 %v440, %v952
    %v1209 = vadd.f32 %v441, %v953
    %v1210 = vadd.f32 %v442, %v954
    %v1211 = vadd.f32 %v443, %v955
    %v1212 = vadd.f32 %v444, %v956
    %v1213 = vadd.f32 %v445, %v957
    %v1214 = vadd.f32 %v446, %v958
    %v1215 = vadd.f32 %v447, %v959
    %v1216 = vadd.f32 %v448, %v960
    %v1217 = vadd.f32 %v449, %v961
    %v1218 = vadd.f32 %v450, %v962
    %v1219 = vadd.f32 %v451, %v963
    %v1220 = vadd.f32 %v452, %v964
    %v1221 = vadd.f32 %v453, %v965
    %v1222 = vadd.f32 %v454, %v966
    %v1223 = vadd.f32 %v455, %v967
    %v1224 = vadd.f32 %v456, %v968
    %v1225 = vadd.f32 %v457, %v969
    %v1226 = vadd.f32 %v458, %v970
    %v1227 = vadd.f32 %v459, %v971
    %v1228 = vadd.f32 %v460, %v972
    %v1229 = vadd.f32 %v461, %v973
    %v1230 = vadd.f32 %v462, %v974
    %v1231 = vadd.f32 %v463, %v975
    %v1232 = vadd.f32 %v464, %v976
    %v1233 = vadd.f32 %v465, %v977
    %v1234 = vadd.f32 %v466, %v978
    %v1235 = vadd.f32 %v467, %v979
    %v1236 = vadd.f32 %v468, %v980
    %v1237 = vadd.f32 %v469, %v981
    %v1238 = vadd.f32 %v470, %v982
    %v1239 = vadd.f32 %v471, %v983
    %v1240 = vadd.f32 %v472, %v984
    %v1241 = vadd.f32 %v473, %v985
    %v1242 = vadd.f32 %v474, %v986
    %v1243 = vadd.f32 %v475, %v987
    %v1244 = vadd.f32 %v476, %v988
    %v1245 = vadd.f32 %v477, %v989
    %v1246 = vadd.f32 %v478, %v990
    %v1247 = vadd.f32 %v479, %v991
    %v1248 = vadd.f32 %v480, %v992
    %v1249 = vadd.f32 %v481, %v993
    %v1250 = vadd.f32 %v482, %v994
    %v1251 = vadd.f32 %v483, %v995
    %v1252 = vadd.f32 %v484, %v996
    %v1253 = vadd.f32 %v485, %v997
    %v1254 = vadd.f32 %v486, %v998
    %v1255 = vadd.f32 %v487, %v999
    %v1256 = vadd.f32 %v488, %v1000
    %v1257 = vadd.f32 %v489, %v1001
    %v1258 = vadd.f32 %v490, %v1002
    %v1259 = vadd.f32 %v491, %v1003
    %v1260 = vadd.f32 %v492, %v1004
    %v1261 = vadd.f32 %v493, %v1005
    %v1262 = vadd.f32 %v494, %v1006
    %v1263 = vadd.f32 %v495, %v1007
    %v1264 = vadd.f32 %v496, %v1008
    %v1265 = vadd.f32 %v497, %v1009
    %v1266 = vadd.f32 %v498, %v1010
    %v1267 = vadd.f32 %v499, %v1011
    %v1268 = vadd.f32 %v500, %v1012
    %v1269 = vadd.f32 %v501, %v1013
    %v1270 = vadd.f32 %v502, %v1014
    %v1271 = vadd.f32 %v503, %v1015
    %v1272 = vadd.f32 %v504, %v1016
    %v1273 = vadd.f32 %v505, %v1017
    %v1274 = vadd.f32 %v506, %v1018
    %v1275 = vadd.f32 %v507, %v1019
    %v1276 = vadd.f32 %v508, %v1020
    %v1277 = vadd.f32 %v509, %v1021
    %v1278 = vadd.f32 %v510, %v1022
    %v1279 = vadd.f32 %v511, %v1023
    %v1280 = vadd.f32 %v512, %v1024
    %v1281 = vadd.f32 %v513, %v1025
    %v1282 = vadd.f32 %v514, %v1026
    %v1283 = vadd.f32 %v515, %v1027
    %v1284 = vadd.f32 %v516, %v1028
    %v1285 = vadd.f32 %v517, %v1029
    %v1286 = vadd.f32 %v518, %v1030
    %v1287 = vadd.f32 %v519, %v1031
    %v1288 = vadd.f32 %v520, %v1032
    %v1289 = vadd.f32 %v521, %v1033
    %v1290 = vadd.f32 %v522, %v1034
    %v1291 = vadd.f32 %v523, %v1035
    %v1292 = vadd.f32 %v524, %v1036
    %v1293 = vadd.f32 %v525, %v1037
    %v1294 = vadd.f32 %v526, %v1038
    %v1295 = vadd.f32 %v527, %v1039
    %v1296 = vadd.f32 %v528, %v1040
    %v1297 = vadd.f32 %v529, %v1041
    %v1298 = vadd.f32 %v530, %v1042
    %v1299 = vadd.f32 %v531, %v1043
    %v1300 = vadd.f32 %v532, %v1044
    %v1301 = vadd.f32 %v533, %v1045
    %v1302 = vadd.f32 %v534, %v1046
    %v1303 = vadd.f32 %v535, %v1047
    %v1304 = vadd.f32 %v536, %v1048
    %v1305 = vadd.f32 %v537, %v1049
    %v1306 = vadd.f32 %v538, %v1050
    %v1307 = vadd.f32 %v539, %v1051
    %v1308 = vadd.f32 %v540, %v1052
    %v1309 = vadd.f32 %v541, %v1053
    %v1310 = vadd.f32 %v542, %v1054
    %v1311 = vadd.f32 %v543, %v1055
    %v1312 = vadd.f32 %v544, %v1056
    %v1313 = vadd.f32 %v545, %v1057
    %v1314 = vadd.f32 %v546, %v1058
    %v1315 = vadd.f32 %v547, %v1059
    %v1316 = vadd.f32 %v548, %v1060
    %v1317 = vadd.f32 %v549, %v1061
    %v1318 = vadd.f32 %v550, %v1062
    %v1319 = vadd.f32 %v551, %v1063
    %v1320 = vadd.f32 %v552, %v1064
    %v1321 = vadd.f32 %v553, %v1065
    %v1322 = vadd.f32 %v554, %v1066
    %v1323 = vadd.f32 %v555, %v1067
    %v1324 = vadd.f32 %v556, %v1068
    %v1325 = vadd.f32 %v557, %v1069
    %v1326 = vadd.f32 %v558, %v1070
    %v1327 = vadd.f32 %v559, %v1071
    %v1328 = vadd.f32 %v560, %v1072
    %v1329 = vadd.f32 %v561, %v1073
    %v1330 = vadd.f32 %v562, %v1074
    %v1331 = vadd.f32 %v563, %v1075
    %v1332 = vadd.f32 %v564, %v1076
    %v1333 = vadd.f32 %v565, %v1077
    %v1334 = vadd.f32 %v566, %v1078
    %v1335 = vadd.f32 %v567, %v1079
    %v1336 = vadd.f32 %v568, %v1080
    %v1337 = vadd.f32 %v569, %v1081
    %v1338 = vadd.f32 %v570, %v1082
    %v1339 = vadd.f32 %v571, %v1083
    %v1340 = vadd.f32 %v572, %v1084
    %v1341 = vadd.f32 %v573, %v1085
    %v1342 = vadd.f32 %v574, %v1086
    %v1343 = vadd.f32 %v575, %v1087
    %v1344 = vadd.f32 %v576, %v1088
    %v1345 = vadd.f32 %v577, %v1089
    %v1346 = vadd.f32 %v578, %v1090
    %v1347 = vadd.f32 %v579, %v1091
    %v1348 = vadd.f32 %v580, %v1092
    %v1349 = vadd.f32 %v581, %v1093
    %v1350 = vadd.f32 %v582, %v1094
    %v1351 = vadd.f32 %v583, %v1095
    %v1352 = vadd.f32 %v584, %v1096
    %v1353 = vadd.f32 %v585, %v1097
    %v1354 = vadd.f32 %v586, %v1098
    %v1355 = vadd.f32 %v587, %v1099
    %v1356 = vadd.f32 %v588, %v1100
    %v1357 = vadd.f32 %v589, %v1101
    %v1358 = vadd.f32 %v590, %v1102
    %v1359 = vadd.f32 %v591, %v1103
    %v1360 = vadd.f32 %v592, %v1104
    %v1361 = vadd.f32 %v593, %v1105
    %v1362 = vadd.f32 %v594, %v1106
    %v1363 = vadd.f32 %v595, %v1107
    %v1364 = vadd.f32 %v596, %v1108
    %v1365 = vadd.f32 %v597, %v1109
    %v1366 = vadd.f32 %v598, %v1110
    %v1367 = vadd.f32 %v599, %v1111
    %v1368 = vadd.f32 %v600, %v1112
    %v1369 = vadd.f32 %v601, %v1113
    %v1370 = vadd.f32 %v602, %v1114
    %v1371 = vadd.f32 %v603, %v1115
    %v1372 = vadd.f32 %v604, %v1116
    %v1373 = vadd.f32 %v605, %v1117
    %v1374 = vadd.f32 %v606, %v1118
    %v1375 = vadd.f32 %v607, %v1119
    %v1376 = vadd.f32 %v608, %v1120
    %v1377 = vadd.f32 %v609, %v1121
    %v1378 = vadd.f32 %v610, %v1122
    %v1379 = vadd.f32 %v611, %v1123
    %v1380 = vadd.f32 %v612, %v1124
    %v1381 = vadd.f32 %v613, %v1125
    %v1382 = vadd.f32 %v614, %v1126
    %v1383 = vadd.f32 %v615, %v1127
    %v1384 = vadd.f32 %v616, %v1128
    %v1385 = vadd.f32 %v617, %v1129
    %v1386 = vadd.f32 %v618, %v1130
    %v1387 = vadd.f32 %v619, %v1131
    %v1388 = vadd.f32 %v620, %v1132
    %v1389 = vadd.f32 %v621, %v1133
    %v1390 = vadd.f32 %v622, %v1134
    %v1391 = vadd.f32 %v623, %v1135
    %v1392 = vadd.f32 %v624, %v1136
    %v1393 = vadd.f32 %v625, %v1137
    %v1394 = vadd.f32 %v626, %v1138
    %v1395 = vadd.f32 %v627, %v1139
    %v1396 = vadd.f32 %v628, %v1140
    %v1397 = vadd.f32 %v629, %v1141
    %v1398 = vadd.f32 %v630, %v1142
    %v1399 = vadd.f32 %v631, %v1143
    %v1400 = vadd.f32 %v632, %v1144
    %v1401 = vadd.f32 %v633, %v1145
    %v1402 = vadd.f32 %v634, %v1146
    %v1403 = vadd.f32 %v635, %v1147
    %v1404 = vadd.f32 %v636, %v1148
    %v1405 = vadd.f32 %v637, %v1149
    %v1406 = vadd.f32 %v638, %v1150
    %v1407 = vadd.f32 %v639, %v1151
    %v1408 = vadd.f32 %v640, %v1152
    %v1409 = vadd.f32 %v641, %v1153
    %v1410 = vadd.f32 %v642, %v1154
    %v1411 = vadd.f32 %v643, %v1155
    %v1412 = vadd.f32 %v644, %v1156
    %v1413 = vadd.f32 %v645, %v1157
    %v1414 = vadd.f32 %v646, %v1158
    %v1415 = vadd.f32 %v647, %v1159
    %v1416 = vadd.f32 %v648, %v1160
    %v1417 = vadd.f32 %v649, %v1161
    %1418 = vst [vmem:[%s11] sm:$0xff] %v1162
    %1419 = vst [vmem:[%s11 + $0x8] sm:$0xff] %v1163
    %1420 = vst [vmem:[%s11 + $0x10] sm:$0xff] %v1164
    %1421 = vst [vmem:[%s11 + $0x18] sm:$0xff] %v1165
    %1422 = vst [vmem:[%s11 + $0x20] sm:$0xff] %v1166
    %1423 = vst [vmem:[%s11 + $0x28] sm:$0xff] %v1167
    %1424 = vst [vmem:[%s11 + $0x30] sm:$0xff] %v1168
    %1425 = vst [vmem:[%s11 + $0x38] sm:$0xff] %v1169
    %1426 = vst [vmem:[%s11 + $0x40] sm:$0xff] %v1170
    %1427 = vst [vmem:[%s11 + $0x48] sm:$0xff] %v1171
    %1428 = vst [vmem:[%s11 + $0x50] sm:$0xff] %v1172
    %1429 = vst [vmem:[%s11 + $0x58] sm:$0xff] %v1173
    %1430 = vst [vmem:[%s11 + $0x60] sm:$0xff] %v1174
    %1431 = vst [vmem:[%s11 + $0x68] sm:$0xff] %v1175
    %1432 = vst [vmem:[%s11 + $0x70] sm:$0xff] %v1176
    %1433 = vst [vmem:[%s11 + $0x78] sm:$0xff] %v1177
    %1434 = vst [vmem:[%s11 + $0x80] sm:$0xff] %v1178
    %1435 = vst [vmem:[%s11 + $0x88] sm:$0xff] %v1179
    %1436 = vst [vmem:[%s11 + $0x90] sm:$0xff] %v1180
    %1437 = vst [vmem:[%s11 + $0x98] sm:$0xff] %v1181
    %1438 = vst [vmem:[%s11 + $0xa0] sm:$0xff] %v1182
    %1439 = vst [vmem:[%s11 + $0xa8] sm:$0xff] %v1183
    %1440 = vst [vmem:[%s11 + $0xb0] sm:$0xff] %v1184
    %1441 = vst [vmem:[%s11 + $0xb8] sm:$0xff] %v1185
    %1442 = vst [vmem:[%s11 + $0xc0] sm:$0xff] %v1186
    %1443 = vst [vmem:[%s11 + $0xc8] sm:$0xff] %v1187
    %1444 = vst [vmem:[%s11 + $0xd0] sm:$0xff] %v1188
    %1445 = vst [vmem:[%s11 + $0xd8] sm:$0xff] %v1189
    %1446 = vst [vmem:[%s11 + $0xe0] sm:$0xff] %v1190
    %1447 = vst [vmem:[%s11 + $0xe8] sm:$0xff] %v1191
    %1448 = vst [vmem:[%s11 + $0xf0] sm:$0xff] %v1192
    %1449 = vst [vmem:[%s11 + $0xf8] sm:$0xff] %v1193
    %1450 = vst [vmem:[%s11 + $0x100] sm:$0xff] %v1194
    %1451 = vst [vmem:[%s11 + $0x108] sm:$0xff] %v1195
    %1452 = vst [vmem:[%s11 + $0x110] sm:$0xff] %v1196
    %1453 = vst [vmem:[%s11 + $0x118] sm:$0xff] %v1197
    %1454 = vst [vmem:[%s11 + $0x120] sm:$0xff] %v1198
    %1455 = vst [vmem:[%s11 + $0x128] sm:$0xff] %v1199
    %1456 = vst [vmem:[%s11 + $0x130] sm:$0xff] %v1200
    %1457 = vst [vmem:[%s11 + $0x138] sm:$0xff] %v1201
    %1458 = vst [vmem:[%s11 + $0x140] sm:$0xff] %v1202
    %1459 = vst [vmem:[%s11 + $0x148] sm:$0xff] %v1203
    %1460 = vst [vmem:[%s11 + $0x150] sm:$0xff] %v1204
    %1461 = vst [vmem:[%s11 + $0x158] sm:$0xff] %v1205
    %1462 = vst [vmem:[%s11 + $0x160] sm:$0xff] %v1206
    %1463 = vst [vmem:[%s11 + $0x168] sm:$0xff] %v1207
    %1464 = vst [vmem:[%s11 + $0x170] sm:$0xff] %v1208
    %1465 = vst [vmem:[%s11 + $0x178] sm:$0xff] %v1209
    %1466 = vst [vmem:[%s11 + $0x180] sm:$0xff] %v1210
    %1467 = vst [vmem:[%s11 + $0x188] sm:$0xff] %v1211
    %1468 = vst [vmem:[%s11 + $0x190] sm:$0xff] %v1212
    %1469 = vst [vmem:[%s11 + $0x198] sm:$0xff] %v1213
    %1470 = vst [vmem:[%s11 + $0x1a0] sm:$0xff] %v1214
    %1471 = vst [vmem:[%s11 + $0x1a8] sm:$0xff] %v1215
    %1472 = vst [vmem:[%s11 + $0x1b0] sm:$0xff] %v1216
    %1473 = vst [vmem:[%s11 + $0x1b8] sm:$0xff] %v1217
    %1474 = vst [vmem:[%s11 + $0x1c0] sm:$0xff] %v1218
    %1475 = vst [vmem:[%s11 + $0x1c8] sm:$0xff] %v1219
    %1476 = vst [vmem:[%s11 + $0x1d0] sm:$0xff] %v1220
    %1477 = vst [vmem:[%s11 + $0x1d8] sm:$0xff] %v1221
    %1478 = vst [vmem:[%s11 + $0x1e0] sm:$0xff] %v1222
    %1479 = vst [vmem:[%s11 + $0x1e8] sm:$0xff] %v1223
    %1480 = vst [vmem:[%s11 + $0x1f0] sm:$0xff] %v1224
    %1481 = vst [vmem:[%s11 + $0x1f8] sm:$0xff] %v1225
    %1482 = vst [vmem:[%s11 + $0x200] sm:$0xff] %v1226
    %1483 = vst [vmem:[%s11 + $0x208] sm:$0xff] %v1227
    %1484 = vst [vmem:[%s11 + $0x210] sm:$0xff] %v1228
    %1485 = vst [vmem:[%s11 + $0x218] sm:$0xff] %v1229
    %1486 = vst [vmem:[%s11 + $0x220] sm:$0xff] %v1230
    %1487 = vst [vmem:[%s11 + $0x228] sm:$0xff] %v1231
    %1488 = vst [vmem:[%s11 + $0x230] sm:$0xff] %v1232
    %1489 = vst [vmem:[%s11 + $0x238] sm:$0xff] %v1233
    %1490 = vst [vmem:[%s11 + $0x240] sm:$0xff] %v1234
    %1491 = vst [vmem:[%s11 + $0x248] sm:$0xff] %v1235
    %1492 = vst [vmem:[%s11 + $0x250] sm:$0xff] %v1236
    %1493 = vst [vmem:[%s11 + $0x258] sm:$0xff] %v1237
    %1494 = vst [vmem:[%s11 + $0x260] sm:$0xff] %v1238
    %1495 = vst [vmem:[%s11 + $0x268] sm:$0xff] %v1239
    %1496 = vst [vmem:[%s11 + $0x270] sm:$0xff] %v1240
    %1497 = vst [vmem:[%s11 + $0x278] sm:$0xff] %v1241
    %1498 = vst [vmem:[%s11 + $0x280] sm:$0xff] %v1242
    %1499 = vst [vmem:[%s11 + $0x288] sm:$0xff] %v1243
    %1500 = vst [vmem:[%s11 + $0x290] sm:$0xff] %v1244
    %1501 = vst [vmem:[%s11 + $0x298] sm:$0xff] %v1245
    %1502 = vst [vmem:[%s11 + $0x2a0] sm:$0xff] %v1246
    %1503 = vst [vmem:[%s11 + $0x2a8] sm:$0xff] %v1247
    %1504 = vst [vmem:[%s11 + $0x2b0] sm:$0xff] %v1248
    %1505 = vst [vmem:[%s11 + $0x2b8] sm:$0xff] %v1249
    %1506 = vst [vmem:[%s11 + $0x2c0] sm:$0xff] %v1250
    %1507 = vst [vmem:[%s11 + $0x2c8] sm:$0xff] %v1251
    %1508 = vst [vmem:[%s11 + $0x2d0] sm:$0xff] %v1252
    %1509 = vst [vmem:[%s11 + $0x2d8] sm:$0xff] %v1253
    %1510 = vst [vmem:[%s11 + $0x2e0] sm:$0xff] %v1254
    %1511 = vst [vmem:[%s11 + $0x2e8] sm:$0xff] %v1255
    %1512 = vst [vmem:[%s11 + $0x2f0] sm:$0xff] %v1256
    %1513 = vst [vmem:[%s11 + $0x2f8] sm:$0xff] %v1257
    %1514 = vst [vmem:[%s11 + $0x300] sm:$0xff] %v1258
    %1515 = vst [vmem:[%s11 + $0x308] sm:$0xff] %v1259
    %1516 = vst [vmem:[%s11 + $0x310] sm:$0xff] %v1260
    %1517 = vst [vmem:[%s11 + $0x318] sm:$0xff] %v1261
    %1518 = vst [vmem:[%s11 + $0x320] sm:$0xff] %v1262
    %1519 = vst [vmem:[%s11 + $0x328] sm:$0xff] %v1263
    %1520 = vst [vmem:[%s11 + $0x330] sm:$0xff] %v1264
    %1521 = vst [vmem:[%s11 + $0x338] sm:$0xff] %v1265
    %1522 = vst [vmem:[%s11 + $0x340] sm:$0xff] %v1266
    %1523 = vst [vmem:[%s11 + $0x348] sm:$0xff] %v1267
    %1524 = vst [vmem:[%s11 + $0x350] sm:$0xff] %v1268
    %1525 = vst [vmem:[%s11 + $0x358] sm:$0xff] %v1269
    %1526 = vst [vmem:[%s11 + $0x360] sm:$0xff] %v1270
    %1527 = vst [vmem:[%s11 + $0x368] sm:$0xff] %v1271
    %1528 = vst [vmem:[%s11 + $0x370] sm:$0xff] %v1272
    %1529 = vst [vmem:[%s11 + $0x378] sm:$0xff] %v1273
    %1530 = vst [vmem:[%s11 + $0x380] sm:$0xff] %v1274
    %1531 = vst [vmem:[%s11 + $0x388] sm:$0xff] %v1275
    %1532 = vst [vmem:[%s11 + $0x390] sm:$0xff] %v1276
    %1533 = vst [vmem:[%s11 + $0x398] sm:$0xff] %v1277
    %1534 = vst [vmem:[%s11 + $0x3a0] sm:$0xff] %v1278
    %1535 = vst [vmem:[%s11 + $0x3a8] sm:$0xff] %v1279
    %1536 = vst [vmem:[%s11 + $0x3b0] sm:$0xff] %v1280
    %1537 = vst [vmem:[%s11 + $0x3b8] sm:$0xff] %v1281
    %1538 = vst [vmem:[%s11 + $0x3c0] sm:$0xff] %v1282
    %1539 = vst [vmem:[%s11 + $0x3c8] sm:$0xff] %v1283
    %1540 = vst [vmem:[%s11 + $0x3d0] sm:$0xff] %v1284
    %1541 = vst [vmem:[%s11 + $0x3d8] sm:$0xff] %v1285
    %1542 = vst [vmem:[%s11 + $0x3e0] sm:$0xff] %v1286
    %1543 = vst [vmem:[%s11 + $0x3e8] sm:$0xff] %v1287
    %1544 = vst [vmem:[%s11 + $0x3f0] sm:$0xff] %v1288
    %1545 = vst [vmem:[%s11 + $0x3f8] sm:$0xff] %v1289
    %1546 = vst [vmem:[%s11 + $0x400] sm:$0xff] %v1290
    %1547 = vst [vmem:[%s11 + $0x408] sm:$0xff] %v1291
    %1548 = vst [vmem:[%s11 + $0x410] sm:$0xff] %v1292
    %1549 = vst [vmem:[%s11 + $0x418] sm:$0xff] %v1293
    %1550 = vst [vmem:[%s11 + $0x420] sm:$0xff] %v1294
    %1551 = vst [vmem:[%s11 + $0x428] sm:$0xff] %v1295
    %1552 = vst [vmem:[%s11 + $0x430] sm:$0xff] %v1296
    %1553 = vst [vmem:[%s11 + $0x438] sm:$0xff] %v1297
    %1554 = vst [vmem:[%s11 + $0x440] sm:$0xff] %v1298
    %1555 = vst [vmem:[%s11 + $0x448] sm:$0xff] %v1299
    %1556 = vst [vmem:[%s11 + $0x450] sm:$0xff] %v1300
    %1557 = vst [vmem:[%s11 + $0x458] sm:$0xff] %v1301
    %1558 = vst [vmem:[%s11 + $0x460] sm:$0xff] %v1302
    %1559 = vst [vmem:[%s11 + $0x468] sm:$0xff] %v1303
    %1560 = vst [vmem:[%s11 + $0x470] sm:$0xff] %v1304
    %1561 = vst [vmem:[%s11 + $0x478] sm:$0xff] %v1305
    %1562 = vst [vmem:[%s11 + $0x480] sm:$0xff] %v1306
    %1563 = vst [vmem:[%s11 + $0x488] sm:$0xff] %v1307
    %1564 = vst [vmem:[%s11 + $0x490] sm:$0xff] %v1308
    %1565 = vst [vmem:[%s11 + $0x498] sm:$0xff] %v1309
    %1566 = vst [vmem:[%s11 + $0x4a0] sm:$0xff] %v1310
    %1567 = vst [vmem:[%s11 + $0x4a8] sm:$0xff] %v1311
    %1568 = vst [vmem:[%s11 + $0x4b0] sm:$0xff] %v1312
    %1569 = vst [vmem:[%s11 + $0x4b8] sm:$0xff] %v1313
    %1570 = vst [vmem:[%s11 + $0x4c0] sm:$0xff] %v1314
    %1571 = vst [vmem:[%s11 + $0x4c8] sm:$0xff] %v1315
    %1572 = vst [vmem:[%s11 + $0x4d0] sm:$0xff] %v1316
    %1573 = vst [vmem:[%s11 + $0x4d8] sm:$0xff] %v1317
    %1574 = vst [vmem:[%s11 + $0x4e0] sm:$0xff] %v1318
    %1575 = vst [vmem:[%s11 + $0x4e8] sm:$0xff] %v1319
    %1576 = vst [vmem:[%s11 + $0x4f0] sm:$0xff] %v1320
    %1577 = vst [vmem:[%s11 + $0x4f8] sm:$0xff] %v1321
    %1578 = vst [vmem:[%s11 + $0x500] sm:$0xff] %v1322
    %1579 = vst [vmem:[%s11 + $0x508] sm:$0xff] %v1323
    %1580 = vst [vmem:[%s11 + $0x510] sm:$0xff] %v1324
    %1581 = vst [vmem:[%s11 + $0x518] sm:$0xff] %v1325
    %1582 = vst [vmem:[%s11 + $0x520] sm:$0xff] %v1326
    %1583 = vst [vmem:[%s11 + $0x528] sm:$0xff] %v1327
    %1584 = vst [vmem:[%s11 + $0x530] sm:$0xff] %v1328
    %1585 = vst [vmem:[%s11 + $0x538] sm:$0xff] %v1329
    %1586 = vst [vmem:[%s11 + $0x540] sm:$0xff] %v1330
    %1587 = vst [vmem:[%s11 + $0x548] sm:$0xff] %v1331
    %1588 = vst [vmem:[%s11 + $0x550] sm:$0xff] %v1332
    %1589 = vst [vmem:[%s11 + $0x558] sm:$0xff] %v1333
    %1590 = vst [vmem:[%s11 + $0x560] sm:$0xff] %v1334
    %1591 = vst [vmem:[%s11 + $0x568] sm:$0xff] %v1335
    %1592 = vst [vmem:[%s11 + $0x570] sm:$0xff] %v1336
    %1593 = vst [vmem:[%s11 + $0x578] sm:$0xff] %v1337
    %1594 = vst [vmem:[%s11 + $0x580] sm:$0xff] %v1338
    %1595 = vst [vmem:[%s11 + $0x588] sm:$0xff] %v1339
    %1596 = vst [vmem:[%s11 + $0x590] sm:$0xff] %v1340
    %1597 = vst [vmem:[%s11 + $0x598] sm:$0xff] %v1341
    %1598 = vst [vmem:[%s11 + $0x5a0] sm:$0xff] %v1342
    %1599 = vst [vmem:[%s11 + $0x5a8] sm:$0xff] %v1343
    %1600 = vst [vmem:[%s11 + $0x5b0] sm:$0xff] %v1344
    %1601 = vst [vmem:[%s11 + $0x5b8] sm:$0xff] %v1345
    %1602 = vst [vmem:[%s11 + $0x5c0] sm:$0xff] %v1346
    %1603 = vst [vmem:[%s11 + $0x5c8] sm:$0xff] %v1347
    %1604 = vst [vmem:[%s11 + $0x5d0] sm:$0xff] %v1348
    %1605 = vst [vmem:[%s11 + $0x5d8] sm:$0xff] %v1349
    %1606 = vst [vmem:[%s11 + $0x5e0] sm:$0xff] %v1350
    %1607 = vst [vmem:[%s11 + $0x5e8] sm:$0xff] %v1351
    %1608 = vst [vmem:[%s11 + $0x5f0] sm:$0xff] %v1352
    %1609 = vst [vmem:[%s11 + $0x5f8] sm:$0xff] %v1353
    %1610 = vst [vmem:[%s11 + $0x600] sm:$0xff] %v1354
    %1611 = vst [vmem:[%s11 + $0x608] sm:$0xff] %v1355
    %1612 = vst [vmem:[%s11 + $0x610] sm:$0xff] %v1356
    %1613 = vst [vmem:[%s11 + $0x618] sm:$0xff] %v1357
    %1614 = vst [vmem:[%s11 + $0x620] sm:$0xff] %v1358
    %1615 = vst [vmem:[%s11 + $0x628] sm:$0xff] %v1359
    %1616 = vst [vmem:[%s11 + $0x630] sm:$0xff] %v1360
    %1617 = vst [vmem:[%s11 + $0x638] sm:$0xff] %v1361
    %1618 = vst [vmem:[%s11 + $0x640] sm:$0xff] %v1362
    %1619 = vst [vmem:[%s11 + $0x648] sm:$0xff] %v1363
    %1620 = vst [vmem:[%s11 + $0x650] sm:$0xff] %v1364
    %1621 = vst [vmem:[%s11 + $0x658] sm:$0xff] %v1365
    %1622 = vst [vmem:[%s11 + $0x660] sm:$0xff] %v1366
    %1623 = vst [vmem:[%s11 + $0x668] sm:$0xff] %v1367
    %1624 = vst [vmem:[%s11 + $0x670] sm:$0xff] %v1368
    %1625 = vst [vmem:[%s11 + $0x678] sm:$0xff] %v1369
    %1626 = vst [vmem:[%s11 + $0x680] sm:$0xff] %v1370
    %1627 = vst [vmem:[%s11 + $0x688] sm:$0xff] %v1371
    %1628 = vst [vmem:[%s11 + $0x690] sm:$0xff] %v1372
    %1629 = vst [vmem:[%s11 + $0x698] sm:$0xff] %v1373
    %1630 = vst [vmem:[%s11 + $0x6a0] sm:$0xff] %v1374
    %1631 = vst [vmem:[%s11 + $0x6a8] sm:$0xff] %v1375
    %1632 = vst [vmem:[%s11 + $0x6b0] sm:$0xff] %v1376
    %1633 = vst [vmem:[%s11 + $0x6b8] sm:$0xff] %v1377
    %1634 = vst [vmem:[%s11 + $0x6c0] sm:$0xff] %v1378
    %1635 = vst [vmem:[%s11 + $0x6c8] sm:$0xff] %v1379
    %1636 = vst [vmem:[%s11 + $0x6d0] sm:$0xff] %v1380
    %1637 = vst [vmem:[%s11 + $0x6d8] sm:$0xff] %v1381
    %1638 = vst [vmem:[%s11 + $0x6e0] sm:$0xff] %v1382
    %1639 = vst [vmem:[%s11 + $0x6e8] sm:$0xff] %v1383
    %1640 = vst [vmem:[%s11 + $0x6f0] sm:$0xff] %v1384
    %1641 = vst [vmem:[%s11 + $0x6f8] sm:$0xff] %v1385
    %1642 = vst [vmem:[%s11 + $0x700] sm:$0xff] %v1386
    %1643 = vst [vmem:[%s11 + $0x708] sm:$0xff] %v1387
    %1644 = vst [vmem:[%s11 + $0x710] sm:$0xff] %v1388
    %1645 = vst [vmem:[%s11 + $0x718] sm:$0xff] %v1389
    %1646 = vst [vmem:[%s11 + $0x720] sm:$0xff] %v1390
    %1647 = vst [vmem:[%s11 + $0x728] sm:$0xff] %v1391
    %1648 = vst [vmem:[%s11 + $0x730] sm:$0xff] %v1392
    %1649 = vst [vmem:[%s11 + $0x738] sm:$0xff] %v1393
    %1650 = vst [vmem:[%s11 + $0x740] sm:$0xff] %v1394
    %1651 = vst [vmem:[%s11 + $0x748] sm:$0xff] %v1395
    %1652 = vst [vmem:[%s11 + $0x750] sm:$0xff] %v1396
    %1653 = vst [vmem:[%s11 + $0x758] sm:$0xff] %v1397
    %1654 = vst [vmem:[%s11 + $0x760] sm:$0xff] %v1398
    %1655 = vst [vmem:[%s11 + $0x768] sm:$0xff] %v1399
    %1656 = vst [vmem:[%s11 + $0x770] sm:$0xff] %v1400
    %1657 = vst [vmem:[%s11 + $0x778] sm:$0xff] %v1401
    %1658 = vst [vmem:[%s11 + $0x780] sm:$0xff] %v1402
    %1659 = vst [vmem:[%s11 + $0x788] sm:$0xff] %v1403
    %1660 = vst [vmem:[%s11 + $0x790] sm:$0xff] %v1404
    %1661 = vst [vmem:[%s11 + $0x798] sm:$0xff] %v1405
    %1662 = vst [vmem:[%s11 + $0x7a0] sm:$0xff] %v1406
    %1663 = vst [vmem:[%s11 + $0x7a8] sm:$0xff] %v1407
    %1664 = vst [vmem:[%s11 + $0x7b0] sm:$0xff] %v1408
    %1665 = vst [vmem:[%s11 + $0x7b8] sm:$0xff] %v1409
    %1666 = vst [vmem:[%s11 + $0x7c0] sm:$0xff] %v1410
    %1667 = vst [vmem:[%s11 + $0x7c8] sm:$0xff] %v1411
    %1668 = vst [vmem:[%s11 + $0x7d0] sm:$0xff] %v1412
    %1669 = vst [vmem:[%s11 + $0x7d8] sm:$0xff] %v1413
    %1670 = vst [vmem:[%s11 + $0x7e0] sm:$0xff] %v1414
    %1671 = vst [vmem:[%s11 + $0x7e8] sm:$0xff] %v1415
    %1672 = vst [vmem:[%s11 + $0x7f0] sm:$0xff] %v1416
    %1673 = vst [vmem:[%s11 + $0x7f8] sm:$0xff] %v1417
    %v1674 = vpack.c.bf16 %v1164, %v1162
    %v1675 = vpack.c.bf16 %v1165, %v1163
    %v1676 = vpack.c.bf16 %v1168, %v1166
    %v1677 = vpack.c.bf16 %v1169, %v1167
    %v1678 = vpack.c.bf16 %v1172, %v1170
    %v1679 = vpack.c.bf16 %v1173, %v1171
    %v1680 = vpack.c.bf16 %v1176, %v1174
    %v1681 = vpack.c.bf16 %v1177, %v1175
    %v1682 = vpack.c.bf16 %v1180, %v1178
    %v1683 = vpack.c.bf16 %v1181, %v1179
    %v1684 = vpack.c.bf16 %v1184, %v1182
    %v1685 = vpack.c.bf16 %v1185, %v1183
    %v1686 = vpack.c.bf16 %v1188, %v1186
    %v1687 = vpack.c.bf16 %v1189, %v1187
    %v1688 = vpack.c.bf16 %v1192, %v1190
    %v1689 = vpack.c.bf16 %v1193, %v1191
    %v1690 = vpack.c.bf16 %v1196, %v1194
    %v1691 = vpack.c.bf16 %v1197, %v1195
    %v1692 = vpack.c.bf16 %v1200, %v1198
    %v1693 = vpack.c.bf16 %v1201, %v1199
    %v1694 = vpack.c.bf16 %v1204, %v1202
    %v1695 = vpack.c.bf16 %v1205, %v1203
    %v1696 = vpack.c.bf16 %v1208, %v1206
    %v1697 = vpack.c.bf16 %v1209, %v1207
    %v1698 = vpack.c.bf16 %v1212, %v1210
    %v1699 = vpack.c.bf16 %v1213, %v1211
    %v1700 = vpack.c.bf16 %v1216, %v1214
    %v1701 = vpack.c.bf16 %v1217, %v1215
    %v1702 = vpack.c.bf16 %v1220, %v1218
    %v1703 = vpack.c.bf16 %v1221, %v1219
    %v1704 = vpack.c.bf16 %v1224, %v1222
    %v1705 = vpack.c.bf16 %v1225, %v1223
    %v1706 = vpack.c.bf16 %v1228, %v1226
    %v1707 = vpack.c.bf16 %v1229, %v1227
    %v1708 = vpack.c.bf16 %v1232, %v1230
    %v1709 = vpack.c.bf16 %v1233, %v1231
    %v1710 = vpack.c.bf16 %v1236, %v1234
    %v1711 = vpack.c.bf16 %v1237, %v1235
    %v1712 = vpack.c.bf16 %v1240, %v1238
    %v1713 = vpack.c.bf16 %v1241, %v1239
    %v1714 = vpack.c.bf16 %v1244, %v1242
    %v1715 = vpack.c.bf16 %v1245, %v1243
    %v1716 = vpack.c.bf16 %v1248, %v1246
    %v1717 = vpack.c.bf16 %v1249, %v1247
    %v1718 = vpack.c.bf16 %v1252, %v1250
    %v1719 = vpack.c.bf16 %v1253, %v1251
    %v1720 = vpack.c.bf16 %v1256, %v1254
    %v1721 = vpack.c.bf16 %v1257, %v1255
    %v1722 = vpack.c.bf16 %v1260, %v1258
    %v1723 = vpack.c.bf16 %v1261, %v1259
    %v1724 = vpack.c.bf16 %v1264, %v1262
    %v1725 = vpack.c.bf16 %v1265, %v1263
    %v1726 = vpack.c.bf16 %v1268, %v1266
    %v1727 = vpack.c.bf16 %v1269, %v1267
    %v1728 = vpack.c.bf16 %v1272, %v1270
    %v1729 = vpack.c.bf16 %v1273, %v1271
    %v1730 = vpack.c.bf16 %v1276, %v1274
    %v1731 = vpack.c.bf16 %v1277, %v1275
    %v1732 = vpack.c.bf16 %v1280, %v1278
    %v1733 = vpack.c.bf16 %v1281, %v1279
    %v1734 = vpack.c.bf16 %v1284, %v1282
    %v1735 = vpack.c.bf16 %v1285, %v1283
    %v1736 = vpack.c.bf16 %v1288, %v1286
    %v1737 = vpack.c.bf16 %v1289, %v1287
    %v1738 = vpack.c.bf16 %v1292, %v1290
    %v1739 = vpack.c.bf16 %v1293, %v1291
    %v1740 = vpack.c.bf16 %v1296, %v1294
    %v1741 = vpack.c.bf16 %v1297, %v1295
    %v1742 = vpack.c.bf16 %v1300, %v1298
    %v1743 = vpack.c.bf16 %v1301, %v1299
    %v1744 = vpack.c.bf16 %v1304, %v1302
    %v1745 = vpack.c.bf16 %v1305, %v1303
    %v1746 = vpack.c.bf16 %v1308, %v1306
    %v1747 = vpack.c.bf16 %v1309, %v1307
    %v1748 = vpack.c.bf16 %v1312, %v1310
    %v1749 = vpack.c.bf16 %v1313, %v1311
    %v1750 = vpack.c.bf16 %v1316, %v1314
    %v1751 = vpack.c.bf16 %v1317, %v1315
    %v1752 = vpack.c.bf16 %v1320, %v1318
    %v1753 = vpack.c.bf16 %v1321, %v1319
    %v1754 = vpack.c.bf16 %v1324, %v1322
    %v1755 = vpack.c.bf16 %v1325, %v1323
    %v1756 = vpack.c.bf16 %v1328, %v1326
    %v1757 = vpack.c.bf16 %v1329, %v1327
    %v1758 = vpack.c.bf16 %v1332, %v1330
    %v1759 = vpack.c.bf16 %v1333, %v1331
    %v1760 = vpack.c.bf16 %v1336, %v1334
    %v1761 = vpack.c.bf16 %v1337, %v1335
    %v1762 = vpack.c.bf16 %v1340, %v1338
    %v1763 = vpack.c.bf16 %v1341, %v1339
    %v1764 = vpack.c.bf16 %v1344, %v1342
    %v1765 = vpack.c.bf16 %v1345, %v1343
    %v1766 = vpack.c.bf16 %v1348, %v1346
    %v1767 = vpack.c.bf16 %v1349, %v1347
    %v1768 = vpack.c.bf16 %v1352, %v1350
    %v1769 = vpack.c.bf16 %v1353, %v1351
    %v1770 = vpack.c.bf16 %v1356, %v1354
    %v1771 = vpack.c.bf16 %v1357, %v1355
    %v1772 = vpack.c.bf16 %v1360, %v1358
    %v1773 = vpack.c.bf16 %v1361, %v1359
    %v1774 = vpack.c.bf16 %v1364, %v1362
    %v1775 = vpack.c.bf16 %v1365, %v1363
    %v1776 = vpack.c.bf16 %v1368, %v1366
    %v1777 = vpack.c.bf16 %v1369, %v1367
    %v1778 = vpack.c.bf16 %v1372, %v1370
    %v1779 = vpack.c.bf16 %v1373, %v1371
    %v1780 = vpack.c.bf16 %v1376, %v1374
    %v1781 = vpack.c.bf16 %v1377, %v1375
    %v1782 = vpack.c.bf16 %v1380, %v1378
    %v1783 = vpack.c.bf16 %v1381, %v1379
    %v1784 = vpack.c.bf16 %v1384, %v1382
    %v1785 = vpack.c.bf16 %v1385, %v1383
    %v1786 = vpack.c.bf16 %v1388, %v1386
    %v1787 = vpack.c.bf16 %v1389, %v1387
    %v1788 = vpack.c.bf16 %v1392, %v1390
    %v1789 = vpack.c.bf16 %v1393, %v1391
    %v1790 = vpack.c.bf16 %v1396, %v1394
    %v1791 = vpack.c.bf16 %v1397, %v1395
    %v1792 = vpack.c.bf16 %v1400, %v1398
    %v1793 = vpack.c.bf16 %v1401, %v1399
    %v1794 = vpack.c.bf16 %v1404, %v1402
    %v1795 = vpack.c.bf16 %v1405, %v1403
    %v1796 = vpack.c.bf16 %v1408, %v1406
    %v1797 = vpack.c.bf16 %v1409, %v1407
    %v1798 = vpack.c.bf16 %v1412, %v1410
    %v1799 = vpack.c.bf16 %v1413, %v1411
    %v1800 = vpack.c.bf16 %v1416, %v1414
    %v1801 = vpack.c.bf16 %v1417, %v1415
    %v1930 = vunpack.c.l.b16 %v1674
    %v1931 = vunpack.c.l.b16 %v1675
    %v1932 = vunpack.c.h.b16 %v1674
    %v1933 = vunpack.c.h.b16 %v1675
    %v1934 = vunpack.c.l.b16 %v1676
    %v1935 = vunpack.c.l.b16 %v1677
    %v1936 = vunpack.c.h.b16 %v1676
    %v1937 = vunpack.c.h.b16 %v1677
    %v1938 = vunpack.c.l.b16 %v1678
    %v1939 = vunpack.c.l.b16 %v1679
    %v1940 = vunpack.c.h.b16 %v1678
    %v1941 = vunpack.c.h.b16 %v1679
    %v1942 = vunpack.c.l.b16 %v1680
    %v1943 = vunpack.c.l.b16 %v1681
    %v1944 = vunpack.c.h.b16 %v1680
    %v1945 = vunpack.c.h.b16 %v1681
    %v1946 = vunpack.c.l.b16 %v1682
    %v1947 = vunpack.c.l.b16 %v1683
    %v1948 = vunpack.c.h.b16 %v1682
    %v1949 = vunpack.c.h.b16 %v1683
    %v1950 = vunpack.c.l.b16 %v1684
    %v1951 = vunpack.c.l.b16 %v1685
    %v1952 = vunpack.c.h.b16 %v1684
    %v1953 = vunpack.c.h.b16 %v1685
    %v1954 = vunpack.c.l.b16 %v1686
    %v1955 = vunpack.c.l.b16 %v1687
    %v1956 = vunpack.c.h.b16 %v1686
    %v1957 = vunpack.c.h.b16 %v1687
    %v1958 = vunpack.c.l.b16 %v1688
    %v1959 = vunpack.c.l.b16 %v1689
    %v1960 = vunpack.c.h.b16 %v1688
    %v1961 = vunpack.c.h.b16 %v1689
    %v1962 = vunpack.c.l.b16 %v1690
    %v1963 = vunpack.c.l.b16 %v1691
    %v1964 = vunpack.c.h.b16 %v1690
    %v1965 = vunpack.c.h.b16 %v1691
    %v1966 = vunpack.c.l.b16 %v1692
    %v1967 = vunpack.c.l.b16 %v1693
    %v1968 = vunpack.c.h.b16 %v1692
    %v1969 = vunpack.c.h.b16 %v1693
    %v1970 = vunpack.c.l.b16 %v1694
    %v1971 = vunpack.c.l.b16 %v1695
    %v1972 = vunpack.c.h.b16 %v1694
    %v1973 = vunpack.c.h.b16 %v1695
    %v1974 = vunpack.c.l.b16 %v1696
    %v1975 = vunpack.c.l.b16 %v1697
    %v1976 = vunpack.c.h.b16 %v1696
    %v1977 = vunpack.c.h.b16 %v1697
    %v1978 = vunpack.c.l.b16 %v1698
    %v1979 = vunpack.c.l.b16 %v1699
    %v1980 = vunpack.c.h.b16 %v1698
    %v1981 = vunpack.c.h.b16 %v1699
    %v1982 = vunpack.c.l.b16 %v1700
    %v1983 = vunpack.c.l.b16 %v1701
    %v1984 = vunpack.c.h.b16 %v1700
    %v1985 = vunpack.c.h.b16 %v1701
    %v1986 = vunpack.c.l.b16 %v1702
    %v1987 = vunpack.c.l.b16 %v1703
    %v1988 = vunpack.c.h.b16 %v1702
    %v1989 = vunpack.c.h.b16 %v1703
    %v1990 = vunpack.c.l.b16 %v1704
    %v1991 = vunpack.c.l.b16 %v1705
    %v1992 = vunpack.c.h.b16 %v1704
    %v1993 = vunpack.c.h.b16 %v1705
    %v1994 = vunpack.c.l.b16 %v1706
    %v1995 = vunpack.c.l.b16 %v1707
    %v1996 = vunpack.c.h.b16 %v1706
    %v1997 = vunpack.c.h.b16 %v1707
    %v1998 = vunpack.c.l.b16 %v1708
    %v1999 = vunpack.c.l.b16 %v1709
    %v2000 = vunpack.c.h.b16 %v1708
    %v2001 = vunpack.c.h.b16 %v1709
    %v2002 = vunpack.c.l.b16 %v1710
    %v2003 = vunpack.c.l.b16 %v1711
    %v2004 = vunpack.c.h.b16 %v1710
    %v2005 = vunpack.c.h.b16 %v1711
    %v2006 = vunpack.c.l.b16 %v1712
    %v2007 = vunpack.c.l.b16 %v1713
    %v2008 = vunpack.c.h.b16 %v1712
    %v2009 = vunpack.c.h.b16 %v1713
    %v2010 = vunpack.c.l.b16 %v1714
    %v2011 = vunpack.c.l.b16 %v1715
    %v2012 = vunpack.c.h.b16 %v1714
    %v2013 = vunpack.c.h.b16 %v1715
    %v2014 = vunpack.c.l.b16 %v1716
    %v2015 = vunpack.c.l.b16 %v1717
    %v2016 = vunpack.c.h.b16 %v1716
    %v2017 = vunpack.c.h.b16 %v1717
    %v2018 = vunpack.c.l.b16 %v1718
    %v2019 = vunpack.c.l.b16 %v1719
    %v2020 = vunpack.c.h.b16 %v1718
    %v2021 = vunpack.c.h.b16 %v1719
    %v2022 = vunpack.c.l.b16 %v1720
    %v2023 = vunpack.c.l.b16 %v1721
    %v2024 = vunpack.c.h.b16 %v1720
    %v2025 = vunpack.c.h.b16 %v1721
    %v2026 = vunpack.c.l.b16 %v1722
    %v2027 = vunpack.c.l.b16 %v1723
    %v2028 = vunpack.c.h.b16 %v1722
    %v2029 = vunpack.c.h.b16 %v1723
    %v2030 = vunpack.c.l.b16 %v1724
    %v2031 = vunpack.c.l.b16 %v1725
    %v2032 = vunpack.c.h.b16 %v1724
    %v2033 = vunpack.c.h.b16 %v1725
    %v2034 = vunpack.c.l.b16 %v1726
    %v2035 = vunpack.c.l.b16 %v1727
    %v2036 = vunpack.c.h.b16 %v1726
    %v2037 = vunpack.c.h.b16 %v1727
    %v2038 = vunpack.c.l.b16 %v1728
    %v2039 = vunpack.c.l.b16 %v1729
    %v2040 = vunpack.c.h.b16 %v1728
    %v2041 = vunpack.c.h.b16 %v1729
    %v2042 = vunpack.c.l.b16 %v1730
    %v2043 = vunpack.c.l.b16 %v1731
    %v2044 = vunpack.c.h.b16 %v1730
    %v2045 = vunpack.c.h.b16 %v1731
    %v2046 = vunpack.c.l.b16 %v1732
    %v2047 = vunpack.c.l.b16 %v1733
    %v2048 = vunpack.c.h.b16 %v1732
    %v2049 = vunpack.c.h.b16 %v1733
    %v2050 = vunpack.c.l.b16 %v1734
    %v2051 = vunpack.c.l.b16 %v1735
    %v2052 = vunpack.c.h.b16 %v1734
    %v2053 = vunpack.c.h.b16 %v1735
    %v2054 = vunpack.c.l.b16 %v1736
    %v2055 = vunpack.c.l.b16 %v1737
    %v2056 = vunpack.c.h.b16 %v1736
    %v2057 = vunpack.c.h.b16 %v1737
    %v2058 = vunpack.c.l.b16 %v1738
    %v2059 = vunpack.c.l.b16 %v1739
    %v2060 = vunpack.c.h.b16 %v1738
    %v2061 = vunpack.c.h.b16 %v1739
    %v2062 = vunpack.c.l.b16 %v1740
    %v2063 = vunpack.c.l.b16 %v1741
    %v2064 = vunpack.c.h.b16 %v1740
    %v2065 = vunpack.c.h.b16 %v1741
    %v2066 = vunpack.c.l.b16 %v1742
    %v2067 = vunpack.c.l.b16 %v1743
    %v2068 = vunpack.c.h.b16 %v1742
    %v2069 = vunpack.c.h.b16 %v1743
    %v2070 = vunpack.c.l.b16 %v1744
    %v2071 = vunpack.c.l.b16 %v1745
    %v2072 = vunpack.c.h.b16 %v1744
    %v2073 = vunpack.c.h.b16 %v1745
    %v2074 = vunpack.c.l.b16 %v1746
    %v2075 = vunpack.c.l.b16 %v1747
    %v2076 = vunpack.c.h.b16 %v1746
    %v2077 = vunpack.c.h.b16 %v1747
    %v2078 = vunpack.c.l.b16 %v1748
    %v2079 = vunpack.c.l.b16 %v1749
    %v2080 = vunpack.c.h.b16 %v1748
    %v2081 = vunpack.c.h.b16 %v1749
    %v2082 = vunpack.c.l.b16 %v1750
    %v2083 = vunpack.c.l.b16 %v1751
    %v2084 = vunpack.c.h.b16 %v1750
    %v2085 = vunpack.c.h.b16 %v1751
    %v2086 = vunpack.c.l.b16 %v1752
    %v2087 = vunpack.c.l.b16 %v1753
    %v2088 = vunpack.c.h.b16 %v1752
    %v2089 = vunpack.c.h.b16 %v1753
    %v2090 = vunpack.c.l.b16 %v1754
    %v2091 = vunpack.c.l.b16 %v1755
    %v2092 = vunpack.c.h.b16 %v1754
    %v2093 = vunpack.c.h.b16 %v1755
    %v2094 = vunpack.c.l.b16 %v1756
    %v2095 = vunpack.c.l.b16 %v1757
    %v2096 = vunpack.c.h.b16 %v1756
    %v2097 = vunpack.c.h.b16 %v1757
    %v2098 = vunpack.c.l.b16 %v1758
    %v2099 = vunpack.c.l.b16 %v1759
    %v2100 = vunpack.c.h.b16 %v1758
    %v2101 = vunpack.c.h.b16 %v1759
    %v2102 = vunpack.c.l.b16 %v1760
    %v2103 = vunpack.c.l.b16 %v1761
    %v2104 = vunpack.c.h.b16 %v1760
    %v2105 = vunpack.c.h.b16 %v1761
    %v2106 = vunpack.c.l.b16 %v1762
    %v2107 = vunpack.c.l.b16 %v1763
    %v2108 = vunpack.c.h.b16 %v1762
    %v2109 = vunpack.c.h.b16 %v1763
    %v2110 = vunpack.c.l.b16 %v1764
    %v2111 = vunpack.c.l.b16 %v1765
    %v2112 = vunpack.c.h.b16 %v1764
    %v2113 = vunpack.c.h.b16 %v1765
    %v2114 = vunpack.c.l.b16 %v1766
    %v2115 = vunpack.c.l.b16 %v1767
    %v2116 = vunpack.c.h.b16 %v1766
    %v2117 = vunpack.c.h.b16 %v1767
    %v2118 = vunpack.c.l.b16 %v1768
    %v2119 = vunpack.c.l.b16 %v1769
    %v2120 = vunpack.c.h.b16 %v1768
    %v2121 = vunpack.c.h.b16 %v1769
    %v2122 = vunpack.c.l.b16 %v1770
    %v2123 = vunpack.c.l.b16 %v1771
    %v2124 = vunpack.c.h.b16 %v1770
    %v2125 = vunpack.c.h.b16 %v1771
    %v2126 = vunpack.c.l.b16 %v1772
    %v2127 = vunpack.c.l.b16 %v1773
    %v2128 = vunpack.c.h.b16 %v1772
    %v2129 = vunpack.c.h.b16 %v1773
    %v2130 = vunpack.c.l.b16 %v1774
    %v2131 = vunpack.c.l.b16 %v1775
    %v2132 = vunpack.c.h.b16 %v1774
    %v2133 = vunpack.c.h.b16 %v1775
    %v2134 = vunpack.c.l.b16 %v1776
    %v2135 = vunpack.c.l.b16 %v1777
    %v2136 = vunpack.c.h.b16 %v1776
    %v2137 = vunpack.c.h.b16 %v1777
    %v2138 = vunpack.c.l.b16 %v1778
    %v2139 = vunpack.c.l.b16 %v1779
    %v2140 = vunpack.c.h.b16 %v1778
    %v2141 = vunpack.c.h.b16 %v1779
    %v2142 = vunpack.c.l.b16 %v1780
    %v2143 = vunpack.c.l.b16 %v1781
    %v2144 = vunpack.c.h.b16 %v1780
    %v2145 = vunpack.c.h.b16 %v1781
    %v2146 = vunpack.c.l.b16 %v1782
    %v2147 = vunpack.c.l.b16 %v1783
    %v2148 = vunpack.c.h.b16 %v1782
    %v2149 = vunpack.c.h.b16 %v1783
    %v2150 = vunpack.c.l.b16 %v1784
    %v2151 = vunpack.c.l.b16 %v1785
    %v2152 = vunpack.c.h.b16 %v1784
    %v2153 = vunpack.c.h.b16 %v1785
    %v2154 = vunpack.c.l.b16 %v1786
    %v2155 = vunpack.c.l.b16 %v1787
    %v2156 = vunpack.c.h.b16 %v1786
    %v2157 = vunpack.c.h.b16 %v1787
    %v2158 = vunpack.c.l.b16 %v1788
    %v2159 = vunpack.c.l.b16 %v1789
    %v2160 = vunpack.c.h.b16 %v1788
    %v2161 = vunpack.c.h.b16 %v1789
    %v2162 = vunpack.c.l.b16 %v1790
    %v2163 = vunpack.c.l.b16 %v1791
    %v2164 = vunpack.c.h.b16 %v1790
    %v2165 = vunpack.c.h.b16 %v1791
    %v2166 = vunpack.c.l.b16 %v1792
    %v2167 = vunpack.c.l.b16 %v1793
    %v2168 = vunpack.c.h.b16 %v1792
    %v2169 = vunpack.c.h.b16 %v1793
    %v2170 = vunpack.c.l.b16 %v1794
    %v2171 = vunpack.c.l.b16 %v1795
    %v2172 = vunpack.c.h.b16 %v1794
    %v2173 = vunpack.c.h.b16 %v1795
    %v2174 = vunpack.c.l.b16 %v1796
    %v2175 = vunpack.c.l.b16 %v1797
    %v2176 = vunpack.c.h.b16 %v1796
    %v2177 = vunpack.c.h.b16 %v1797
    %v2178 = vunpack.c.l.b16 %v1798
    %v2179 = vunpack.c.l.b16 %v1799
    %v2180 = vunpack.c.h.b16 %v1798
    %v2181 = vunpack.c.h.b16 %v1799
    %v2182 = vunpack.c.l.b16 %v1800
    %v2183 = vunpack.c.l.b16 %v1801
    %v2184 = vunpack.c.h.b16 %v1800
    %v2185 = vunpack.c.h.b16 %v1801
    %v2186 = vpack.c.b16 %v1931, %v1930
    %v2187 = vpack.c.b16 %v1933, %v1932
    %v2188 = vpack.c.b16 %v1935, %v1934
    %v2189 = vpack.c.b16 %v1937, %v1936
    %v2190 = vpack.c.b16 %v1939, %v1938
    %v2191 = vpack.c.b16 %v1941, %v1940
    %v2192 = vpack.c.b16 %v1943, %v1942
    %v2193 = vpack.c.b16 %v1945, %v1944
    %v2194 = vpack.c.b16 %v1947, %v1946
    %v2195 = vpack.c.b16 %v1949, %v1948
    %v2196 = vpack.c.b16 %v1951, %v1950
    %v2197 = vpack.c.b16 %v1953, %v1952
    %v2198 = vpack.c.b16 %v1955, %v1954
    %v2199 = vpack.c.b16 %v1957, %v1956
    %v2200 = vpack.c.b16 %v1959, %v1958
    %v2201 = vpack.c.b16 %v1961, %v1960
    %v2202 = vpack.c.b16 %v1963, %v1962
    %v2203 = vpack.c.b16 %v1965, %v1964
    %v2204 = vpack.c.b16 %v1967, %v1966
    %v2205 = vpack.c.b16 %v1969, %v1968
    %v2206 = vpack.c.b16 %v1971, %v1970
    %v2207 = vpack.c.b16 %v1973, %v1972
    %v2208 = vpack.c.b16 %v1975, %v1974
    %v2209 = vpack.c.b16 %v1977, %v1976
    %v2210 = vpack.c.b16 %v1979, %v1978
    %v2211 = vpack.c.b16 %v1981, %v1980
    %v2212 = vpack.c.b16 %v1983, %v1982
    %v2213 = vpack.c.b16 %v1985, %v1984
    %v2214 = vpack.c.b16 %v1987, %v1986
    %v2215 = vpack.c.b16 %v1989, %v1988
    %v2216 = vpack.c.b16 %v1991, %v1990
    %v2217 = vpack.c.b16 %v1993, %v1992
    %v2218 = vpack.c.b16 %v1995, %v1994
    %v2219 = vpack.c.b16 %v1997, %v1996
    %v2220 = vpack.c.b16 %v1999, %v1998
    %v2221 = vpack.c.b16 %v2001, %v2000
    %v2222 = vpack.c.b16 %v2003, %v2002
    %v2223 = vpack.c.b16 %v2005, %v2004
    %v2224 = vpack.c.b16 %v2007, %v2006
    %v2225 = vpack.c.b16 %v2009, %v2008
    %v2226 = vpack.c.b16 %v2011, %v2010
    %v2227 = vpack.c.b16 %v2013, %v2012
    %v2228 = vpack.c.b16 %v2015, %v2014
    %v2229 = vpack.c.b16 %v2017, %v2016
    %v2230 = vpack.c.b16 %v2019, %v2018
    %v2231 = vpack.c.b16 %v2021, %v2020
    %v2232 = vpack.c.b16 %v2023, %v2022
    %v2233 = vpack.c.b16 %v2025, %v2024
    %v2234 = vpack.c.b16 %v2027, %v2026
    %v2235 = vpack.c.b16 %v2029, %v2028
    %v2236 = vpack.c.b16 %v2031, %v2030
    %v2237 = vpack.c.b16 %v2033, %v2032
    %v2238 = vpack.c.b16 %v2035, %v2034
    %v2239 = vpack.c.b16 %v2037, %v2036
    %v2240 = vpack.c.b16 %v2039, %v2038
    %v2241 = vpack.c.b16 %v2041, %v2040
    %v2242 = vpack.c.b16 %v2043, %v2042
    %v2243 = vpack.c.b16 %v2045, %v2044
    %v2244 = vpack.c.b16 %v2047, %v2046
    %v2245 = vpack.c.b16 %v2049, %v2048
    %v2246 = vpack.c.b16 %v2051, %v2050
    %v2247 = vpack.c.b16 %v2053, %v2052
    %v2248 = vpack.c.b16 %v2055, %v2054
    %v2249 = vpack.c.b16 %v2057, %v2056
    %v2250 = vpack.c.b16 %v2059, %v2058
    %v2251 = vpack.c.b16 %v2061, %v2060
    %v2252 = vpack.c.b16 %v2063, %v2062
    %v2253 = vpack.c.b16 %v2065, %v2064
    %v2254 = vpack.c.b16 %v2067, %v2066
    %v2255 = vpack.c.b16 %v2069, %v2068
    %v2256 = vpack.c.b16 %v2071, %v2070
    %v2257 = vpack.c.b16 %v2073, %v2072
    %v2258 = vpack.c.b16 %v2075, %v2074
    %v2259 = vpack.c.b16 %v2077, %v2076
    %v2260 = vpack.c.b16 %v2079, %v2078
    %v2261 = vpack.c.b16 %v2081, %v2080
    %v2262 = vpack.c.b16 %v2083, %v2082
    %v2263 = vpack.c.b16 %v2085, %v2084
    %v2264 = vpack.c.b16 %v2087, %v2086
    %v2265 = vpack.c.b16 %v2089, %v2088
    %v2266 = vpack.c.b16 %v2091, %v2090
    %v2267 = vpack.c.b16 %v2093, %v2092
    %v2268 = vpack.c.b16 %v2095, %v2094
    %v2269 = vpack.c.b16 %v2097, %v2096
    %v2270 = vpack.c.b16 %v2099, %v2098
    %v2271 = vpack.c.b16 %v2101, %v2100
    %v2272 = vpack.c.b16 %v2103, %v2102
    %v2273 = vpack.c.b16 %v2105, %v2104
    %v2274 = vpack.c.b16 %v2107, %v2106
    %v2275 = vpack.c.b16 %v2109, %v2108
    %v2276 = vpack.c.b16 %v2111, %v2110
    %v2277 = vpack.c.b16 %v2113, %v2112
    %v2278 = vpack.c.b16 %v2115, %v2114
    %v2279 = vpack.c.b16 %v2117, %v2116
    %v2280 = vpack.c.b16 %v2119, %v2118
    %v2281 = vpack.c.b16 %v2121, %v2120
    %v2282 = vpack.c.b16 %v2123, %v2122
    %v2283 = vpack.c.b16 %v2125, %v2124
    %v2284 = vpack.c.b16 %v2127, %v2126
    %v2285 = vpack.c.b16 %v2129, %v2128
    %v2286 = vpack.c.b16 %v2131, %v2130
    %v2287 = vpack.c.b16 %v2133, %v2132
    %v2288 = vpack.c.b16 %v2135, %v2134
    %v2289 = vpack.c.b16 %v2137, %v2136
    %v2290 = vpack.c.b16 %v2139, %v2138
    %v2291 = vpack.c.b16 %v2141, %v2140
    %v2292 = vpack.c.b16 %v2143, %v2142
    %v2293 = vpack.c.b16 %v2145, %v2144
    %v2294 = vpack.c.b16 %v2147, %v2146
    %v2295 = vpack.c.b16 %v2149, %v2148
    %v2296 = vpack.c.b16 %v2151, %v2150
    %v2297 = vpack.c.b16 %v2153, %v2152
    %v2298 = vpack.c.b16 %v2155, %v2154
    %v2299 = vpack.c.b16 %v2157, %v2156
    %v2300 = vpack.c.b16 %v2159, %v2158
    %v2301 = vpack.c.b16 %v2161, %v2160
    %v2302 = vpack.c.b16 %v2163, %v2162
    %v2303 = vpack.c.b16 %v2165, %v2164
    %v2304 = vpack.c.b16 %v2167, %v2166
    %v2305 = vpack.c.b16 %v2169, %v2168
    %v2306 = vpack.c.b16 %v2171, %v2170
    %v2307 = vpack.c.b16 %v2173, %v2172
    %v2308 = vpack.c.b16 %v2175, %v2174
    %v2309 = vpack.c.b16 %v2177, %v2176
    %v2310 = vpack.c.b16 %v2179, %v2178
    %v2311 = vpack.c.b16 %v2181, %v2180
    %v2312 = vpack.c.b16 %v2183, %v2182
    %v2313 = vpack.c.b16 %v2185, %v2184
    %2442 = vst [vmem:[%s15] sm:$0xff] %v2186
    %2443 = vst [vmem:[%s15 + $0x8] sm:$0xff] %v2187
    %2444 = vst [vmem:[%s15 + $0x10] sm:$0xff] %v2188
    %2445 = vst [vmem:[%s15 + $0x18] sm:$0xff] %v2189
    %2446 = vst [vmem:[%s15 + $0x20] sm:$0xff] %v2190
    %2447 = vst [vmem:[%s15 + $0x28] sm:$0xff] %v2191
    %2448 = vst [vmem:[%s15 + $0x30] sm:$0xff] %v2192
    %2449 = vst [vmem:[%s15 + $0x38] sm:$0xff] %v2193
    %2450 = vst [vmem:[%s15 + $0x40] sm:$0xff] %v2194
    %2451 = vst [vmem:[%s15 + $0x48] sm:$0xff] %v2195
    %2452 = vst [vmem:[%s15 + $0x50] sm:$0xff] %v2196
    %2453 = vst [vmem:[%s15 + $0x58] sm:$0xff] %v2197
    %2454 = vst [vmem:[%s15 + $0x60] sm:$0xff] %v2198
    %2455 = vst [vmem:[%s15 + $0x68] sm:$0xff] %v2199
    %2456 = vst [vmem:[%s15 + $0x70] sm:$0xff] %v2200
    %2457 = vst [vmem:[%s15 + $0x78] sm:$0xff] %v2201
    %2458 = vst [vmem:[%s15 + $0x80] sm:$0xff] %v2202
    %2459 = vst [vmem:[%s15 + $0x88] sm:$0xff] %v2203
    %2460 = vst [vmem:[%s15 + $0x90] sm:$0xff] %v2204
    %2461 = vst [vmem:[%s15 + $0x98] sm:$0xff] %v2205
    %2462 = vst [vmem:[%s15 + $0xa0] sm:$0xff] %v2206
    %2463 = vst [vmem:[%s15 + $0xa8] sm:$0xff] %v2207
    %2464 = vst [vmem:[%s15 + $0xb0] sm:$0xff] %v2208
    %2465 = vst [vmem:[%s15 + $0xb8] sm:$0xff] %v2209
    %2466 = vst [vmem:[%s15 + $0xc0] sm:$0xff] %v2210
    %2467 = vst [vmem:[%s15 + $0xc8] sm:$0xff] %v2211
    %2468 = vst [vmem:[%s15 + $0xd0] sm:$0xff] %v2212
    %2469 = vst [vmem:[%s15 + $0xd8] sm:$0xff] %v2213
    %2470 = vst [vmem:[%s15 + $0xe0] sm:$0xff] %v2214
    %2471 = vst [vmem:[%s15 + $0xe8] sm:$0xff] %v2215
    %2472 = vst [vmem:[%s15 + $0xf0] sm:$0xff] %v2216
    %2473 = vst [vmem:[%s15 + $0xf8] sm:$0xff] %v2217
    %2474 = vst [vmem:[%s15 + $0x100] sm:$0xff] %v2218
    %2475 = vst [vmem:[%s15 + $0x108] sm:$0xff] %v2219
    %2476 = vst [vmem:[%s15 + $0x110] sm:$0xff] %v2220
    %2477 = vst [vmem:[%s15 + $0x118] sm:$0xff] %v2221
    %2478 = vst [vmem:[%s15 + $0x120] sm:$0xff] %v2222
    %2479 = vst [vmem:[%s15 + $0x128] sm:$0xff] %v2223
    %2480 = vst [vmem:[%s15 + $0x130] sm:$0xff] %v2224
    %2481 = vst [vmem:[%s15 + $0x138] sm:$0xff] %v2225
    %2482 = vst [vmem:[%s15 + $0x140] sm:$0xff] %v2226
    %2483 = vst [vmem:[%s15 + $0x148] sm:$0xff] %v2227
    %2484 = vst [vmem:[%s15 + $0x150] sm:$0xff] %v2228
    %2485 = vst [vmem:[%s15 + $0x158] sm:$0xff] %v2229
    %2486 = vst [vmem:[%s15 + $0x160] sm:$0xff] %v2230
    %2487 = vst [vmem:[%s15 + $0x168] sm:$0xff] %v2231
    %2488 = vst [vmem:[%s15 + $0x170] sm:$0xff] %v2232
    %2489 = vst [vmem:[%s15 + $0x178] sm:$0xff] %v2233
    %2490 = vst [vmem:[%s15 + $0x180] sm:$0xff] %v2234
    %2491 = vst [vmem:[%s15 + $0x188] sm:$0xff] %v2235
    %2492 = vst [vmem:[%s15 + $0x190] sm:$0xff] %v2236
    %2493 = vst [vmem:[%s15 + $0x198] sm:$0xff] %v2237
    %2494 = vst [vmem:[%s15 + $0x1a0] sm:$0xff] %v2238
    %2495 = vst [vmem:[%s15 + $0x1a8] sm:$0xff] %v2239
    %2496 = vst [vmem:[%s15 + $0x1b0] sm:$0xff] %v2240
    %2497 = vst [vmem:[%s15 + $0x1b8] sm:$0xff] %v2241
    %2498 = vst [vmem:[%s15 + $0x1c0] sm:$0xff] %v2242
    %2499 = vst [vmem:[%s15 + $0x1c8] sm:$0xff] %v2243
    %2500 = vst [vmem:[%s15 + $0x1d0] sm:$0xff] %v2244
    %2501 = vst [vmem:[%s15 + $0x1d8] sm:$0xff] %v2245
    %2502 = vst [vmem:[%s15 + $0x1e0] sm:$0xff] %v2246
    %2503 = vst [vmem:[%s15 + $0x1e8] sm:$0xff] %v2247
    %2504 = vst [vmem:[%s15 + $0x1f0] sm:$0xff] %v2248
    %2505 = vst [vmem:[%s15 + $0x1f8] sm:$0xff] %v2249
    %2506 = vst [vmem:[%s15 + $0x200] sm:$0xff] %v2250
    %2507 = vst [vmem:[%s15 + $0x208] sm:$0xff] %v2251
    %2508 = vst [vmem:[%s15 + $0x210] sm:$0xff] %v2252
    %2509 = vst [vmem:[%s15 + $0x218] sm:$0xff] %v2253
    %2510 = vst [vmem:[%s15 + $0x220] sm:$0xff] %v2254
    %2511 = vst [vmem:[%s15 + $0x228] sm:$0xff] %v2255
    %2512 = vst [vmem:[%s15 + $0x230] sm:$0xff] %v2256
    %2513 = vst [vmem:[%s15 + $0x238] sm:$0xff] %v2257
    %2514 = vst [vmem:[%s15 + $0x240] sm:$0xff] %v2258
    %2515 = vst [vmem:[%s15 + $0x248] sm:$0xff] %v2259
    %2516 = vst [vmem:[%s15 + $0x250] sm:$0xff] %v2260
    %2517 = vst [vmem:[%s15 + $0x258] sm:$0xff] %v2261
    %2518 = vst [vmem:[%s15 + $0x260] sm:$0xff] %v2262
    %2519 = vst [vmem:[%s15 + $0x268] sm:$0xff] %v2263
    %2520 = vst [vmem:[%s15 + $0x270] sm:$0xff] %v2264
    %2521 = vst [vmem:[%s15 + $0x278] sm:$0xff] %v2265
    %2522 = vst [vmem:[%s15 + $0x280] sm:$0xff] %v2266
    %2523 = vst [vmem:[%s15 + $0x288] sm:$0xff] %v2267
    %2524 = vst [vmem:[%s15 + $0x290] sm:$0xff] %v2268
    %2525 = vst [vmem:[%s15 + $0x298] sm:$0xff] %v2269
    %2526 = vst [vmem:[%s15 + $0x2a0] sm:$0xff] %v2270
    %2527 = vst [vmem:[%s15 + $0x2a8] sm:$0xff] %v2271
    %2528 = vst [vmem:[%s15 + $0x2b0] sm:$0xff] %v2272
    %2529 = vst [vmem:[%s15 + $0x2b8] sm:$0xff] %v2273
    %2530 = vst [vmem:[%s15 + $0x2c0] sm:$0xff] %v2274
    %2531 = vst [vmem:[%s15 + $0x2c8] sm:$0xff] %v2275
    %2532 = vst [vmem:[%s15 + $0x2d0] sm:$0xff] %v2276
    %2533 = vst [vmem:[%s15 + $0x2d8] sm:$0xff] %v2277
    %2534 = vst [vmem:[%s15 + $0x2e0] sm:$0xff] %v2278
    %2535 = vst [vmem:[%s15 + $0x2e8] sm:$0xff] %v2279
    %2536 = vst [vmem:[%s15 + $0x2f0] sm:$0xff] %v2280
    %2537 = vst [vmem:[%s15 + $0x2f8] sm:$0xff] %v2281
    %2538 = vst [vmem:[%s15 + $0x300] sm:$0xff] %v2282
    %2539 = vst [vmem:[%s15 + $0x308] sm:$0xff] %v2283
    %2540 = vst [vmem:[%s15 + $0x310] sm:$0xff] %v2284
    %2541 = vst [vmem:[%s15 + $0x318] sm:$0xff] %v2285
    %2542 = vst [vmem:[%s15 + $0x320] sm:$0xff] %v2286
    %2543 = vst [vmem:[%s15 + $0x328] sm:$0xff] %v2287
    %2544 = vst [vmem:[%s15 + $0x330] sm:$0xff] %v2288
    %2545 = vst [vmem:[%s15 + $0x338] sm:$0xff] %v2289
    %2546 = vst [vmem:[%s15 + $0x340] sm:$0xff] %v2290
    %2547 = vst [vmem:[%s15 + $0x348] sm:$0xff] %v2291
    %2548 = vst [vmem:[%s15 + $0x350] sm:$0xff] %v2292
    %2549 = vst [vmem:[%s15 + $0x358] sm:$0xff] %v2293
    %2550 = vst [vmem:[%s15 + $0x360] sm:$0xff] %v2294
    %2551 = vst [vmem:[%s15 + $0x368] sm:$0xff] %v2295
    %2552 = vst [vmem:[%s15 + $0x370] sm:$0xff] %v2296
    %2553 = vst [vmem:[%s15 + $0x378] sm:$0xff] %v2297
    %2554 = vst [vmem:[%s15 + $0x380] sm:$0xff] %v2298
    %2555 = vst [vmem:[%s15 + $0x388] sm:$0xff] %v2299
    %2556 = vst [vmem:[%s15 + $0x390] sm:$0xff] %v2300
    %2557 = vst [vmem:[%s15 + $0x398] sm:$0xff] %v2301
    %2558 = vst [vmem:[%s15 + $0x3a0] sm:$0xff] %v2302
    %2559 = vst [vmem:[%s15 + $0x3a8] sm:$0xff] %v2303
    %2560 = vst [vmem:[%s15 + $0x3b0] sm:$0xff] %v2304
    %2561 = vst [vmem:[%s15 + $0x3b8] sm:$0xff] %v2305
    %2562 = vst [vmem:[%s15 + $0x3c0] sm:$0xff] %v2306
    %2563 = vst [vmem:[%s15 + $0x3c8] sm:$0xff] %v2307
    %2564 = vst [vmem:[%s15 + $0x3d0] sm:$0xff] %v2308
    %2565 = vst [vmem:[%s15 + $0x3d8] sm:$0xff] %v2309
    %2566 = vst [vmem:[%s15 + $0x3e0] sm:$0xff] %v2310
    %2567 = vst [vmem:[%s15 + $0x3e8] sm:$0xff] %v2311
    %2568 = vst [vmem:[%s15 + $0x3f0] sm:$0xff] %v2312
    %2569 = vst [vmem:[%s15 + $0x3f8] sm:$0xff] %v2313
    %v2570 = vld [vmem:[%s8] sm:$0xff]
    %v2571 = vld [vmem:[%s8 + $0x8] sm:$0xff]
    %v2572 = vld [vmem:[%s8 + $0x10] sm:$0xff]
    %v2573 = vld [vmem:[%s8 + $0x18] sm:$0xff]
    %v2574 = vld [vmem:[%s8 + $0x20] sm:$0xff]
    %v2575 = vld [vmem:[%s8 + $0x28] sm:$0xff]
    %v2576 = vld [vmem:[%s8 + $0x30] sm:$0xff]
    %v2577 = vld [vmem:[%s8 + $0x38] sm:$0xff]
    %v2578 = vld [vmem:[%s8 + $0x40] sm:$0xff]
    %v2579 = vld [vmem:[%s8 + $0x48] sm:$0xff]
    %v2580 = vld [vmem:[%s8 + $0x50] sm:$0xff]
    %v2581 = vld [vmem:[%s8 + $0x58] sm:$0xff]
    %v2582 = vld [vmem:[%s8 + $0x60] sm:$0xff]
    %v2583 = vld [vmem:[%s8 + $0x68] sm:$0xff]
    %v2584 = vld [vmem:[%s8 + $0x70] sm:$0xff]
    %v2585 = vld [vmem:[%s8 + $0x78] sm:$0xff]
    %v2586 = vld [vmem:[%s8 + $0x80] sm:$0xff]
    %v2587 = vld [vmem:[%s8 + $0x88] sm:$0xff]
    %v2588 = vld [vmem:[%s8 + $0x90] sm:$0xff]
    %v2589 = vld [vmem:[%s8 + $0x98] sm:$0xff]
    %v2590 = vld [vmem:[%s8 + $0xa0] sm:$0xff]
    %v2591 = vld [vmem:[%s8 + $0xa8] sm:$0xff]
    %v2592 = vld [vmem:[%s8 + $0xb0] sm:$0xff]
    %v2593 = vld [vmem:[%s8 + $0xb8] sm:$0xff]
    %v2594 = vld [vmem:[%s8 + $0xc0] sm:$0xff]
    %v2595 = vld [vmem:[%s8 + $0xc8] sm:$0xff]
    %v2596 = vld [vmem:[%s8 + $0xd0] sm:$0xff]
    %v2597 = vld [vmem:[%s8 + $0xd8] sm:$0xff]
    %v2598 = vld [vmem:[%s8 + $0xe0] sm:$0xff]
    %v2599 = vld [vmem:[%s8 + $0xe8] sm:$0xff]
    %v2600 = vld [vmem:[%s8 + $0xf0] sm:$0xff]
    %v2601 = vld [vmem:[%s8 + $0xf8] sm:$0xff]
    %v2602 = vmul.f32 %v45, %v2570
    %v2603 = vmul.f32 %v45, %v2571
    %v2604 = vmul.f32 %v45, %v2572
    %v2605 = vmul.f32 %v45, %v2573
    %v2606 = vmul.f32 %v45, %v2574
    %v2607 = vmul.f32 %v45, %v2575
    %v2608 = vmul.f32 %v45, %v2576
    %v2609 = vmul.f32 %v45, %v2577
    %v2610 = vmul.f32 %v45, %v2578
    %v2611 = vmul.f32 %v45, %v2579
    %v2612 = vmul.f32 %v45, %v2580
    %v2613 = vmul.f32 %v45, %v2581
    %v2614 = vmul.f32 %v45, %v2582
    %v2615 = vmul.f32 %v45, %v2583
    %v2616 = vmul.f32 %v45, %v2584
    %v2617 = vmul.f32 %v45, %v2585
    %v2618 = vmul.f32 %v45, %v2586
    %v2619 = vmul.f32 %v45, %v2587
    %v2620 = vmul.f32 %v45, %v2588
    %v2621 = vmul.f32 %v45, %v2589
    %v2622 = vmul.f32 %v45, %v2590
    %v2623 = vmul.f32 %v45, %v2591
    %v2624 = vmul.f32 %v45, %v2592
    %v2625 = vmul.f32 %v45, %v2593
    %v2626 = vmul.f32 %v45, %v2594
    %v2627 = vmul.f32 %v45, %v2595
    %v2628 = vmul.f32 %v45, %v2596
    %v2629 = vmul.f32 %v45, %v2597
    %v2630 = vmul.f32 %v45, %v2598
    %v2631 = vmul.f32 %v45, %v2599
    %v2632 = vmul.f32 %v45, %v2600
    %v2633 = vmul.f32 %v45, %v2601
    %v2634 = vld [vmem:[%s4] sm:$0xff]
    %v2635 = vld [vmem:[%s4 + $0x8] sm:$0xff]
    %v2636 = vld [vmem:[%s4 + $0x10] sm:$0xff]
    %v2637 = vld [vmem:[%s4 + $0x18] sm:$0xff]
    %v2638 = vld [vmem:[%s4 + $0x20] sm:$0xff]
    %v2639 = vld [vmem:[%s4 + $0x28] sm:$0xff]
    %v2640 = vld [vmem:[%s4 + $0x30] sm:$0xff]
    %v2641 = vld [vmem:[%s4 + $0x38] sm:$0xff]
    %v2642 = vld [vmem:[%s4 + $0x40] sm:$0xff]
    %v2643 = vld [vmem:[%s4 + $0x48] sm:$0xff]
    %v2644 = vld [vmem:[%s4 + $0x50] sm:$0xff]
    %v2645 = vld [vmem:[%s4 + $0x58] sm:$0xff]
    %v2646 = vld [vmem:[%s4 + $0x60] sm:$0xff]
    %v2647 = vld [vmem:[%s4 + $0x68] sm:$0xff]
    %v2648 = vld [vmem:[%s4 + $0x70] sm:$0xff]
    %v2649 = vld [vmem:[%s4 + $0x78] sm:$0xff]
    %v2650 = vld [vmem:[%s4 + $0x80] sm:$0xff]
    %v2651 = vld [vmem:[%s4 + $0x88] sm:$0xff]
    %v2652 = vld [vmem:[%s4 + $0x90] sm:$0xff]
    %v2653 = vld [vmem:[%s4 + $0x98] sm:$0xff]
    %v2654 = vld [vmem:[%s4 + $0xa0] sm:$0xff]
    %v2655 = vld [vmem:[%s4 + $0xa8] sm:$0xff]
    %v2656 = vld [vmem:[%s4 + $0xb0] sm:$0xff]
    %v2657 = vld [vmem:[%s4 + $0xb8] sm:$0xff]
    %v2658 = vld [vmem:[%s4 + $0xc0] sm:$0xff]
    %v2659 = vld [vmem:[%s4 + $0xc8] sm:$0xff]
    %v2660 = vld [vmem:[%s4 + $0xd0] sm:$0xff]
    %v2661 = vld [vmem:[%s4 + $0xd8] sm:$0xff]
    %v2662 = vld [vmem:[%s4 + $0xe0] sm:$0xff]
    %v2663 = vld [vmem:[%s4 + $0xe8] sm:$0xff]
    %v2664 = vld [vmem:[%s4 + $0xf0] sm:$0xff]
    %v2665 = vld [vmem:[%s4 + $0xf8] sm:$0xff]
    %v2666 = vmul.f32 %v49, %v2634
    %v2667 = vmul.f32 %v49, %v2635
    %v2668 = vmul.f32 %v49, %v2636
    %v2669 = vmul.f32 %v49, %v2637
    %v2670 = vmul.f32 %v49, %v2638
    %v2671 = vmul.f32 %v49, %v2639
    %v2672 = vmul.f32 %v49, %v2640
    %v2673 = vmul.f32 %v49, %v2641
    %v2674 = vmul.f32 %v49, %v2642
    %v2675 = vmul.f32 %v49, %v2643
    %v2676 = vmul.f32 %v49, %v2644
    %v2677 = vmul.f32 %v49, %v2645
    %v2678 = vmul.f32 %v49, %v2646
    %v2679 = vmul.f32 %v49, %v2647
    %v2680 = vmul.f32 %v49, %v2648
    %v2681 = vmul.f32 %v49, %v2649
    %v2682 = vmul.f32 %v49, %v2650
    %v2683 = vmul.f32 %v49, %v2651
    %v2684 = vmul.f32 %v49, %v2652
    %v2685 = vmul.f32 %v49, %v2653
    %v2686 = vmul.f32 %v49, %v2654
    %v2687 = vmul.f32 %v49, %v2655
    %v2688 = vmul.f32 %v49, %v2656
    %v2689 = vmul.f32 %v49, %v2657
    %v2690 = vmul.f32 %v49, %v2658
    %v2691 = vmul.f32 %v49, %v2659
    %v2692 = vmul.f32 %v49, %v2660
    %v2693 = vmul.f32 %v49, %v2661
    %v2694 = vmul.f32 %v49, %v2662
    %v2695 = vmul.f32 %v49, %v2663
    %v2696 = vmul.f32 %v49, %v2664
    %v2697 = vmul.f32 %v49, %v2665
    %v2698 = vadd.f32 %v2602, %v2666
    %v2699 = vadd.f32 %v2603, %v2667
    %v2700 = vadd.f32 %v2604, %v2668
    %v2701 = vadd.f32 %v2605, %v2669
    %v2702 = vadd.f32 %v2606, %v2670
    %v2703 = vadd.f32 %v2607, %v2671
    %v2704 = vadd.f32 %v2608, %v2672
    %v2705 = vadd.f32 %v2609, %v2673
    %v2706 = vadd.f32 %v2610, %v2674
    %v2707 = vadd.f32 %v2611, %v2675
    %v2708 = vadd.f32 %v2612, %v2676
    %v2709 = vadd.f32 %v2613, %v2677
    %v2710 = vadd.f32 %v2614, %v2678
    %v2711 = vadd.f32 %v2615, %v2679
    %v2712 = vadd.f32 %v2616, %v2680
    %v2713 = vadd.f32 %v2617, %v2681
    %v2714 = vadd.f32 %v2618, %v2682
    %v2715 = vadd.f32 %v2619, %v2683
    %v2716 = vadd.f32 %v2620, %v2684
    %v2717 = vadd.f32 %v2621, %v2685
    %v2718 = vadd.f32 %v2622, %v2686
    %v2719 = vadd.f32 %v2623, %v2687
    %v2720 = vadd.f32 %v2624, %v2688
    %v2721 = vadd.f32 %v2625, %v2689
    %v2722 = vadd.f32 %v2626, %v2690
    %v2723 = vadd.f32 %v2627, %v2691
    %v2724 = vadd.f32 %v2628, %v2692
    %v2725 = vadd.f32 %v2629, %v2693
    %v2726 = vadd.f32 %v2630, %v2694
    %v2727 = vadd.f32 %v2631, %v2695
    %v2728 = vadd.f32 %v2632, %v2696
    %v2729 = vadd.f32 %v2633, %v2697
    %2730 = vst [vmem:[%s12] sm:$0xff] %v2698
    %2731 = vst [vmem:[%s12 + $0x8] sm:$0xff] %v2699
    %2732 = vst [vmem:[%s12 + $0x10] sm:$0xff] %v2700
    %2733 = vst [vmem:[%s12 + $0x18] sm:$0xff] %v2701
    %2734 = vst [vmem:[%s12 + $0x20] sm:$0xff] %v2702
    %2735 = vst [vmem:[%s12 + $0x28] sm:$0xff] %v2703
    %2736 = vst [vmem:[%s12 + $0x30] sm:$0xff] %v2704
    %2737 = vst [vmem:[%s12 + $0x38] sm:$0xff] %v2705
    %2738 = vst [vmem:[%s12 + $0x40] sm:$0xff] %v2706
    %2739 = vst [vmem:[%s12 + $0x48] sm:$0xff] %v2707
    %2740 = vst [vmem:[%s12 + $0x50] sm:$0xff] %v2708
    %2741 = vst [vmem:[%s12 + $0x58] sm:$0xff] %v2709
    %2742 = vst [vmem:[%s12 + $0x60] sm:$0xff] %v2710
    %2743 = vst [vmem:[%s12 + $0x68] sm:$0xff] %v2711
    %2744 = vst [vmem:[%s12 + $0x70] sm:$0xff] %v2712
    %2745 = vst [vmem:[%s12 + $0x78] sm:$0xff] %v2713
    %2746 = vst [vmem:[%s12 + $0x80] sm:$0xff] %v2714
    %2747 = vst [vmem:[%s12 + $0x88] sm:$0xff] %v2715
    %2748 = vst [vmem:[%s12 + $0x90] sm:$0xff] %v2716
    %2749 = vst [vmem:[%s12 + $0x98] sm:$0xff] %v2717
    %2750 = vst [vmem:[%s12 + $0xa0] sm:$0xff] %v2718
    %2751 = vst [vmem:[%s12 + $0xa8] sm:$0xff] %v2719
    %2752 = vst [vmem:[%s12 + $0xb0] sm:$0xff] %v2720
    %2753 = vst [vmem:[%s12 + $0xb8] sm:$0xff] %v2721
    %2754 = vst [vmem:[%s12 + $0xc0] sm:$0xff] %v2722
    %2755 = vst [vmem:[%s12 + $0xc8] sm:$0xff] %v2723
    %2756 = vst [vmem:[%s12 + $0xd0] sm:$0xff] %v2724
    %2757 = vst [vmem:[%s12 + $0xd8] sm:$0xff] %v2725
    %2758 = vst [vmem:[%s12 + $0xe0] sm:$0xff] %v2726
    %2759 = vst [vmem:[%s12 + $0xe8] sm:$0xff] %v2727
    %2760 = vst [vmem:[%s12 + $0xf0] sm:$0xff] %v2728
    %2761 = vst [vmem:[%s12 + $0xf8] sm:$0xff] %v2729
    %v2762 = vpack.c.bf16 %v2699, %v2698
    %v2763 = vpack.c.bf16 %v2701, %v2700
    %v2764 = vpack.c.bf16 %v2703, %v2702
    %v2765 = vpack.c.bf16 %v2705, %v2704
    %v2766 = vpack.c.bf16 %v2707, %v2706
    %v2767 = vpack.c.bf16 %v2709, %v2708
    %v2768 = vpack.c.bf16 %v2711, %v2710
    %v2769 = vpack.c.bf16 %v2713, %v2712
    %v2770 = vpack.c.bf16 %v2715, %v2714
    %v2771 = vpack.c.bf16 %v2717, %v2716
    %v2772 = vpack.c.bf16 %v2719, %v2718
    %v2773 = vpack.c.bf16 %v2721, %v2720
    %v2774 = vpack.c.bf16 %v2723, %v2722
    %v2775 = vpack.c.bf16 %v2725, %v2724
    %v2776 = vpack.c.bf16 %v2727, %v2726
    %v2777 = vpack.c.bf16 %v2729, %v2728
    %v2794 = vunpack.c.l.b16 %v2762
    %v2795 = vunpack.c.h.b16 %v2762
    %v2796 = vunpack.c.l.b16 %v2763
    %v2797 = vunpack.c.h.b16 %v2763
    %v2798 = vunpack.c.l.b16 %v2764
    %v2799 = vunpack.c.h.b16 %v2764
    %v2800 = vunpack.c.l.b16 %v2765
    %v2801 = vunpack.c.h.b16 %v2765
    %v2802 = vunpack.c.l.b16 %v2766
    %v2803 = vunpack.c.h.b16 %v2766
    %v2804 = vunpack.c.l.b16 %v2767
    %v2805 = vunpack.c.h.b16 %v2767
    %v2806 = vunpack.c.l.b16 %v2768
    %v2807 = vunpack.c.h.b16 %v2768
    %v2808 = vunpack.c.l.b16 %v2769
    %v2809 = vunpack.c.h.b16 %v2769
    %v2810 = vunpack.c.l.b16 %v2770
    %v2811 = vunpack.c.h.b16 %v2770
    %v2812 = vunpack.c.l.b16 %v2771
    %v2813 = vunpack.c.h.b16 %v2771
    %v2814 = vunpack.c.l.b16 %v2772
    %v2815 = vunpack.c.h.b16 %v2772
    %v2816 = vunpack.c.l.b16 %v2773
    %v2817 = vunpack.c.h.b16 %v2773
    %v2818 = vunpack.c.l.b16 %v2774
    %v2819 = vunpack.c.h.b16 %v2774
    %v2820 = vunpack.c.l.b16 %v2775
    %v2821 = vunpack.c.h.b16 %v2775
    %v2822 = vunpack.c.l.b16 %v2776
    %v2823 = vunpack.c.h.b16 %v2776
    %v2824 = vunpack.c.l.b16 %v2777
    %v2825 = vunpack.c.h.b16 %v2777
    %v2826 = vpack.c.b16 %v2794, %v2794
    %v2827 = vpack.c.b16 %v2795, %v2795
    %v2828 = vpack.c.b16 %v2796, %v2796
    %v2829 = vpack.c.b16 %v2797, %v2797
    %v2830 = vpack.c.b16 %v2798, %v2798
    %v2831 = vpack.c.b16 %v2799, %v2799
    %v2832 = vpack.c.b16 %v2800, %v2800
    %v2833 = vpack.c.b16 %v2801, %v2801
    %v2834 = vpack.c.b16 %v2802, %v2802
    %v2835 = vpack.c.b16 %v2803, %v2803
    %v2836 = vpack.c.b16 %v2804, %v2804
    %v2837 = vpack.c.b16 %v2805, %v2805
    %v2838 = vpack.c.b16 %v2806, %v2806
    %v2839 = vpack.c.b16 %v2807, %v2807
    %v2840 = vpack.c.b16 %v2808, %v2808
    %v2841 = vpack.c.b16 %v2809, %v2809
    %v2842 = vpack.c.b16 %v2810, %v2810
    %v2843 = vpack.c.b16 %v2811, %v2811
    %v2844 = vpack.c.b16 %v2812, %v2812
    %v2845 = vpack.c.b16 %v2813, %v2813
    %v2846 = vpack.c.b16 %v2814, %v2814
    %v2847 = vpack.c.b16 %v2815, %v2815
    %v2848 = vpack.c.b16 %v2816, %v2816
    %v2849 = vpack.c.b16 %v2817, %v2817
    %v2850 = vpack.c.b16 %v2818, %v2818
    %v2851 = vpack.c.b16 %v2819, %v2819
    %v2852 = vpack.c.b16 %v2820, %v2820
    %v2853 = vpack.c.b16 %v2821, %v2821
    %v2854 = vpack.c.b16 %v2822, %v2822
    %v2855 = vpack.c.b16 %v2823, %v2823
    %v2856 = vpack.c.b16 %v2824, %v2824
    %v2857 = vpack.c.b16 %v2825, %v2825
    %2890 = vst [vmem:[%s16] sm:$0xf] %v2826
    %2891 = vst [vmem:[%s16 + $0x4] sm:$0xf] %v2827
    %2892 = vst [vmem:[%s16 + $0x8] sm:$0xf] %v2828
    %2893 = vst [vmem:[%s16 + $0xc] sm:$0xf] %v2829
    %2894 = vst [vmem:[%s16 + $0x10] sm:$0xf] %v2830
    %2895 = vst [vmem:[%s16 + $0x14] sm:$0xf] %v2831
    %2896 = vst [vmem:[%s16 + $0x18] sm:$0xf] %v2832
    %2897 = vst [vmem:[%s16 + $0x1c] sm:$0xf] %v2833
    %2898 = vst [vmem:[%s16 + $0x20] sm:$0xf] %v2834
    %2899 = vst [vmem:[%s16 + $0x24] sm:$0xf] %v2835
    %2900 = vst [vmem:[%s16 + $0x28] sm:$0xf] %v2836
    %2901 = vst [vmem:[%s16 + $0x2c] sm:$0xf] %v2837
    %2902 = vst [vmem:[%s16 + $0x30] sm:$0xf] %v2838
    %2903 = vst [vmem:[%s16 + $0x34] sm:$0xf] %v2839
    %2904 = vst [vmem:[%s16 + $0x38] sm:$0xf] %v2840
    %2905 = vst [vmem:[%s16 + $0x3c] sm:$0xf] %v2841
    %2906 = vst [vmem:[%s16 + $0x40] sm:$0xf] %v2842
    %2907 = vst [vmem:[%s16 + $0x44] sm:$0xf] %v2843
    %2908 = vst [vmem:[%s16 + $0x48] sm:$0xf] %v2844
    %2909 = vst [vmem:[%s16 + $0x4c] sm:$0xf] %v2845
    %2910 = vst [vmem:[%s16 + $0x50] sm:$0xf] %v2846
    %2911 = vst [vmem:[%s16 + $0x54] sm:$0xf] %v2847
    %2912 = vst [vmem:[%s16 + $0x58] sm:$0xf] %v2848
    %2913 = vst [vmem:[%s16 + $0x5c] sm:$0xf] %v2849
    %2914 = vst [vmem:[%s16 + $0x60] sm:$0xf] %v2850
    %2915 = vst [vmem:[%s16 + $0x64] sm:$0xf] %v2851
    %2916 = vst [vmem:[%s16 + $0x68] sm:$0xf] %v2852
    %2917 = vst [vmem:[%s16 + $0x6c] sm:$0xf] %v2853
    %2918 = vst [vmem:[%s16 + $0x70] sm:$0xf] %v2854
    %2919 = vst [vmem:[%s16 + $0x74] sm:$0xf] %v2855
    %2920 = vst [vmem:[%s16 + $0x78] sm:$0xf] %v2856
    %2921 = vst [vmem:[%s16 + $0x7c] sm:$0xf] %v2857
    // Predicated region
    $region38: #{moco_moe_forward.12} parent=1 // pred_check
      _
    $region39: #{moco_moe_forward.12} parent=1 // pred_check_branch
      %2923 = sbr.rel (0) target = $region41
    $region40: #{moco_moe_forward.12} parent=1 // pred_region
      _
    $region41: #{moco_moe_forward.12} parent=1 // pred_fallthru
      _
    // Predicated region
    $region42: #{moco_moe_forward.12} parent=1 // pred_check
      _
    $region43: #{moco_moe_forward.12} parent=1 // pred_check_branch
      %2925 = sbr.rel (0) target = $region45
    $region44: #{moco_moe_forward.12} parent=1 // pred_region
      _
    $region45: #{moco_moe_forward.12} parent=1 // pred_fallthru
      _
    // Predicated region
    $region46: #{moco_moe_forward.12} parent=1 // pred_check
      _
    $region47: #{moco_moe_forward.12} parent=1 // pred_check_branch
      %2927 = sbr.rel (0) target = $region49
    $region48: #{moco_moe_forward.12} parent=1 // pred_region
      _
    $region49: #{moco_moe_forward.12} parent=1 // pred_fallthru
      _
    // Predicated region
    $region50: #{moco_moe_forward.12} parent=1 // pred_check
      _
    $region51: #{moco_moe_forward.12} parent=1 // pred_check_branch
      %2929 = sbr.rel (0) target = $region53
    $region52: #{moco_moe_forward.12} parent=1 // pred_region
      _
    $region53: #{moco_moe_forward.12} parent=1 // pred_fallthru
      _
    // Predicated region
    $region54: #{moco_moe_forward.12} parent=1 // pred_check
      _
    $region55: #{moco_moe_forward.12} parent=1 // pred_check_branch
      %2931 = sbr.rel (0) target = $region57
    $region56: #{moco_moe_forward.12} parent=1 // pred_region
      %s2933 = ssub.s32 32, 32
      %2934 = vsyncadd [#allocation4], %s2933
      %s2936 = sshll.u32 [#allocation3], 4
      %s2937 = int_to_ptr.vmem [resolvable:$true] %s2936
      %2939 = dma.vmem_to_hbm [thread:$0]  %s2937, 32, %s13, [#allocation4]
    $region57: #{moco_moe_forward.12} parent=1 // pred_fallthru
      _
    // Predicated region
    $region58: #{moco_moe_forward.12} parent=1 // pred_check
      _
    $region59: #{moco_moe_forward.12} parent=1 // pred_check_branch
      %2941 = sbr.rel (0) target = $region61
    $region60: #{moco_moe_forward.12} parent=1 // pred_region
      %s2943 = ssub.s32 32, 32
      %2944 = vsyncadd [#allocation6], %s2943
      %s2946 = sshll.u32 [#allocation5], 4
      %s2947 = int_to_ptr.vmem [resolvable:$true] %s2946
      %2949 = dma.vmem_to_hbm [thread:$0]  %s2947, 32, %s14, [#allocation6]
    $region61: #{moco_moe_forward.12} parent=1 // pred_fallthru
      _
    // Predicated region
    $region62: #{moco_moe_forward.12} parent=1 // pred_check
      _
    $region63: #{moco_moe_forward.12} parent=1 // pred_check_branch
      %2951 = sbr.rel (0) target = $region65
    $region64: #{moco_moe_forward.12} parent=1 // pred_region
      _
    $region65: #{moco_moe_forward.12} parent=1 // pred_fallthru
      _
    // Predicated region
    $region66: #{moco_moe_forward.12} parent=1 // pred_check
      _
    $region67: #{moco_moe_forward.12} parent=1 // pred_check_branch
      %2953 = sbr.rel (0) target = $region69
    $region68: #{moco_moe_forward.12} parent=1 // pred_region
      _
    $region69: #{moco_moe_forward.12} parent=1 // pred_fallthru
      _
    // Predicated region
    $region70: #{moco_moe_forward.12} parent=1 // pred_check
      _
    $region71: #{moco_moe_forward.12} parent=1 // pred_check_branch
      %2955 = sbr.rel (0) target = $region73
    $region72: #{moco_moe_forward.12} parent=1 // pred_region
      _
    $region73: #{moco_moe_forward.12} parent=1 // pred_fallthru
      _
    // Predicated region
    $region74: #{moco_moe_forward.12} parent=1 // pred_check
      _
    $region75: #{moco_moe_forward.12} parent=1 // pred_check_branch
      %2957 = sbr.rel (0) target = $region77
    $region76: #{moco_moe_forward.12} parent=1 // pred_region
      _
    $region77: #{moco_moe_forward.12} parent=1 // pred_fallthru
      _
    // Predicated region
    $region78: #{moco_moe_forward.12} parent=1 // pred_check
      _
    $region79: #{moco_moe_forward.12} parent=1 // pred_check_branch
      %2959 = sbr.rel (0) target = $region81
    $region80: #{moco_moe_forward.12} parent=1 // pred_region
      _
    $region81: #{moco_moe_forward.12} parent=1 // pred_fallthru
      _
    // Predicated region
    $region82: #{moco_moe_forward.12} parent=1 // pred_check
      _
    $region83: #{moco_moe_forward.12} parent=1 // pred_check_branch
      %2961 = sbr.rel (0) target = $region85
    $region84: #{moco_moe_forward.12} parent=1 // pred_region
      _
    $region85: #{moco_moe_forward.12} parent=1 // pred_fallthru
      _
    // Predicated region
    $region86: #{moco_moe_forward.12} parent=1 // pred_check
      _
    $region87: #{moco_moe_forward.12} parent=1 // pred_check_branch
      %2963 = sbr.rel (0) target = $region89
    $region88: #{moco_moe_forward.12} parent=1 // pred_region
      %2964 = dma.done [#allocation4], 32
    $region89: #{moco_moe_forward.12} parent=1 // pred_fallthru
      _
    // Predicated region
    $region90: #{moco_moe_forward.12} parent=1 // pred_check
      _
    $region91: #{moco_moe_forward.12} parent=1 // pred_check_branch
      %2966 = sbr.rel (0) target = $region93
    $region92: #{moco_moe_forward.12} parent=1 // pred_region
      %2967 = dma.done [#allocation6], 32
    $region93: #{moco_moe_forward.12} parent=1 // pred_fallthru
      _
    // Predicated region
    $region94: #{moco_moe_forward.12} parent=1 // pred_check
      _
    $region95: #{moco_moe_forward.12} parent=1 // pred_check_branch
      %2969 = sbr.rel (0) target = $region97
    $region96: #{moco_moe_forward.12} parent=1 // pred_region
      _
    $region97: #{moco_moe_forward.12} parent=1 // pred_fallthru
      _
    // Predicated region
    $region98: #{moco_moe_forward.12} parent=1 // pred_check
      _
    $region99: #{moco_moe_forward.12} parent=1 // pred_check_branch
      %2971 = sbr.rel (0) target = $region101
    $region100: #{moco_moe_forward.12} parent=1 // pred_region
      _
    $region101: #{moco_moe_forward.12} parent=1 // pred_fallthru
      _
    %2972 = vsyncpa [#allocation4], 1
    %2973 = vsyncpa [#allocation6], 1

</llo_original>
